<compile_context>
chip_gen: v5e
topology: v5e:2x2
jax: 0.10.0
libtpu: 0.0.40
codegen_flags: <defaults>
</compile_context>

<pallas_src>
import numpy as np

import jax
import jax.numpy as jnp
from jax.experimental import pallas as pl
from jax.experimental.pallas import tpu as pltpu

# ----- module config (small shapes consistent with the PyTorch module) -----
IN_FEATURES = 33                 # f
LATENT_DIM = 16
CHANNELS = [2, 4, 8, 16, 32]
FSTRIDE = (2, 2, 2, 1)
FBIN = (IN_FEATURES >> FSTRIDE.count(2)) + 1   # (33 >> 3) + 1 = 5

NEG_SLOPE = 0.01                 # nn.LeakyReLU default
BN_EPS = 1e-5
_HI = jax.lax.Precision.HIGHEST  # reference only

# Per-layer activation AFTER fc+pre fusion:
#   enc convs x4 (leaky) | fused fc∘pre (none) | dec convT x3 + post convT
#   (leaky) | post conv (tanh)
ACTS = ("leaky",) * 4 + ("none",) + ("leaky",) * 4 + ("tanh",)
NUM_LAYERS = len(ACTS)                          # 10
PADW = 256                                      # uniform lane-dense width (also
                                                # covers the 160-wide layers in
                                                # one 256-lane MXU tile)
BIAS_ROWS = -(-NUM_LAYERS // 8) * 8             # 16 (sublane-aligned)


# ---------------------------------------------------------------------------
# Pallas kernel: the whole AE forward, activation resident in VMEM/vregs.
#   x_ref  : (row_block, PADW) f32   current slice of (b t, c f) activations
#   w_ref  : (NUM_LAYERS, PADW, PADW) bf16   packed weight slab (resident)
#   b_ref  : (BIAS_ROWS, PADW) f32          packed bias slab   (resident)
#   o_ref  : (row_block, PADW) f32
# ---------------------------------------------------------------------------
def _ae_fused_kernel(x_ref, w_ref, b_ref, o_ref):
    h = x_ref[...]                                   # (rb, PADW) f32
    for i, act in enumerate(ACTS):                   # static unroll: 10 layers
        w = w_ref[i]                                 # (PADW, PADW) bf16, static idx
        b = b_ref[i:i + 1, :]                        # (1, PADW) f32, static slice
        h = jnp.dot(h.astype(jnp.bfloat16), w,
                    preferred_element_type=jnp.float32) + b
        if act == "leaky":
            h = jnp.where(h >= 0.0, h, NEG_SLOPE * h)
        elif act == "tanh":
            h = jnp.tanh(h)
    o_ref[...] = h                                   # lane-dense (rb, 256) store


# ---------------------------------------------------------------------------
# ONE-TIME host-side (numpy) construction of the fused per-layer operators.
# Activation layout everywhere: rows = (b t), columns = (c f) c-major — this
# matches the PyTorch rearranges 'b c t f -> b t (c f)' exactly.
# ---------------------------------------------------------------------------
def _selector(f_in, f_out, stride, transpose):
    """S[k, fi, fo] = 1 where input bin fi feeds output bin fo via tap k (pad=1, K=3)."""
    S = np.zeros((3, f_in, f_out), np.float32)
    for k in range(3):
        if not transpose:                    # Conv2d:           fi = fo*stride - 1 + k
            for fo in range(f_out):
                fi = fo * stride - 1 + k
                if 0 <= fi < f_in:
                    S[k, fi, fo] = 1.0
        else:                                # ConvTranspose2d:  fo = fi*stride - 1 + k
            for fi in range(f_in):
                fo = fi * stride - 1 + k
                if 0 <= fo < f_out:
                    S[k, fi, fo] = 1.0
    return S


def _conv_as_matrix(w, f_in, stride):
    """Conv2d kernel (1,3), padding (0,1). w: (Cout, Cin, 1, 3) PyTorch layout."""
    w = np.asarray(w, np.float32)
    cout, cin, _, _ = w.shape
    f_out = (f_in - 1) // stride + 1
    S = _selector(f_in, f_out, stride, transpose=False)
    big = np.einsum("ock,kif->ciof", w[:, :, 0, :], S)
    return big.reshape(cin * f_in, cout * f_out), f_out


def _convT_as_matrix(w, f_in, stride):
    """ConvTranspose2d kernel (1,3), padding (0,1). w: (Cin, Cout, 1, 3)."""
    w = np.asarray(w, np.float32)
    cin, cout, _, _ = w.shape
    f_out = (f_in - 1) * stride + 1          # (f_in-1)*s - 2*pad + K
    S = _selector(f_in, f_out, stride, transpose=True)
    big = np.einsum("cok,kif->ciof", w[:, :, 0, :], S)
    return big.reshape(cin * f_in, cout * f_out), f_out


def _fold_bn(Wbig, conv_b, gamma, beta, mean, var, f_out):
    """Fold conv bias + eval-mode BatchNorm into (column-scaled W, column bias)."""
    conv_b, gamma, beta, mean, var = (np.asarray(a, np.float32)
                                      for a in (conv_b, gamma, beta, mean, var))
    scale = gamma / np.sqrt(var + BN_EPS)
    bias = (conv_b - mean) * scale + beta
    return Wbig * np.repeat(scale, f_out)[None, :], np.repeat(bias, f_out)


def build_layer_matrices(params):
    """List of 10 (W, b) f32 numpy pairs (unpadded) in execution order."""
    layers = []
    f = IN_FEATURES
    for lyr, s in zip(params["enc"], FSTRIDE):
        W, f_out = _conv_as_matrix(lyr["w"], f, s)
        W, b = _fold_bn(W, lyr["b"], lyr["gamma"], lyr["beta"],
                        lyr["mean"], lyr["var"], f_out)
        layers.append((W, b))
        f = f_out

    # fc ∘ pre_process fused into one matrix (valid: latent z is not returned).
    W_fc = np.asarray(params["fc"]["w"], np.float32)       # (latent, C*F)
    b_fc = np.asarray(params["fc"]["b"], np.float32)
    W_pre = np.asarray(params["pre"]["w"], np.float32)     # (C*F, latent)
    b_pre = np.asarray(params["pre"]["b"], np.float32)
    layers.append((W_fc.T @ W_pre.T, b_fc @ W_pre.T + b_pre))

    f = FBIN
    for lyr, s in zip(params["dec"], FSTRIDE[::-1][: len(params["dec"])]):
        W, f_out = _convT_as_matrix(lyr["w"], f, s)
        W, b = _fold_bn(W, lyr["b"], lyr["gamma"], lyr["beta"],
                        lyr["mean"], lyr["var"], f_out)
        layers.append((W, b))
        f = f_out

    post = params["post"]
    W, f_out = _convT_as_matrix(post["ct_w"], f, FSTRIDE[0])
    W, b = _fold_bn(W, post["ct_b"], post["gamma"], post["beta"],
                    post["mean"], post["var"], f_out)
    layers.append((W, b))
    f = f_out
    W, f_out = _conv_as_matrix(post["conv_w"], f, 1)                 # no BN
    layers.append((W, np.repeat(np.asarray(post["conv_b"], np.float32), f_out)))
    return layers


def prepare_fused_weights(params):
    """One-time prep: pack all layers into a bf16 weight slab + f32 bias slab."""
    layers = build_layer_matrices(params)
    assert len(layers) == NUM_LAYERS
    w_slab = np.zeros((NUM_LAYERS, PADW, PADW), np.float32)
    b_slab = np.zeros((BIAS_ROWS, PADW), np.float32)
    for i, (W, b) in enumerate(layers):
        K, N = W.shape
        assert K <= PADW and N <= PADW, (K, N)
        w_slab[i, :K, :N] = W
        b_slab[i, :N] = b
    return (jnp.asarray(w_slab, jnp.bfloat16),       # 10*256*256*2B ≈ 1.3 MB
            jnp.asarray(b_slab, jnp.float32))        # 16 KB


# ---------------------------------------------------------------------------
# Full AE forward (single pallas_call; weights pre-packed outside jit)
# ---------------------------------------------------------------------------
def ae_forward(w_slab, b_slab, x, *, row_block=64):
    B, C, T, F = x.shape
    rows = B * T
    assert C * F <= PADW

    # Tiny layout ops on the activation only; columns are (c f) c-major.
    x2d = jnp.transpose(x, (0, 2, 1, 3)).reshape(rows, C * F)
    rows_p = pl.cdiv(rows, row_block) * row_block
    x2d = jnp.pad(x2d, ((0, rows_p - rows), (0, PADW - C * F)))

    grid = (rows_p // row_block,)
    out2d = pl.pallas_call(
        _ae_fused_kernel,
        out_shape=jax.ShapeDtypeStruct((rows_p, PADW), jnp.float32),
        grid_spec=pltpu.PrefetchScalarGridSpec(
            num_scalar_prefetch=0,
            grid=grid,
            in_specs=[
                pl.BlockSpec((row_block, PADW), lambda r: (r, 0)),
                # weight / bias slabs: whole-array blocks, constant index_map
                # -> fetched once, resident across all grid steps.
                pl.BlockSpec((NUM_LAYERS, PADW, PADW), lambda r: (0, 0, 0)),
                pl.BlockSpec((BIAS_ROWS, PADW), lambda r: (0, 0)),
            ],
            out_specs=pl.BlockSpec((row_block, PADW), lambda r: (r, 0)),
        ),
        compiler_params=pltpu.CompilerParams(
            dimension_semantics=("parallel",)),       # both TCs on v7x
    )(x2d, w_slab, b_slab)

    recon = jnp.transpose(out2d[:rows, : C * F].reshape(B, T, C, F), (0, 2, 1, 3))
    return recon, x


# ---------------------------------------------------------------------------
# Pure-JAX reference (mirrors the PyTorch module op-by-op) for correctness.
# ---------------------------------------------------------------------------
def _ref_conv(x, w, b, stride):
    B, cin, T, fin = x.shape
    fout = (fin - 1) // stride + 1
    xp = jnp.pad(x, ((0, 0), (0, 0), (0, 0), (1, 1)))
    out = jnp.broadcast_to(b[None, :, None, None], (B, w.shape[0], T, fout))
    for k in range(3):
        xs = xp[:, :, :, k: k + (fout - 1) * stride + 1: stride]
        out = out + jnp.einsum("bctf,oc->botf", xs, w[:, :, 0, k], precision=_HI)
    return out


def _ref_convT(x, w, b, stride):
    B, cin, T, fin = x.shape
    cout = w.shape[1]
    fout = (fin - 1) * stride + 1
    full = jnp.zeros((B, cout, T, (fin - 1) * stride + 3), x.dtype)
    for k in range(3):
        contrib = jnp.einsum("bctf,co->botf", x, w[:, :, 0, k], precision=_HI)
        full = full.at[:, :, :, k: k + (fin - 1) * stride + 1: stride].add(contrib)
    return full[:, :, :, 1: 1 + fout] + b[None, :, None, None]


def _ref_bn_lrelu(x, gamma, beta, mean, var):
    s = (gamma * jax.lax.rsqrt(var + BN_EPS))[None, :, None, None]
    y = (x - mean[None, :, None, None]) * s + beta[None, :, None, None]
    return jnp.where(y >= 0.0, y, NEG_SLOPE * y)


def ae_reference(params, x):
    h = x
    for lyr, s in zip(params["enc"], FSTRIDE):
        h = _ref_conv(h, lyr["w"], lyr["b"], s)
        h = _ref_bn_lrelu(h, lyr["gamma"], lyr["beta"], lyr["mean"], lyr["var"])
    B, C, T, F = h.shape
    h = jnp.transpose(h, (0, 2, 1, 3)).reshape(B, T, C * F)
    z = jnp.dot(h, params["fc"]["w"].T, precision=_HI) + params["fc"]["b"]
    h = jnp.dot(z, params["pre"]["w"].T, precision=_HI) + params["pre"]["b"]
    h = jnp.transpose(h.reshape(B, T, CHANNELS[-1], FBIN), (0, 2, 1, 3))
    for lyr, s in zip(params["dec"], FSTRIDE[::-1][: len(params["dec"])]):
        h = _ref_convT(h, lyr["w"], lyr["b"], s)
        h = _ref_bn_lrelu(h, lyr["gamma"], lyr["beta"], lyr["mean"], lyr["var"])
    post = params["post"]
    h = _ref_convT(h, post["ct_w"], post["ct_b"], FSTRIDE[0])
    h = _ref_bn_lrelu(h, post["gamma"], post["beta"], post["mean"], post["var"])
    h = _ref_conv(h, post["conv_w"], post["conv_b"], 1)
    return jnp.tanh(h)


# ---------------------------------------------------------------------------
# Deterministic parameter init (synthetic; matches the module's shapes)
# ---------------------------------------------------------------------------
def init_params(key):
    state = {"key": key}

    def normal(shape, scl=0.1):
        state["key"], sub = jax.random.split(state["key"])
        return scl * jax.random.normal(sub, shape, jnp.float32)

    params = {"enc": [], "dec": []}
    for cin, cout in zip(CHANNELS[:-1], CHANNELS[1:]):
        params["enc"].append(dict(
            w=normal((cout, cin, 1, 3)), b=normal((cout,)),
            gamma=1.0 + normal((cout,)), beta=normal((cout,)),
            mean=jnp.zeros((cout,), jnp.float32),
            var=jnp.ones((cout,), jnp.float32)))
    cf = CHANNELS[-1] * FBIN
    params["fc"] = dict(w=normal((LATENT_DIM, cf)), b=normal((LATENT_DIM,)))
    params["pre"] = dict(w=normal((cf, LATENT_DIM)), b=normal((cf,)))
    rev = CHANNELS[::-1]                                 # [32, 16, 8, 4, 2]
    for cin, cout in zip(rev[:-1], rev[1:-1]):
        params["dec"].append(dict(
            w=normal((cin, cout, 1, 3)), b=normal((cout,)),
            gamma=1.0 + normal((cout,)), beta=normal((cout,)),
            mean=jnp.zeros((cout,), jnp.float32),
            var=jnp.ones((cout,), jnp.float32)))
    c_pen, c_out = rev[-2], rev[-1]                      # 4, 2
    params["post"] = dict(
        ct_w=normal((c_pen, c_out, 1, 3)), ct_b=normal((c_out,)),
        gamma=1.0 + normal((c_out,)), beta=normal((c_out,)),
        mean=jnp.zeros((c_out,), jnp.float32),
        var=jnp.ones((c_out,), jnp.float32),
        conv_w=normal((c_out, c_out, 1, 3)), conv_b=normal((c_out,)))
    return params


if __name__ == "__main__":
    params = init_params(jax.random.PRNGKey(42))
    # B*T = 128 rows: fills >= one full MXU row tile per call (perf-review item).
    B, T = 2, 64
    x = jax.random.normal(jax.random.PRNGKey(0),
                          (B, CHANNELS[0], T, IN_FEATURES), jnp.float32)

    # ---- one-time weight prep, OUTSIDE the jitted per-call path ----
    w_slab, b_slab = prepare_fused_weights(params)
    w_slab, b_slab = jax.block_until_ready((w_slab, b_slab))

    fwd = jax.jit(ae_forward)
    recon, inp = fwd(w_slab, b_slab, x)
    jax.block_until_ready(recon)
    assert recon.shape == x.shape, (recon.shape, x.shape)
    assert bool(jnp.all(jnp.isfinite(recon)))

    # Correctness vs. an op-by-op plain-JAX (f32, HIGHEST precision) reference
    # of the PyTorch module.  Tolerance covers bf16 matmul inputs chained over
    # 10 layers, yet stays far below the O(0.1) errors of any layout/index bug.
    ref = jax.jit(ae_reference)(params, x)
    jax.block_until_ready(ref)
    max_err = float(jnp.max(jnp.abs(recon - ref)))
    assert max_err < 1e-2, f"mismatch vs reference: max_err={max_err}"

    print("KERNEL_OK")
</pallas_src>

<mosaic_0001>
module attributes {stable_mosaic.version = 11 : i64} {
  func.func @_ae_fused_kernel(%arg0: i32, %arg1: memref<64x256xf32, #tpu.memory_space<vmem>>, %arg2: memref<10x256x256xbf16, #tpu.memory_space<vmem>>, %arg3: memref<16x256xf32, #tpu.memory_space<vmem>>, %arg4: memref<64x256xf32, #tpu.memory_space<vmem>>) attributes {dimension_semantics = [#tpu.dimension_semantics<parallel>], iteration_bounds = array<i64: 2>, scalar_prefetch = 0 : i64, scratch_operands = 0 : i64, tpu.core_type = #tpu.core_type<tc>, window_params = [{transform_indices = @transform_0, window_bounds = array<i64: 64, 256>}, {pipeline_mode = #tpu.pipeline_mode<synchronous>, transform_indices = @transform_1, window_bounds = array<i64: 10, 256, 256>}, {pipeline_mode = #tpu.pipeline_mode<synchronous>, transform_indices = @transform_2, window_bounds = array<i64: 16, 256>}, {transform_indices = @transform_3, window_bounds = array<i64: 64, 256>}]} {
    %c0 = arith.constant 0 : index
    %c0_0 = arith.constant 0 : index
    %0 = vector.load %arg1[%c0, %c0_0] : memref<64x256xf32, #tpu.memory_space<vmem>>, vector<64x256xf32>
    %c0_1 = arith.constant 0 : index
    %c0_2 = arith.constant 0 : index
    %c0_3 = arith.constant 0 : index
    %1 = vector.load %arg2[%c0_1, %c0_2, %c0_3] : memref<10x256x256xbf16, #tpu.memory_space<vmem>>, vector<1x256x256xbf16>
    %2 = vector.shape_cast %1 : vector<1x256x256xbf16> to vector<256x256xbf16>
    %c0_4 = arith.constant 0 : index
    %c0_5 = arith.constant 0 : index
    %3 = vector.load %arg3[%c0_4, %c0_5] : memref<16x256xf32, #tpu.memory_space<vmem>>, vector<1x256xf32>
    %4 = arith.truncf %0 : vector<64x256xf32> to vector<64x256xbf16>
    %cst = arith.constant dense<0.000000e+00> : vector<64x256xf32>
    %5 = tpu.matmul %4, %2, %cst {dimension_numbers = #tpu.dot_dimension_numbers<[1], [0], [0], [1], [0, 0, 1, 1], [], []>} : vector<64x256xbf16>, vector<256x256xbf16>, vector<64x256xf32> -> vector<64x256xf32>
    %6 = vector.broadcast %3 : vector<1x256xf32> to vector<64x256xf32>
    %7 = arith.addf %5, %6 : vector<64x256xf32>
    %cst_6 = arith.constant 0.000000e+00 : f32
    %8 = vector.broadcast %cst_6 : f32 to vector<64x256xf32>
    %9 = arith.cmpf oge, %7, %8 : vector<64x256xf32>
    %cst_7 = arith.constant 0.00999999977 : f32
    %10 = vector.broadcast %cst_7 : f32 to vector<64x256xf32>
    %11 = arith.mulf %10, %7 : vector<64x256xf32>
    %12 = arith.select %9, %7, %11 : vector<64x256xi1>, vector<64x256xf32>
    %c1 = arith.constant 1 : index
    %c0_8 = arith.constant 0 : index
    %c0_9 = arith.constant 0 : index
    %13 = vector.load %arg2[%c1, %c0_8, %c0_9] : memref<10x256x256xbf16, #tpu.memory_space<vmem>>, vector<1x256x256xbf16>
    %14 = vector.shape_cast %13 : vector<1x256x256xbf16> to vector<256x256xbf16>
    %c1_10 = arith.constant 1 : index
    %c0_11 = arith.constant 0 : index
    %15 = vector.load %arg3[%c1_10, %c0_11] : memref<16x256xf32, #tpu.memory_space<vmem>>, vector<1x256xf32>
    %16 = arith.truncf %12 : vector<64x256xf32> to vector<64x256xbf16>
    %cst_12 = arith.constant dense<0.000000e+00> : vector<64x256xf32>
    %17 = tpu.matmul %16, %14, %cst_12 {dimension_numbers = #tpu.dot_dimension_numbers<[1], [0], [0], [1], [0, 0, 1, 1], [], []>} : vector<64x256xbf16>, vector<256x256xbf16>, vector<64x256xf32> -> vector<64x256xf32>
    %18 = vector.broadcast %15 : vector<1x256xf32> to vector<64x256xf32>
    %19 = arith.addf %17, %18 : vector<64x256xf32>
    %cst_13 = arith.constant 0.000000e+00 : f32
    %20 = vector.broadcast %cst_13 : f32 to vector<64x256xf32>
    %21 = arith.cmpf oge, %19, %20 : vector<64x256xf32>
    %cst_14 = arith.constant 0.00999999977 : f32
    %22 = vector.broadcast %cst_14 : f32 to vector<64x256xf32>
    %23 = arith.mulf %22, %19 : vector<64x256xf32>
    %24 = arith.select %21, %19, %23 : vector<64x256xi1>, vector<64x256xf32>
    %c2 = arith.constant 2 : index
    %c0_15 = arith.constant 0 : index
    %c0_16 = arith.constant 0 : index
    %25 = vector.load %arg2[%c2, %c0_15, %c0_16] : memref<10x256x256xbf16, #tpu.memory_space<vmem>>, vector<1x256x256xbf16>
    %26 = vector.shape_cast %25 : vector<1x256x256xbf16> to vector<256x256xbf16>
    %c2_17 = arith.constant 2 : index
    %c0_18 = arith.constant 0 : index
    %27 = vector.load %arg3[%c2_17, %c0_18] : memref<16x256xf32, #tpu.memory_space<vmem>>, vector<1x256xf32>
    %28 = arith.truncf %24 : vector<64x256xf32> to vector<64x256xbf16>
    %cst_19 = arith.constant dense<0.000000e+00> : vector<64x256xf32>
    %29 = tpu.matmul %28, %26, %cst_19 {dimension_numbers = #tpu.dot_dimension_numbers<[1], [0], [0], [1], [0, 0, 1, 1], [], []>} : vector<64x256xbf16>, vector<256x256xbf16>, vector<64x256xf32> -> vector<64x256xf32>
    %30 = vector.broadcast %27 : vector<1x256xf32> to vector<64x256xf32>
    %31 = arith.addf %29, %30 : vector<64x256xf32>
    %cst_20 = arith.constant 0.000000e+00 : f32
    %32 = vector.broadcast %cst_20 : f32 to vector<64x256xf32>
    %33 = arith.cmpf oge, %31, %32 : vector<64x256xf32>
    %cst_21 = arith.constant 0.00999999977 : f32
    %34 = vector.broadcast %cst_21 : f32 to vector<64x256xf32>
    %35 = arith.mulf %34, %31 : vector<64x256xf32>
    %36 = arith.select %33, %31, %35 : vector<64x256xi1>, vector<64x256xf32>
    %c3 = arith.constant 3 : index
    %c0_22 = arith.constant 0 : index
    %c0_23 = arith.constant 0 : index
    %37 = vector.load %arg2[%c3, %c0_22, %c0_23] : memref<10x256x256xbf16, #tpu.memory_space<vmem>>, vector<1x256x256xbf16>
    %38 = vector.shape_cast %37 : vector<1x256x256xbf16> to vector<256x256xbf16>
    %c3_24 = arith.constant 3 : index
    %c0_25 = arith.constant 0 : index
    %39 = vector.load %arg3[%c3_24, %c0_25] : memref<16x256xf32, #tpu.memory_space<vmem>>, vector<1x256xf32>
    %40 = arith.truncf %36 : vector<64x256xf32> to vector<64x256xbf16>
    %cst_26 = arith.constant dense<0.000000e+00> : vector<64x256xf32>
    %41 = tpu.matmul %40, %38, %cst_26 {dimension_numbers = #tpu.dot_dimension_numbers<[1], [0], [0], [1], [0, 0, 1, 1], [], []>} : vector<64x256xbf16>, vector<256x256xbf16>, vector<64x256xf32> -> vector<64x256xf32>
    %42 = vector.broadcast %39 : vector<1x256xf32> to vector<64x256xf32>
    %43 = arith.addf %41, %42 : vector<64x256xf32>
    %cst_27 = arith.constant 0.000000e+00 : f32
    %44 = vector.broadcast %cst_27 : f32 to vector<64x256xf32>
    %45 = arith.cmpf oge, %43, %44 : vector<64x256xf32>
    %cst_28 = arith.constant 0.00999999977 : f32
    %46 = vector.broadcast %cst_28 : f32 to vector<64x256xf32>
    %47 = arith.mulf %46, %43 : vector<64x256xf32>
    %48 = arith.select %45, %43, %47 : vector<64x256xi1>, vector<64x256xf32>
    %c4 = arith.constant 4 : index
    %c0_29 = arith.constant 0 : index
    %c0_30 = arith.constant 0 : index
    %49 = vector.load %arg2[%c4, %c0_29, %c0_30] : memref<10x256x256xbf16, #tpu.memory_space<vmem>>, vector<1x256x256xbf16>
    %50 = vector.shape_cast %49 : vector<1x256x256xbf16> to vector<256x256xbf16>
    %c4_31 = arith.constant 4 : index
    %c0_32 = arith.constant 0 : index
    %51 = vector.load %arg3[%c4_31, %c0_32] : memref<16x256xf32, #tpu.memory_space<vmem>>, vector<1x256xf32>
    %52 = arith.truncf %48 : vector<64x256xf32> to vector<64x256xbf16>
    %cst_33 = arith.constant dense<0.000000e+00> : vector<64x256xf32>
    %53 = tpu.matmul %52, %50, %cst_33 {dimension_numbers = #tpu.dot_dimension_numbers<[1], [0], [0], [1], [0, 0, 1, 1], [], []>} : vector<64x256xbf16>, vector<256x256xbf16>, vector<64x256xf32> -> vector<64x256xf32>
    %54 = vector.broadcast %51 : vector<1x256xf32> to vector<64x256xf32>
    %55 = arith.addf %53, %54 : vector<64x256xf32>
    %c5 = arith.constant 5 : index
    %c0_34 = arith.constant 0 : index
    %c0_35 = arith.constant 0 : index
    %56 = vector.load %arg2[%c5, %c0_34, %c0_35] : memref<10x256x256xbf16, #tpu.memory_space<vmem>>, vector<1x256x256xbf16>
    %57 = vector.shape_cast %56 : vector<1x256x256xbf16> to vector<256x256xbf16>
    %c5_36 = arith.constant 5 : index
    %c0_37 = arith.constant 0 : index
    %58 = vector.load %arg3[%c5_36, %c0_37] : memref<16x256xf32, #tpu.memory_space<vmem>>, vector<1x256xf32>
    %59 = arith.truncf %55 : vector<64x256xf32> to vector<64x256xbf16>
    %cst_38 = arith.constant dense<0.000000e+00> : vector<64x256xf32>
    %60 = tpu.matmul %59, %57, %cst_38 {dimension_numbers = #tpu.dot_dimension_numbers<[1], [0], [0], [1], [0, 0, 1, 1], [], []>} : vector<64x256xbf16>, vector<256x256xbf16>, vector<64x256xf32> -> vector<64x256xf32>
    %61 = vector.broadcast %58 : vector<1x256xf32> to vector<64x256xf32>
    %62 = arith.addf %60, %61 : vector<64x256xf32>
    %cst_39 = arith.constant 0.000000e+00 : f32
    %63 = vector.broadcast %cst_39 : f32 to vector<64x256xf32>
    %64 = arith.cmpf oge, %62, %63 : vector<64x256xf32>
    %cst_40 = arith.constant 0.00999999977 : f32
    %65 = vector.broadcast %cst_40 : f32 to vector<64x256xf32>
    %66 = arith.mulf %65, %62 : vector<64x256xf32>
    %67 = arith.select %64, %62, %66 : vector<64x256xi1>, vector<64x256xf32>
    %c6 = arith.constant 6 : index
    %c0_41 = arith.constant 0 : index
    %c0_42 = arith.constant 0 : index
    %68 = vector.load %arg2[%c6, %c0_41, %c0_42] : memref<10x256x256xbf16, #tpu.memory_space<vmem>>, vector<1x256x256xbf16>
    %69 = vector.shape_cast %68 : vector<1x256x256xbf16> to vector<256x256xbf16>
    %c6_43 = arith.constant 6 : index
    %c0_44 = arith.constant 0 : index
    %70 = vector.load %arg3[%c6_43, %c0_44] : memref<16x256xf32, #tpu.memory_space<vmem>>, vector<1x256xf32>
    %71 = arith.truncf %67 : vector<64x256xf32> to vector<64x256xbf16>
    %cst_45 = arith.constant dense<0.000000e+00> : vector<64x256xf32>
    %72 = tpu.matmul %71, %69, %cst_45 {dimension_numbers = #tpu.dot_dimension_numbers<[1], [0], [0], [1], [0, 0, 1, 1], [], []>} : vector<64x256xbf16>, vector<256x256xbf16>, vector<64x256xf32> -> vector<64x256xf32>
    %73 = vector.broadcast %70 : vector<1x256xf32> to vector<64x256xf32>
    %74 = arith.addf %72, %73 : vector<64x256xf32>
    %cst_46 = arith.constant 0.000000e+00 : f32
    %75 = vector.broadcast %cst_46 : f32 to vector<64x256xf32>
    %76 = arith.cmpf oge, %74, %75 : vector<64x256xf32>
    %cst_47 = arith.constant 0.00999999977 : f32
    %77 = vector.broadcast %cst_47 : f32 to vector<64x256xf32>
    %78 = arith.mulf %77, %74 : vector<64x256xf32>
    %79 = arith.select %76, %74, %78 : vector<64x256xi1>, vector<64x256xf32>
    %c7 = arith.constant 7 : index
    %c0_48 = arith.constant 0 : index
    %c0_49 = arith.constant 0 : index
    %80 = vector.load %arg2[%c7, %c0_48, %c0_49] : memref<10x256x256xbf16, #tpu.memory_space<vmem>>, vector<1x256x256xbf16>
    %81 = vector.shape_cast %80 : vector<1x256x256xbf16> to vector<256x256xbf16>
    %c7_50 = arith.constant 7 : index
    %c0_51 = arith.constant 0 : index
    %82 = vector.load %arg3[%c7_50, %c0_51] : memref<16x256xf32, #tpu.memory_space<vmem>>, vector<1x256xf32>
    %83 = arith.truncf %79 : vector<64x256xf32> to vector<64x256xbf16>
    %cst_52 = arith.constant dense<0.000000e+00> : vector<64x256xf32>
    %84 = tpu.matmul %83, %81, %cst_52 {dimension_numbers = #tpu.dot_dimension_numbers<[1], [0], [0], [1], [0, 0, 1, 1], [], []>} : vector<64x256xbf16>, vector<256x256xbf16>, vector<64x256xf32> -> vector<64x256xf32>
    %85 = vector.broadcast %82 : vector<1x256xf32> to vector<64x256xf32>
    %86 = arith.addf %84, %85 : vector<64x256xf32>
    %cst_53 = arith.constant 0.000000e+00 : f32
    %87 = vector.broadcast %cst_53 : f32 to vector<64x256xf32>
    %88 = arith.cmpf oge, %86, %87 : vector<64x256xf32>
    %cst_54 = arith.constant 0.00999999977 : f32
    %89 = vector.broadcast %cst_54 : f32 to vector<64x256xf32>
    %90 = arith.mulf %89, %86 : vector<64x256xf32>
    %91 = arith.select %88, %86, %90 : vector<64x256xi1>, vector<64x256xf32>
    %c8 = arith.constant 8 : index
    %c0_55 = arith.constant 0 : index
    %c0_56 = arith.constant 0 : index
    %92 = vector.load %arg2[%c8, %c0_55, %c0_56] : memref<10x256x256xbf16, #tpu.memory_space<vmem>>, vector<1x256x256xbf16>
    %93 = vector.shape_cast %92 : vector<1x256x256xbf16> to vector<256x256xbf16>
    %c8_57 = arith.constant 8 : index
    %c0_58 = arith.constant 0 : index
    %94 = vector.load %arg3[%c8_57, %c0_58] : memref<16x256xf32, #tpu.memory_space<vmem>>, vector<1x256xf32>
    %95 = arith.truncf %91 : vector<64x256xf32> to vector<64x256xbf16>
    %cst_59 = arith.constant dense<0.000000e+00> : vector<64x256xf32>
    %96 = tpu.matmul %95, %93, %cst_59 {dimension_numbers = #tpu.dot_dimension_numbers<[1], [0], [0], [1], [0, 0, 1, 1], [], []>} : vector<64x256xbf16>, vector<256x256xbf16>, vector<64x256xf32> -> vector<64x256xf32>
    %97 = vector.broadcast %94 : vector<1x256xf32> to vector<64x256xf32>
    %98 = arith.addf %96, %97 : vector<64x256xf32>
    %cst_60 = arith.constant 0.000000e+00 : f32
    %99 = vector.broadcast %cst_60 : f32 to vector<64x256xf32>
    %100 = arith.cmpf oge, %98, %99 : vector<64x256xf32>
    %cst_61 = arith.constant 0.00999999977 : f32
    %101 = vector.broadcast %cst_61 : f32 to vector<64x256xf32>
    %102 = arith.mulf %101, %98 : vector<64x256xf32>
    %103 = arith.select %100, %98, %102 : vector<64x256xi1>, vector<64x256xf32>
    %c9 = arith.constant 9 : index
    %c0_62 = arith.constant 0 : index
    %c0_63 = arith.constant 0 : index
    %104 = vector.load %arg2[%c9, %c0_62, %c0_63] : memref<10x256x256xbf16, #tpu.memory_space<vmem>>, vector<1x256x256xbf16>
    %105 = vector.shape_cast %104 : vector<1x256x256xbf16> to vector<256x256xbf16>
    %c9_64 = arith.constant 9 : index
    %c0_65 = arith.constant 0 : index
    %106 = vector.load %arg3[%c9_64, %c0_65] : memref<16x256xf32, #tpu.memory_space<vmem>>, vector<1x256xf32>
    %107 = arith.truncf %103 : vector<64x256xf32> to vector<64x256xbf16>
    %cst_66 = arith.constant dense<0.000000e+00> : vector<64x256xf32>
    %108 = tpu.matmul %107, %105, %cst_66 {dimension_numbers = #tpu.dot_dimension_numbers<[1], [0], [0], [1], [0, 0, 1, 1], [], []>} : vector<64x256xbf16>, vector<256x256xbf16>, vector<64x256xf32> -> vector<64x256xf32>
    %109 = vector.broadcast %106 : vector<1x256xf32> to vector<64x256xf32>
    %110 = arith.addf %108, %109 : vector<64x256xf32>
    %111 = math.tanh %110 : vector<64x256xf32>
    %c0_67 = arith.constant 0 : index
    %c0_68 = arith.constant 0 : index
    %112 = vector.load %arg4[%c0_67, %c0_68] : memref<64x256xf32, #tpu.memory_space<vmem>>, vector<64x256xf32>
    tpu.vector_store %arg4[%c0_67, %c0_68], %111 {strides = array<i32>} : memref<64x256xf32, #tpu.memory_space<vmem>>, vector<64x256xf32>,
    return
  }
  func.func @transform_0(%arg0: i32) -> (i32, i32) {
    %c0_i32 = arith.constant 0 : i32
    %c0_i32_0 = arith.constant 0 : i32
    return %arg0, %c0_i32 : i32, i32
  }
  func.func @transform_1(%arg0: i32) -> (i32, i32, i32) {
    %c0_i32 = arith.constant 0 : i32
    %c0_i32_0 = arith.constant 0 : i32
    %c0_i32_1 = arith.constant 0 : i32
    %c0_i32_2 = arith.constant 0 : i32
    return %c0_i32, %c0_i32_0, %c0_i32_1 : i32, i32, i32
  }
  func.func @transform_2(%arg0: i32) -> (i32, i32) {
    %c0_i32 = arith.constant 0 : i32
    %c0_i32_0 = arith.constant 0 : i32
    %c0_i32_1 = arith.constant 0 : i32
    return %c0_i32, %c0_i32_0 : i32, i32
  }
  func.func @transform_3(%arg0: i32) -> (i32, i32) {
    %c0_i32 = arith.constant 0 : i32
    %c0_i32_0 = arith.constant 0 : i32
    return %arg0, %c0_i32 : i32, i32
  }
}

</mosaic_0001>

<llo_original>
// kernel: ae_forward.1
$region0: #{ae_forward.1}
  #allocation0 [shape = 'u32[]', space=smem, size = 0x4, offset = 0x4, fixed_abs, tag = 'smem constant byte address 0x4 - core index']
  #allocation1 [shape = 'u32[72,128]{1,0:T(1,128)}', space=vmem, size = 0x9000, scoped, tag = 'internal scratch']
  %s0 = inlined_call_operand.vmem [shape: f32[128,256], index: 0, kind: input, shape index: {}]
  %s1 = inlined_call_operand.hbm [shape: bf16[10,256,256], index: 1, kind: input, shape index: {}]
  %s2 = inlined_call_operand.hbm [shape: f32[16,256], index: 2, kind: input, shape index: {}]
  %s3 = inlined_call_operand.vmem [shape: f32[128,256], index: 3, kind: output, shape index: {}]
  %s4 = sld [smem:[#allocation0]]
  $region53: #{ae_forward.1} parent=0
    _
  %s6 = ssub.s32 1, %s4
  %s7 = scalar_select 0, %s6, %s4
  $region1: #{ae_forward.1} parent=0
    #allocation2 [shape = 'u8[1310720]{0}', space=vmem, size = 0x140000, scoped, tag = 'input window, operand 1, single buffered']
    #allocation3 [shape = 's32[2]{0}', space=sflag, size = 0x8, scoped, tag = 'scoped memory for ae_forward.1']
    #allocation4 [shape = 'u8[16384]{0}', space=vmem, size = 0x4000, scoped, tag = 'input window, operand 2, single buffered']
    #allocation5 [shape = 's32[1]{0}', space=sflag, size = 0x4, scoped, tag = 'scoped memory for ae_forward.1']
    %8 = vsyncpa [#allocation3], 0
    %9 = vsyncpa [#allocation5], 0
    loop: start=0, step=1, limit=4
    $region2: #{ae_forward.1} parent=1 // loop_pre_header
      _
    $region3: #{ae_forward.1} parent=1 // loop_header
      %s11 = sphi 0, %s15
      %p12 = scmp.ge.s32.totalorder %s11, 4
      %s21 = sphi 0, %s23
      %s24 = sphi 0, %s21
      %s25 = sphi 0, %s24
      %s41 = sphi 0, %s25
      %s45 = sphi 0, %s45
      %s47 = sphi 0, %s45
      %s48 = sphi 0, %s47
      %s62 = sphi 0, %s48
      %s66 = sphi 0, %s66
      %s68 = sphi 0, %s66
      %s69 = sphi 0, %s68
      %s83 = sphi 0, %s69
      %s89 = sphi 0, %s91
      %s92 = sphi 0, %s89
      %s93 = sphi 0, %s92
      %s109 = sphi 0, %s93
    $region4: #{ae_forward.1} parent=1 // loop_header_branch
      %14 = sbr.rel (%p12) target = $region8
    $region5: #{ae_forward.1} parent=1 // loop_body
      %s16 = ssub.s32 %s11, 1
      %s17 = ssub.s32 %s11, 2
      %s18 = sadd.s32 %s11, 1
      %s19 = ssub.s32 %s11, %s18
      %p20 = scmp.eq.s32.totalorder %s19, 0
      %s22 = sadd.s32 %s21, 1
      %s23 = scalar_select %p20, %s21, %s22
      %p26 = pneg %p20
      %p27 = scmp.eq.s32.totalorder %s11, 1
      %p28 = por %p26, %p27
      %p29 = scmp.ne.s32.totalorder %s21, %s24
      %p30 = scmp.eq.s32.totalorder %s11, 0
      %p31 = por %p29, %p30
      %p32 = scmp.ne.s32.totalorder %s21, %s24
      %p33 = scmp.eq.s32.totalorder %s16, 1
      %p34 = por %p32, %p33
      %p35 = scmp.ne.s32.totalorder %s24, %s25
      %p36 = scmp.eq.s32.totalorder %s16, 0
      %p37 = por %p35, %p36
      %p38 = scmp.ne.s32.totalorder %s24, %s25
      %p39 = scmp.eq.s32.totalorder %s17, 1
      %p40 = por %p38, %p39
      %p42 = scmp.ne.s32.totalorder %s25, %s41
      %p43 = scmp.eq.s32.totalorder %s17, 0
      %p44 = por %p42, %p43
      %s46 = sadd.s32 %s45, 1
      %p49 = scmp.eq.s32.totalorder %s11, 1
      %p50 = scmp.ne.s32.totalorder %s45, %s47
      %p51 = scmp.eq.s32.totalorder %s11, 0
      %p52 = por %p50, %p51
      %p53 = scmp.ne.s32.totalorder %s45, %s47
      %p54 = scmp.eq.s32.totalorder %s16, 1
      %p55 = por %p53, %p54
      %p56 = scmp.ne.s32.totalorder %s47, %s48
      %p57 = scmp.eq.s32.totalorder %s16, 0
      %p58 = por %p56, %p57
      %p59 = scmp.ne.s32.totalorder %s47, %s48
      %p60 = scmp.eq.s32.totalorder %s17, 1
      %p61 = por %p59, %p60
      %p63 = scmp.ne.s32.totalorder %s48, %s62
      %p64 = scmp.eq.s32.totalorder %s17, 0
      %p65 = por %p63, %p64
      %s67 = sadd.s32 %s66, 1
      %p70 = scmp.eq.s32.totalorder %s11, 1
      %p71 = scmp.ne.s32.totalorder %s66, %s68
      %p72 = scmp.eq.s32.totalorder %s11, 0
      %p73 = por %p71, %p72
      %p74 = scmp.ne.s32.totalorder %s66, %s68
      %p75 = scmp.eq.s32.totalorder %s16, 1
      %p76 = por %p74, %p75
      %p77 = scmp.ne.s32.totalorder %s68, %s69
      %p78 = scmp.eq.s32.totalorder %s16, 0
      %p79 = por %p77, %p78
      %p80 = scmp.ne.s32.totalorder %s68, %s69
      %p81 = scmp.eq.s32.totalorder %s17, 1
      %p82 = por %p80, %p81
      %p84 = scmp.ne.s32.totalorder %s69, %s83
      %p85 = scmp.eq.s32.totalorder %s17, 0
      %p86 = por %p84, %p85
      %s87 = ssub.s32 %s11, %s18
      %p88 = scmp.eq.s32.totalorder %s87, 0
      %s90 = sadd.s32 %s89, 1
      %s91 = scalar_select %p88, %s89, %s90
      %p94 = pneg %p88
      %p95 = scmp.eq.s32.totalorder %s11, 1
      %p96 = por %p94, %p95
      %p97 = scmp.ne.s32.totalorder %s89, %s92
      %p98 = scmp.eq.s32.totalorder %s11, 0
      %p99 = por %p97, %p98
      %p100 = scmp.ne.s32.totalorder %s89, %s92
      %p101 = scmp.eq.s32.totalorder %s16, 1
      %p102 = por %p100, %p101
      %p103 = scmp.ne.s32.totalorder %s92, %s93
      %p104 = scmp.eq.s32.totalorder %s16, 0
      %p105 = por %p103, %p104
      %p106 = scmp.ne.s32.totalorder %s92, %s93
      %p107 = scmp.eq.s32.totalorder %s17, 1
      %p108 = por %p106, %p107
      %p110 = scmp.ne.s32.totalorder %s93, %s109
      %p111 = scmp.eq.s32.totalorder %s17, 0
      %p112 = por %p110, %p111
      %p113 = scmp.le.s32.totalorder 1, %s11
      %p114 = scmp.lt.s32.totalorder %s11, 3
      %p115 = pnand %p113, %p114
      %p116 = pneg %p115
      // Predicated region
      $region9: #{ae_forward.1} parent=5 // pred_check
        _
      $region10: #{ae_forward.1} parent=5 // pred_check_branch
        %118 = sbr.rel (%p115) target = $region12
      $region11: #{ae_forward.1} parent=5 // pred_region
        %s119 = ssub.s32 %s11, 1
        // Predicated region
        $region13: #{ae_forward.1} parent=11 // pred_check
          %p120 = pneg %p58
        $region14: #{ae_forward.1} parent=11 // pred_check_branch
          %122 = sbr.rel (%p120) target = $region16
        $region15: #{ae_forward.1} parent=11 // pred_region
          %124 = vsyncadd [#allocation3], 0
          %s125 = sshll.u32 %s1, 4
          %s126 = int_to_ptr.hbm [resolvable:$true] %s125
          %s127 = sshll.u32 [#allocation2], 4
          %s128 = int_to_ptr.vmem [resolvable:$true] %s127
          %133 = dma.hbm_to_vmem [thread:$0]  %s126, 40960, %s128, [#allocation3], 128, 128, 8
        $region16: #{ae_forward.1} parent=11 // pred_fallthru
          _
        // Predicated region
        $region17: #{ae_forward.1} parent=11 // pred_check
          %p134 = pneg %p79
        $region18: #{ae_forward.1} parent=11 // pred_check_branch
          %136 = sbr.rel (%p134) target = $region20
        $region19: #{ae_forward.1} parent=11 // pred_region
          %138 = vsyncadd [#allocation5], 0
          %s139 = sshll.u32 %s2, 4
          %s140 = int_to_ptr.hbm [resolvable:$true] %s139
          %s141 = sshll.u32 [#allocation4], 4
          %s142 = int_to_ptr.vmem [resolvable:$true] %s141
          %147 = dma.hbm_to_vmem [thread:$0]  %s140, 512, %s142, [#allocation5], 256, 256, 16
        $region20: #{ae_forward.1} parent=11 // pred_fallthru
          _
      $region12: #{ae_forward.1} parent=5 // pred_fallthru
        _
      %p148 = scmp.lt.s32.totalorder %s11, 2
      // Predicated region
      $region21: #{ae_forward.1} parent=5 // pred_check
        %p149 = pneg %p148
      $region22: #{ae_forward.1} parent=5 // pred_check_branch
        %151 = sbr.rel (%p149) target = $region24
      $region23: #{ae_forward.1} parent=5 // pred_region
        // Predicated region
        $region25: #{ae_forward.1} parent=23 // pred_check
          %p152 = pneg %p31
        $region26: #{ae_forward.1} parent=23 // pred_check_branch
          %154 = sbr.rel (%p152) target = $region28
        $region27: #{ae_forward.1} parent=23 // pred_region
          %s155 = smul.u32 8, %s11
          %p156 = scmp.lt.s32.totalorder %s155, 15
          %s157 = scalar_select %p156, %s155, 15
          %s158 = smul.addr %s157, 2
          %s159 = smul.addr %s158, 8
          %s160 = scalar_lea.vmem %s0, %s159
          %s161 = smul.u32 8, %s11
        $region28: #{ae_forward.1} parent=23 // pred_fallthru
          _
      $region24: #{ae_forward.1} parent=5 // pred_fallthru
        _
      %p162 = scmp.le.s32.totalorder 1, %s11
      %p163 = scmp.lt.s32.totalorder %s11, 3
      %p164 = pnand %p162, %p163
      %p165 = pneg %p164
      // Predicated region
      $region29: #{ae_forward.1} parent=5 // pred_check
        _
      $region30: #{ae_forward.1} parent=5 // pred_check_branch
        %167 = sbr.rel (%p164) target = $region32
      $region31: #{ae_forward.1} parent=5 // pred_region
        %s168 = ssub.s32 %s11, 1
        // Predicated region
        $region33: #{ae_forward.1} parent=31 // pred_check
          %p169 = pneg %p58
        $region34: #{ae_forward.1} parent=31 // pred_check_branch
          %171 = sbr.rel (%p169) target = $region36
        $region35: #{ae_forward.1} parent=31 // pred_region
          %173 = dma.done [#allocation3], 40960
        $region36: #{ae_forward.1} parent=31 // pred_fallthru
          _
        // Predicated region
        $region37: #{ae_forward.1} parent=31 // pred_check
          %p174 = pneg %p79
        $region38: #{ae_forward.1} parent=31 // pred_check_branch
          %176 = sbr.rel (%p174) target = $region40
        $region39: #{ae_forward.1} parent=31 // pred_region
          %178 = dma.done [#allocation5], 512
        $region40: #{ae_forward.1} parent=31 // pred_fallthru
          _
        %s179 = smul.u32 8, %s16
        %p180 = scmp.lt.s32.totalorder %s179, 15
        %s181 = scalar_select %p180, %s179, 15
        %s182 = smul.addr %s181, 2
        %s183 = smul.addr %s182, 8
        %s184 = scalar_lea.vmem %s0, %s183
        %p185 = pneg %p37
        %p186 = pneg %p34
        %p187 = pneg %p58
        %p188 = pneg %p55
        %p189 = pneg %p79
        %p190 = pneg %p76
        %p191 = pneg %p105
        %p192 = pneg %p102
        %s193 = smul.u32 8, %s16
        %p194 = scmp.lt.s32.totalorder %s193, 15
        %s195 = scalar_select %p194, %s193, 15
        %s196 = smul.addr %s195, 2
        %s197 = smul.addr %s196, 8
        %s198 = scalar_lea.vmem %s3, %s197
        %s199 = smul.u32 8, %s16
        %p200 = scmp.lt.s32.totalorder %s199, 15
        %s201 = scalar_select %p200, %s199, 15
        %s202 = smul.addr %s201, 2
        %s203 = smul.addr %s202, 8
        %s204 = scalar_lea.vmem %s0, %s203
        %s205 = smul.u32 8, %s16
        %s206 = smul.u32 8, %s16
        %p207 = scmp.lt.s32.totalorder %s206, 15
        %s208 = scalar_select %p207, %s206, 15
        %s209 = smul.addr %s208, 2
        %s210 = smul.addr %s209, 8
        %s211 = scalar_lea.vmem %s3, %s210
        %s212 = smul.u32 8, %s16
        %v213 = vld [vmem:[%s204] sm:$0xff]
        %v214 = vld [vmem:[%s204 + $0x8] sm:$0xff]
        %v215 = vld [vmem:[%s204 + $0x10] sm:$0xff]
        %v216 = vld [vmem:[%s204 + $0x18] sm:$0xff]
        %v217 = vld [vmem:[%s204 + $0x20] sm:$0xff]
        %v218 = vld [vmem:[%s204 + $0x28] sm:$0xff]
        %v219 = vld [vmem:[%s204 + $0x30] sm:$0xff]
        %v220 = vld [vmem:[%s204 + $0x38] sm:$0xff]
        %v221 = vld [vmem:[%s204 + $0x40] sm:$0xff]
        %v222 = vld [vmem:[%s204 + $0x48] sm:$0xff]
        %v223 = vld [vmem:[%s204 + $0x50] sm:$0xff]
        %v224 = vld [vmem:[%s204 + $0x58] sm:$0xff]
        %v225 = vld [vmem:[%s204 + $0x60] sm:$0xff]
        %v226 = vld [vmem:[%s204 + $0x68] sm:$0xff]
        %v227 = vld [vmem:[%s204 + $0x70] sm:$0xff]
        %v228 = vld [vmem:[%s204 + $0x78] sm:$0xff]
        %v229 = vld [vmem:[#allocation2] sm:$0xff]
        %v230 = vld [vmem:[#allocation2 + $0x8] sm:$0xff]
        %v231 = vld [vmem:[#allocation2 + $0x10] sm:$0xff]
        %v232 = vld [vmem:[#allocation2 + $0x18] sm:$0xff]
        %v233 = vld [vmem:[#allocation2 + $0x20] sm:$0xff]
        %v234 = vld [vmem:[#allocation2 + $0x28] sm:$0xff]
        %v235 = vld [vmem:[#allocation2 + $0x30] sm:$0xff]
        %v236 = vld [vmem:[#allocation2 + $0x38] sm:$0xff]
        %v237 = vld [vmem:[#allocation2 + $0x40] sm:$0xff]
        %v238 = vld [vmem:[#allocation2 + $0x48] sm:$0xff]
        %v239 = vld [vmem:[#allocation2 + $0x50] sm:$0xff]
        %v240 = vld [vmem:[#allocation2 + $0x58] sm:$0xff]
        %v241 = vld [vmem:[#allocation2 + $0x60] sm:$0xff]
        %v242 = vld [vmem:[#allocation2 + $0x68] sm:$0xff]
        %v243 = vld [vmem:[#allocation2 + $0x70] sm:$0xff]
        %v244 = vld [vmem:[#allocation2 + $0x78] sm:$0xff]
        %v245 = vld [vmem:[#allocation2 + $0x80] sm:$0xff]
        %v246 = vld [vmem:[#allocation2 + $0x88] sm:$0xff]
        %v247 = vld [vmem:[#allocation2 + $0x90] sm:$0xff]
        %v248 = vld [vmem:[#allocation2 + $0x98] sm:$0xff]
        %v249 = vld [vmem:[#allocation2 + $0xa0] sm:$0xff]
        %v250 = vld [vmem:[#allocation2 + $0xa8] sm:$0xff]
        %v251 = vld [vmem:[#allocation2 + $0xb0] sm:$0xff]
        %v252 = vld [vmem:[#allocation2 + $0xb8] sm:$0xff]
        %v253 = vld [vmem:[#allocation2 + $0xc0] sm:$0xff]
        %v254 = vld [vmem:[#allocation2 + $0xc8] sm:$0xff]
        %v255 = vld [vmem:[#allocation2 + $0xd0] sm:$0xff]
        %v256 = vld [vmem:[#allocation2 + $0xd8] sm:$0xff]
        %v257 = vld [vmem:[#allocation2 + $0xe0] sm:$0xff]
        %v258 = vld [vmem:[#allocation2 + $0xe8] sm:$0xff]
        %v259 = vld [vmem:[#allocation2 + $0xf0] sm:$0xff]
        %v260 = vld [vmem:[#allocation2 + $0xf8] sm:$0xff]
        %v261 = vld [vmem:[#allocation4] ss:$8 sm:$0x3]
        %v262 = vpack.c.bf16 %v215, %v213
        %v263 = vpack.c.bf16 %v216, %v214
        %v264 = vpack.c.bf16 %v219, %v217
        %v265 = vpack.c.bf16 %v220, %v218
        %v266 = vpack.c.bf16 %v223, %v221
        %v267 = vpack.c.bf16 %v224, %v222
        %v268 = vpack.c.bf16 %v227, %v225
        %v269 = vpack.c.bf16 %v228, %v226
        %v271 = vperm.slane %v261, 0
        %v272 = vperm.slane %v261, 1
        %v307 = vunpack.c.l.b16 %v229
        %v308 = vunpack.c.h.b16 %v229
        %v309 = vunpack.c.l.b16 %v230
        %v310 = vunpack.c.h.b16 %v230
        %v311 = vunpack.c.l.b16 %v231
        %v312 = vunpack.c.h.b16 %v231
        %v313 = vunpack.c.l.b16 %v232
        %v314 = vunpack.c.h.b16 %v232
        %v315 = vunpack.c.l.b16 %v233
        %v316 = vunpack.c.h.b16 %v233
        %v317 = vunpack.c.l.b16 %v234
        %v318 = vunpack.c.h.b16 %v234
        %v319 = vunpack.c.l.b16 %v235
        %v320 = vunpack.c.h.b16 %v235
        %v321 = vunpack.c.l.b16 %v236
        %v322 = vunpack.c.h.b16 %v236
        %v323 = vunpack.c.l.b16 %v237
        %v324 = vunpack.c.h.b16 %v237
        %v325 = vunpack.c.l.b16 %v238
        %v326 = vunpack.c.h.b16 %v238
        %v327 = vunpack.c.l.b16 %v239
        %v328 = vunpack.c.h.b16 %v239
        %v329 = vunpack.c.l.b16 %v240
        %v330 = vunpack.c.h.b16 %v240
        %v331 = vunpack.c.l.b16 %v241
        %v332 = vunpack.c.h.b16 %v241
        %v333 = vunpack.c.l.b16 %v242
        %v334 = vunpack.c.h.b16 %v242
        %v335 = vunpack.c.l.b16 %v243
        %v336 = vunpack.c.h.b16 %v243
        %v337 = vunpack.c.l.b16 %v244
        %v338 = vunpack.c.h.b16 %v244
        %v339 = vunpack.c.l.b16 %v245
        %v340 = vunpack.c.h.b16 %v245
        %v341 = vunpack.c.l.b16 %v246
        %v342 = vunpack.c.h.b16 %v246
        %v343 = vunpack.c.l.b16 %v247
        %v344 = vunpack.c.h.b16 %v247
        %v345 = vunpack.c.l.b16 %v248
        %v346 = vunpack.c.h.b16 %v248
        %v347 = vunpack.c.l.b16 %v249
        %v348 = vunpack.c.h.b16 %v249
        %v349 = vunpack.c.l.b16 %v250
        %v350 = vunpack.c.h.b16 %v250
        %v351 = vunpack.c.l.b16 %v251
        %v352 = vunpack.c.h.b16 %v251
        %v353 = vunpack.c.l.b16 %v252
        %v354 = vunpack.c.h.b16 %v252
        %v355 = vunpack.c.l.b16 %v253
        %v356 = vunpack.c.h.b16 %v253
        %v357 = vunpack.c.l.b16 %v254
        %v358 = vunpack.c.h.b16 %v254
        %v359 = vunpack.c.l.b16 %v255
        %v360 = vunpack.c.h.b16 %v255
        %v361 = vunpack.c.l.b16 %v256
        %v362 = vunpack.c.h.b16 %v256
        %v363 = vunpack.c.l.b16 %v257
        %v364 = vunpack.c.h.b16 %v257
        %v365 = vunpack.c.l.b16 %v258
        %v366 = vunpack.c.h.b16 %v258
        %v367 = vunpack.c.l.b16 %v259
        %v368 = vunpack.c.h.b16 %v259
        %v369 = vunpack.c.l.b16 %v260
        %v370 = vunpack.c.h.b16 %v260
        %v371 = vpack.c.b16 %v309, %v307
        %v372 = vpack.c.b16 %v310, %v308
        %v373 = vpack.c.b16 %v313, %v311
        %v374 = vpack.c.b16 %v314, %v312
        %v375 = vpack.c.b16 %v317, %v315
        %v376 = vpack.c.b16 %v318, %v316
        %v377 = vpack.c.b16 %v321, %v319
        %v378 = vpack.c.b16 %v322, %v320
        %v379 = vpack.c.b16 %v325, %v323
        %v380 = vpack.c.b16 %v326, %v324
        %v381 = vpack.c.b16 %v329, %v327
        %v382 = vpack.c.b16 %v330, %v328
        %v383 = vpack.c.b16 %v333, %v331
        %v384 = vpack.c.b16 %v334, %v332
        %v385 = vpack.c.b16 %v337, %v335
        %v386 = vpack.c.b16 %v338, %v336
        %v387 = vpack.c.b16 %v341, %v339
        %v388 = vpack.c.b16 %v342, %v340
        %v389 = vpack.c.b16 %v345, %v343
        %v390 = vpack.c.b16 %v346, %v344
        %v391 = vpack.c.b16 %v349, %v347
        %v392 = vpack.c.b16 %v350, %v348
        %v393 = vpack.c.b16 %v353, %v351
        %v394 = vpack.c.b16 %v354, %v352
        %v395 = vpack.c.b16 %v357, %v355
        %v396 = vpack.c.b16 %v358, %v356
        %v397 = vpack.c.b16 %v361, %v359
        %v398 = vpack.c.b16 %v362, %v360
        %v399 = vpack.c.b16 %v365, %v363
        %v400 = vpack.c.b16 %v366, %v364
        %v401 = vpack.c.b16 %v369, %v367
        %v402 = vpack.c.b16 %v370, %v368
        %435 = vmatpush.bf16.msra.mxu0 %v385
        %436 = vmatpush.bf16.msra.mxu0 %v383
        %437 = vmatpush.bf16.msra.mxu0 %v381
        %438 = vmatpush.bf16.msra.mxu0 %v379
        %439 = vmatpush.bf16.msra.mxu0 %v377
        %440 = vmatpush.bf16.msra.mxu0 %v375
        %441 = vmatpush.bf16.msra.mxu0 %v373
        %442 = vmatpush.bf16.msra.mxu0 %v371
        %443 = vmatmul.bf16.gmra.mxu0 %v262
        %v444 = vpop.f32.mrf.mxu0
        %v445 = vadd.f32 %v271, %v444
        %v446 = vpop.f32.mrf.mxu0
        %v447 = vadd.f32 %v271, %v446
        %448 = vmatmul.bf16.gmra.mxu0 %v264
        %v449 = vpop.f32.mrf.mxu0
        %v450 = vadd.f32 %v271, %v449
        %v451 = vpop.f32.mrf.mxu0
        %v452 = vadd.f32 %v271, %v451
        %453 = vmatmul.bf16.gmra.mxu0 %v266
        %v454 = vpop.f32.mrf.mxu0
        %v455 = vadd.f32 %v271, %v454
        %v456 = vpop.f32.mrf.mxu0
        %v457 = vadd.f32 %v271, %v456
        %458 = vmatmul.bf16.gmra.mxu0 %v268
        %v459 = vpop.f32.mrf.mxu0
        %v460 = vadd.f32 %v271, %v459
        %v461 = vpop.f32.mrf.mxu0
        %v462 = vadd.f32 %v271, %v461
        %463 = vdwg.mxu0
        %464 = vmatpush.bf16.msra.mxu0 %v401
        %465 = vmatpush.bf16.msra.mxu0 %v399
        %466 = vmatpush.bf16.msra.mxu0 %v397
        %467 = vmatpush.bf16.msra.mxu0 %v395
        %468 = vmatpush.bf16.msra.mxu0 %v393
        %469 = vmatpush.bf16.msra.mxu0 %v391
        %470 = vmatpush.bf16.msra.mxu0 %v389
        %471 = vmatpush.bf16.msra.mxu0 %v387
        %472 = vmatmul.bf16.gmra.mxu0 %v263
        %v473 = vpop.f32.mrf.mxu0
        %v474 = vadd.f32 %v445, %v473
        %v475 = vpop.f32.mrf.mxu0
        %v476 = vadd.f32 %v447, %v475
        %477 = vmatmul.bf16.gmra.mxu0 %v265
        %v478 = vpop.f32.mrf.mxu0
        %v479 = vadd.f32 %v450, %v478
        %v480 = vpop.f32.mrf.mxu0
        %v481 = vadd.f32 %v452, %v480
        %482 = vmatmul.bf16.gmra.mxu0 %v267
        %v483 = vpop.f32.mrf.mxu0
        %v484 = vadd.f32 %v455, %v483
        %v485 = vpop.f32.mrf.mxu0
        %v486 = vadd.f32 %v457, %v485
        %487 = vmatmul.bf16.gmra.mxu0 %v269
        %v488 = vpop.f32.mrf.mxu0
        %v489 = vadd.f32 %v460, %v488
        %v490 = vpop.f32.mrf.mxu0
        %v491 = vadd.f32 %v462, %v490
        %492 = vdwg.mxu0
        %493 = vmatpush.bf16.msra.mxu0 %v386
        %494 = vmatpush.bf16.msra.mxu0 %v384
        %495 = vmatpush.bf16.msra.mxu0 %v382
        %496 = vmatpush.bf16.msra.mxu0 %v380
        %497 = vmatpush.bf16.msra.mxu0 %v378
        %498 = vmatpush.bf16.msra.mxu0 %v376
        %499 = vmatpush.bf16.msra.mxu0 %v374
        %500 = vmatpush.bf16.msra.mxu0 %v372
        %501 = vmatmul.bf16.gmra.mxu0 %v262
        %v502 = vpop.f32.mrf.mxu0
        %v503 = vadd.f32 %v272, %v502
        %v504 = vpop.f32.mrf.mxu0
        %v505 = vadd.f32 %v272, %v504
        %506 = vmatmul.bf16.gmra.mxu0 %v264
        %v507 = vpop.f32.mrf.mxu0
        %v508 = vadd.f32 %v272, %v507
        %v509 = vpop.f32.mrf.mxu0
        %v510 = vadd.f32 %v272, %v509
        %511 = vmatmul.bf16.gmra.mxu0 %v266
        %v512 = vpop.f32.mrf.mxu0
        %v513 = vadd.f32 %v272, %v512
        %v514 = vpop.f32.mrf.mxu0
        %v515 = vadd.f32 %v272, %v514
        %516 = vmatmul.bf16.gmra.mxu0 %v268
        %v517 = vpop.f32.mrf.mxu0
        %v518 = vadd.f32 %v272, %v517
        %v519 = vpop.f32.mrf.mxu0
        %v520 = vadd.f32 %v272, %v519
        %521 = vdwg.mxu0
        %522 = vmatpush.bf16.msra.mxu0 %v402
        %523 = vmatpush.bf16.msra.mxu0 %v400
        %524 = vmatpush.bf16.msra.mxu0 %v398
        %525 = vmatpush.bf16.msra.mxu0 %v396
        %526 = vmatpush.bf16.msra.mxu0 %v394
        %527 = vmatpush.bf16.msra.mxu0 %v392
        %528 = vmatpush.bf16.msra.mxu0 %v390
        %529 = vmatpush.bf16.msra.mxu0 %v388
        %530 = vmatmul.bf16.gmra.mxu0 %v263
        %v531 = vpop.f32.mrf.mxu0
        %v532 = vadd.f32 %v503, %v531
        %v533 = vpop.f32.mrf.mxu0
        %v534 = vadd.f32 %v505, %v533
        %535 = vmatmul.bf16.gmra.mxu0 %v265
        %v536 = vpop.f32.mrf.mxu0
        %v537 = vadd.f32 %v508, %v536
        %v538 = vpop.f32.mrf.mxu0
        %v539 = vadd.f32 %v510, %v538
        %540 = vmatmul.bf16.gmra.mxu0 %v267
        %v541 = vpop.f32.mrf.mxu0
        %v542 = vadd.f32 %v513, %v541
        %v543 = vpop.f32.mrf.mxu0
        %v544 = vadd.f32 %v515, %v543
        %545 = vmatmul.bf16.gmra.mxu0 %v269
        %v546 = vpop.f32.mrf.mxu0
        %v547 = vadd.f32 %v518, %v546
        %v548 = vpop.f32.mrf.mxu0
        %v549 = vadd.f32 %v520, %v548
        %550 = vdwg.mxu0
        %vm551 = vcmp.ge.f32.partialorder %v474, 0.0
        %vm552 = vcmp.ge.f32.partialorder %v532, 0.0
        %vm553 = vcmp.ge.f32.partialorder %v476, 0.0
        %vm554 = vcmp.ge.f32.partialorder %v534, 0.0
        %vm555 = vcmp.ge.f32.partialorder %v479, 0.0
        %vm556 = vcmp.ge.f32.partialorder %v537, 0.0
        %vm557 = vcmp.ge.f32.partialorder %v481, 0.0
        %vm558 = vcmp.ge.f32.partialorder %v539, 0.0
        %vm559 = vcmp.ge.f32.partialorder %v484, 0.0
        %vm560 = vcmp.ge.f32.partialorder %v542, 0.0
        %vm561 = vcmp.ge.f32.partialorder %v486, 0.0
        %vm562 = vcmp.ge.f32.partialorder %v544, 0.0
        %vm563 = vcmp.ge.f32.partialorder %v489, 0.0
        %vm564 = vcmp.ge.f32.partialorder %v547, 0.0
        %vm565 = vcmp.ge.f32.partialorder %v491, 0.0
        %vm566 = vcmp.ge.f32.partialorder %v549, 0.0
        %v567 = vmul.f32 %v474, 0.01
        %v568 = vmul.f32 %v532, 0.01
        %v569 = vmul.f32 %v476, 0.01
        %v570 = vmul.f32 %v534, 0.01
        %v571 = vmul.f32 %v479, 0.01
        %v572 = vmul.f32 %v537, 0.01
        %v573 = vmul.f32 %v481, 0.01
        %v574 = vmul.f32 %v539, 0.01
        %v575 = vmul.f32 %v484, 0.01
        %v576 = vmul.f32 %v542, 0.01
        %v577 = vmul.f32 %v486, 0.01
        %v578 = vmul.f32 %v544, 0.01
        %v579 = vmul.f32 %v489, 0.01
        %v580 = vmul.f32 %v547, 0.01
        %v581 = vmul.f32 %v491, 0.01
        %v582 = vmul.f32 %v549, 0.01
        %v583 = vsel %vm551, %v474, %v567
        %v584 = vsel %vm552, %v532, %v568
        %v585 = vsel %vm553, %v476, %v569
        %v586 = vsel %vm554, %v534, %v570
        %v587 = vsel %vm555, %v479, %v571
        %v588 = vsel %vm556, %v537, %v572
        %v589 = vsel %vm557, %v481, %v573
        %v590 = vsel %vm558, %v539, %v574
        %v591 = vsel %vm559, %v484, %v575
        %v592 = vsel %vm560, %v542, %v576
        %v593 = vsel %vm561, %v486, %v577
        %v594 = vsel %vm562, %v544, %v578
        %v595 = vsel %vm563, %v489, %v579
        %v596 = vsel %vm564, %v547, %v580
        %v597 = vsel %vm565, %v491, %v581
        %v598 = vsel %vm566, %v549, %v582
        %s599 = scalar_lea.vmem [#allocation2], 256
        %v600 = vld [vmem:[%s599] sm:$0xff]
        %v601 = vld [vmem:[%s599 + $0x8] sm:$0xff]
        %v602 = vld [vmem:[%s599 + $0x10] sm:$0xff]
        %v603 = vld [vmem:[%s599 + $0x18] sm:$0xff]
        %v604 = vld [vmem:[%s599 + $0x20] sm:$0xff]
        %v605 = vld [vmem:[%s599 + $0x28] sm:$0xff]
        %v606 = vld [vmem:[%s599 + $0x30] sm:$0xff]
        %v607 = vld [vmem:[%s599 + $0x38] sm:$0xff]
        %v608 = vld [vmem:[%s599 + $0x40] sm:$0xff]
        %v609 = vld [vmem:[%s599 + $0x48] sm:$0xff]
        %v610 = vld [vmem:[%s599 + $0x50] sm:$0xff]
        %v611 = vld [vmem:[%s599 + $0x58] sm:$0xff]
        %v612 = vld [vmem:[%s599 + $0x60] sm:$0xff]
        %v613 = vld [vmem:[%s599 + $0x68] sm:$0xff]
        %v614 = vld [vmem:[%s599 + $0x70] sm:$0xff]
        %v615 = vld [vmem:[%s599 + $0x78] sm:$0xff]
        %v616 = vld [vmem:[%s599 + $0x80] sm:$0xff]
        %v617 = vld [vmem:[%s599 + $0x88] sm:$0xff]
        %v618 = vld [vmem:[%s599 + $0x90] sm:$0xff]
        %v619 = vld [vmem:[%s599 + $0x98] sm:$0xff]
        %v620 = vld [vmem:[%s599 + $0xa0] sm:$0xff]
        %v621 = vld [vmem:[%s599 + $0xa8] sm:$0xff]
        %v622 = vld [vmem:[%s599 + $0xb0] sm:$0xff]
        %v623 = vld [vmem:[%s599 + $0xb8] sm:$0xff]
        %v624 = vld [vmem:[%s599 + $0xc0] sm:$0xff]
        %v625 = vld [vmem:[%s599 + $0xc8] sm:$0xff]
        %v626 = vld [vmem:[%s599 + $0xd0] sm:$0xff]
        %v627 = vld [vmem:[%s599 + $0xd8] sm:$0xff]
        %v628 = vld [vmem:[%s599 + $0xe0] sm:$0xff]
        %v629 = vld [vmem:[%s599 + $0xe8] sm:$0xff]
        %v630 = vld [vmem:[%s599 + $0xf0] sm:$0xff]
        %v631 = vld [vmem:[%s599 + $0xf8] sm:$0xff]
        %s632 = scalar_lea.vmem [#allocation4], 1
        %v633 = vld [vmem:[%s632] ss:$8 sm:$0x3]
        %v634 = vpack.c.bf16 %v585, %v583
        %v635 = vpack.c.bf16 %v586, %v584
        %v636 = vpack.c.bf16 %v589, %v587
        %v637 = vpack.c.bf16 %v590, %v588
        %v638 = vpack.c.bf16 %v593, %v591
        %v639 = vpack.c.bf16 %v594, %v592
        %v640 = vpack.c.bf16 %v597, %v595
        %v641 = vpack.c.bf16 %v598, %v596
        %v643 = vperm.slane %v633, 0
        %v644 = vperm.slane %v633, 1
        %v679 = vunpack.c.l.b16 %v600
        %v680 = vunpack.c.h.b16 %v600
        %v681 = vunpack.c.l.b16 %v601
        %v682 = vunpack.c.h.b16 %v601
        %v683 = vunpack.c.l.b16 %v602
        %v684 = vunpack.c.h.b16 %v602
        %v685 = vunpack.c.l.b16 %v603
        %v686 = vunpack.c.h.b16 %v603
        %v687 = vunpack.c.l.b16 %v604
        %v688 = vunpack.c.h.b16 %v604
        %v689 = vunpack.c.l.b16 %v605
        %v690 = vunpack.c.h.b16 %v605
        %v691 = vunpack.c.l.b16 %v606
        %v692 = vunpack.c.h.b16 %v606
        %v693 = vunpack.c.l.b16 %v607
        %v694 = vunpack.c.h.b16 %v607
        %v695 = vunpack.c.l.b16 %v608
        %v696 = vunpack.c.h.b16 %v608
        %v697 = vunpack.c.l.b16 %v609
        %v698 = vunpack.c.h.b16 %v609
        %v699 = vunpack.c.l.b16 %v610
        %v700 = vunpack.c.h.b16 %v610
        %v701 = vunpack.c.l.b16 %v611
        %v702 = vunpack.c.h.b16 %v611
        %v703 = vunpack.c.l.b16 %v612
        %v704 = vunpack.c.h.b16 %v612
        %v705 = vunpack.c.l.b16 %v613
        %v706 = vunpack.c.h.b16 %v613
        %v707 = vunpack.c.l.b16 %v614
        %v708 = vunpack.c.h.b16 %v614
        %v709 = vunpack.c.l.b16 %v615
        %v710 = vunpack.c.h.b16 %v615
        %v711 = vunpack.c.l.b16 %v616
        %v712 = vunpack.c.h.b16 %v616
        %v713 = vunpack.c.l.b16 %v617
        %v714 = vunpack.c.h.b16 %v617
        %v715 = vunpack.c.l.b16 %v618
        %v716 = vunpack.c.h.b16 %v618
        %v717 = vunpack.c.l.b16 %v619
        %v718 = vunpack.c.h.b16 %v619
        %v719 = vunpack.c.l.b16 %v620
        %v720 = vunpack.c.h.b16 %v620
        %v721 = vunpack.c.l.b16 %v621
        %v722 = vunpack.c.h.b16 %v621
        %v723 = vunpack.c.l.b16 %v622
        %v724 = vunpack.c.h.b16 %v622
        %v725 = vunpack.c.l.b16 %v623
        %v726 = vunpack.c.h.b16 %v623
        %v727 = vunpack.c.l.b16 %v624
        %v728 = vunpack.c.h.b16 %v624
        %v729 = vunpack.c.l.b16 %v625
        %v730 = vunpack.c.h.b16 %v625
        %v731 = vunpack.c.l.b16 %v626
        %v732 = vunpack.c.h.b16 %v626
        %v733 = vunpack.c.l.b16 %v627
        %v734 = vunpack.c.h.b16 %v627
        %v735 = vunpack.c.l.b16 %v628
        %v736 = vunpack.c.h.b16 %v628
        %v737 = vunpack.c.l.b16 %v629
        %v738 = vunpack.c.h.b16 %v629
        %v739 = vunpack.c.l.b16 %v630
        %v740 = vunpack.c.h.b16 %v630
        %v741 = vunpack.c.l.b16 %v631
        %v742 = vunpack.c.h.b16 %v631
        %v743 = vpack.c.b16 %v681, %v679
        %v744 = vpack.c.b16 %v682, %v680
        %v745 = vpack.c.b16 %v685, %v683
        %v746 = vpack.c.b16 %v686, %v684
        %v747 = vpack.c.b16 %v689, %v687
        %v748 = vpack.c.b16 %v690, %v688
        %v749 = vpack.c.b16 %v693, %v691
        %v750 = vpack.c.b16 %v694, %v692
        %v751 = vpack.c.b16 %v697, %v695
        %v752 = vpack.c.b16 %v698, %v696
        %v753 = vpack.c.b16 %v701, %v699
        %v754 = vpack.c.b16 %v702, %v700
        %v755 = vpack.c.b16 %v705, %v703
        %v756 = vpack.c.b16 %v706, %v704
        %v757 = vpack.c.b16 %v709, %v707
        %v758 = vpack.c.b16 %v710, %v708
        %v759 = vpack.c.b16 %v713, %v711
        %v760 = vpack.c.b16 %v714, %v712
        %v761 = vpack.c.b16 %v717, %v715
        %v762 = vpack.c.b16 %v718, %v716
        %v763 = vpack.c.b16 %v721, %v719
        %v764 = vpack.c.b16 %v722, %v720
        %v765 = vpack.c.b16 %v725, %v723
        %v766 = vpack.c.b16 %v726, %v724
        %v767 = vpack.c.b16 %v729, %v727
        %v768 = vpack.c.b16 %v730, %v728
        %v769 = vpack.c.b16 %v733, %v731
        %v770 = vpack.c.b16 %v734, %v732
        %v771 = vpack.c.b16 %v737, %v735
        %v772 = vpack.c.b16 %v738, %v736
        %v773 = vpack.c.b16 %v741, %v739
        %v774 = vpack.c.b16 %v742, %v740
        %807 = vmatpush.bf16.msra.mxu0 %v757
        %808 = vmatpush.bf16.msra.mxu0 %v755
        %809 = vmatpush.bf16.msra.mxu0 %v753
        %810 = vmatpush.bf16.msra.mxu0 %v751
        %811 = vmatpush.bf16.msra.mxu0 %v749
        %812 = vmatpush.bf16.msra.mxu0 %v747
        %813 = vmatpush.bf16.msra.mxu0 %v745
        %814 = vmatpush.bf16.msra.mxu0 %v743
        %815 = vmatmul.bf16.gmra.mxu0 %v634
        %v816 = vpop.f32.mrf.mxu0
        %v817 = vadd.f32 %v643, %v816
        %v818 = vpop.f32.mrf.mxu0
        %v819 = vadd.f32 %v643, %v818
        %820 = vmatmul.bf16.gmra.mxu0 %v636
        %v821 = vpop.f32.mrf.mxu0
        %v822 = vadd.f32 %v643, %v821
        %v823 = vpop.f32.mrf.mxu0
        %v824 = vadd.f32 %v643, %v823
        %825 = vmatmul.bf16.gmra.mxu0 %v638
        %v826 = vpop.f32.mrf.mxu0
        %v827 = vadd.f32 %v643, %v826
        %v828 = vpop.f32.mrf.mxu0
        %v829 = vadd.f32 %v643, %v828
        %830 = vmatmul.bf16.gmra.mxu0 %v640
        %v831 = vpop.f32.mrf.mxu0
        %v832 = vadd.f32 %v643, %v831
        %v833 = vpop.f32.mrf.mxu0
        %v834 = vadd.f32 %v643, %v833
        %835 = vdwg.mxu0
        %836 = vmatpush.bf16.msra.mxu0 %v773
        %837 = vmatpush.bf16.msra.mxu0 %v771
        %838 = vmatpush.bf16.msra.mxu0 %v769
        %839 = vmatpush.bf16.msra.mxu0 %v767
        %840 = vmatpush.bf16.msra.mxu0 %v765
        %841 = vmatpush.bf16.msra.mxu0 %v763
        %842 = vmatpush.bf16.msra.mxu0 %v761
        %843 = vmatpush.bf16.msra.mxu0 %v759
        %844 = vmatmul.bf16.gmra.mxu0 %v635
        %v845 = vpop.f32.mrf.mxu0
        %v846 = vadd.f32 %v817, %v845
        %v847 = vpop.f32.mrf.mxu0
        %v848 = vadd.f32 %v819, %v847
        %849 = vmatmul.bf16.gmra.mxu0 %v637
        %v850 = vpop.f32.mrf.mxu0
        %v851 = vadd.f32 %v822, %v850
        %v852 = vpop.f32.mrf.mxu0
        %v853 = vadd.f32 %v824, %v852
        %854 = vmatmul.bf16.gmra.mxu0 %v639
        %v855 = vpop.f32.mrf.mxu0
        %v856 = vadd.f32 %v827, %v855
        %v857 = vpop.f32.mrf.mxu0
        %v858 = vadd.f32 %v829, %v857
        %859 = vmatmul.bf16.gmra.mxu0 %v641
        %v860 = vpop.f32.mrf.mxu0
        %v861 = vadd.f32 %v832, %v860
        %v862 = vpop.f32.mrf.mxu0
        %v863 = vadd.f32 %v834, %v862
        %864 = vdwg.mxu0
        %865 = vmatpush.bf16.msra.mxu0 %v758
        %866 = vmatpush.bf16.msra.mxu0 %v756
        %867 = vmatpush.bf16.msra.mxu0 %v754
        %868 = vmatpush.bf16.msra.mxu0 %v752
        %869 = vmatpush.bf16.msra.mxu0 %v750
        %870 = vmatpush.bf16.msra.mxu0 %v748
        %871 = vmatpush.bf16.msra.mxu0 %v746
        %872 = vmatpush.bf16.msra.mxu0 %v744
        %873 = vmatmul.bf16.gmra.mxu0 %v634
        %v874 = vpop.f32.mrf.mxu0
        %v875 = vadd.f32 %v644, %v874
        %v876 = vpop.f32.mrf.mxu0
        %v877 = vadd.f32 %v644, %v876
        %878 = vmatmul.bf16.gmra.mxu0 %v636
        %v879 = vpop.f32.mrf.mxu0
        %v880 = vadd.f32 %v644, %v879
        %v881 = vpop.f32.mrf.mxu0
        %v882 = vadd.f32 %v644, %v881
        %883 = vmatmul.bf16.gmra.mxu0 %v638
        %v884 = vpop.f32.mrf.mxu0
        %v885 = vadd.f32 %v644, %v884
        %v886 = vpop.f32.mrf.mxu0
        %v887 = vadd.f32 %v644, %v886
        %888 = vmatmul.bf16.gmra.mxu0 %v640
        %v889 = vpop.f32.mrf.mxu0
        %v890 = vadd.f32 %v644, %v889
        %v891 = vpop.f32.mrf.mxu0
        %v892 = vadd.f32 %v644, %v891
        %893 = vdwg.mxu0
        %894 = vmatpush.bf16.msra.mxu0 %v774
        %895 = vmatpush.bf16.msra.mxu0 %v772
        %896 = vmatpush.bf16.msra.mxu0 %v770
        %897 = vmatpush.bf16.msra.mxu0 %v768
        %898 = vmatpush.bf16.msra.mxu0 %v766
        %899 = vmatpush.bf16.msra.mxu0 %v764
        %900 = vmatpush.bf16.msra.mxu0 %v762
        %901 = vmatpush.bf16.msra.mxu0 %v760
        %902 = vmatmul.bf16.gmra.mxu0 %v635
        %v903 = vpop.f32.mrf.mxu0
        %v904 = vadd.f32 %v875, %v903
        %v905 = vpop.f32.mrf.mxu0
        %v906 = vadd.f32 %v877, %v905
        %907 = vmatmul.bf16.gmra.mxu0 %v637
        %v908 = vpop.f32.mrf.mxu0
        %v909 = vadd.f32 %v880, %v908
        %v910 = vpop.f32.mrf.mxu0
        %v911 = vadd.f32 %v882, %v910
        %912 = vmatmul.bf16.gmra.mxu0 %v639
        %v913 = vpop.f32.mrf.mxu0
        %v914 = vadd.f32 %v885, %v913
        %v915 = vpop.f32.mrf.mxu0
        %v916 = vadd.f32 %v887, %v915
        %917 = vmatmul.bf16.gmra.mxu0 %v641
        %v918 = vpop.f32.mrf.mxu0
        %v919 = vadd.f32 %v890, %v918
        %v920 = vpop.f32.mrf.mxu0
        %v921 = vadd.f32 %v892, %v920
        %922 = vdwg.mxu0
        %vm923 = vcmp.ge.f32.partialorder %v846, 0.0
        %vm924 = vcmp.ge.f32.partialorder %v904, 0.0
        %vm925 = vcmp.ge.f32.partialorder %v848, 0.0
        %vm926 = vcmp.ge.f32.partialorder %v906, 0.0
        %vm927 = vcmp.ge.f32.partialorder %v851, 0.0
        %vm928 = vcmp.ge.f32.partialorder %v909, 0.0
        %vm929 = vcmp.ge.f32.partialorder %v853, 0.0
        %vm930 = vcmp.ge.f32.partialorder %v911, 0.0
        %vm931 = vcmp.ge.f32.partialorder %v856, 0.0
        %vm932 = vcmp.ge.f32.partialorder %v914, 0.0
        %vm933 = vcmp.ge.f32.partialorder %v858, 0.0
        %vm934 = vcmp.ge.f32.partialorder %v916, 0.0
        %vm935 = vcmp.ge.f32.partialorder %v861, 0.0
        %vm936 = vcmp.ge.f32.partialorder %v919, 0.0
        %vm937 = vcmp.ge.f32.partialorder %v863, 0.0
        %vm938 = vcmp.ge.f32.partialorder %v921, 0.0
        %v939 = vmul.f32 %v846, 0.01
        %v940 = vmul.f32 %v904, 0.01
        %v941 = vmul.f32 %v848, 0.01
        %v942 = vmul.f32 %v906, 0.01
        %v943 = vmul.f32 %v851, 0.01
        %v944 = vmul.f32 %v909, 0.01
        %v945 = vmul.f32 %v853, 0.01
        %v946 = vmul.f32 %v911, 0.01
        %v947 = vmul.f32 %v856, 0.01
        %v948 = vmul.f32 %v914, 0.01
        %v949 = vmul.f32 %v858, 0.01
        %v950 = vmul.f32 %v916, 0.01
        %v951 = vmul.f32 %v861, 0.01
        %v952 = vmul.f32 %v919, 0.01
        %v953 = vmul.f32 %v863, 0.01
        %v954 = vmul.f32 %v921, 0.01
        %v955 = vsel %vm923, %v846, %v939
        %v956 = vsel %vm924, %v904, %v940
        %v957 = vsel %vm925, %v848, %v941
        %v958 = vsel %vm926, %v906, %v942
        %v959 = vsel %vm927, %v851, %v943
        %v960 = vsel %vm928, %v909, %v944
        %v961 = vsel %vm929, %v853, %v945
        %v962 = vsel %vm930, %v911, %v946
        %v963 = vsel %vm931, %v856, %v947
        %v964 = vsel %vm932, %v914, %v948
        %v965 = vsel %vm933, %v858, %v949
        %v966 = vsel %vm934, %v916, %v950
        %v967 = vsel %vm935, %v861, %v951
        %v968 = vsel %vm936, %v919, %v952
        %v969 = vsel %vm937, %v863, %v953
        %v970 = vsel %vm938, %v921, %v954
        %s971 = scalar_lea.vmem [#allocation2], 512
        %v972 = vld [vmem:[%s971] sm:$0xff]
        %v973 = vld [vmem:[%s971 + $0x8] sm:$0xff]
        %v974 = vld [vmem:[%s971 + $0x10] sm:$0xff]
        %v975 = vld [vmem:[%s971 + $0x18] sm:$0xff]
        %v976 = vld [vmem:[%s971 + $0x20] sm:$0xff]
        %v977 = vld [vmem:[%s971 + $0x28] sm:$0xff]
        %v978 = vld [vmem:[%s971 + $0x30] sm:$0xff]
        %v979 = vld [vmem:[%s971 + $0x38] sm:$0xff]
        %v980 = vld [vmem:[%s971 + $0x40] sm:$0xff]
        %v981 = vld [vmem:[%s971 + $0x48] sm:$0xff]
        %v982 = vld [vmem:[%s971 + $0x50] sm:$0xff]
        %v983 = vld [vmem:[%s971 + $0x58] sm:$0xff]
        %v984 = vld [vmem:[%s971 + $0x60] sm:$0xff]
        %v985 = vld [vmem:[%s971 + $0x68] sm:$0xff]
        %v986 = vld [vmem:[%s971 + $0x70] sm:$0xff]
        %v987 = vld [vmem:[%s971 + $0x78] sm:$0xff]
        %v988 = vld [vmem:[%s971 + $0x80] sm:$0xff]
        %v989 = vld [vmem:[%s971 + $0x88] sm:$0xff]
        %v990 = vld [vmem:[%s971 + $0x90] sm:$0xff]
        %v991 = vld [vmem:[%s971 + $0x98] sm:$0xff]
        %v992 = vld [vmem:[%s971 + $0xa0] sm:$0xff]
        %v993 = vld [vmem:[%s971 + $0xa8] sm:$0xff]
        %v994 = vld [vmem:[%s971 + $0xb0] sm:$0xff]
        %v995 = vld [vmem:[%s971 + $0xb8] sm:$0xff]
        %v996 = vld [vmem:[%s971 + $0xc0] sm:$0xff]
        %v997 = vld [vmem:[%s971 + $0xc8] sm:$0xff]
        %v998 = vld [vmem:[%s971 + $0xd0] sm:$0xff]
        %v999 = vld [vmem:[%s971 + $0xd8] sm:$0xff]
        %v1000 = vld [vmem:[%s971 + $0xe0] sm:$0xff]
        %v1001 = vld [vmem:[%s971 + $0xe8] sm:$0xff]
        %v1002 = vld [vmem:[%s971 + $0xf0] sm:$0xff]
        %v1003 = vld [vmem:[%s971 + $0xf8] sm:$0xff]
        %s1004 = scalar_lea.vmem [#allocation4], 2
        %v1005 = vld [vmem:[%s1004] ss:$8 sm:$0x3]
        %v1006 = vpack.c.bf16 %v957, %v955
        %v1007 = vpack.c.bf16 %v958, %v956
        %v1008 = vpack.c.bf16 %v961, %v959
        %v1009 = vpack.c.bf16 %v962, %v960
        %v1010 = vpack.c.bf16 %v965, %v963
        %v1011 = vpack.c.bf16 %v966, %v964
        %v1012 = vpack.c.bf16 %v969, %v967
        %v1013 = vpack.c.bf16 %v970, %v968
        %v1015 = vperm.slane %v1005, 0
        %v1016 = vperm.slane %v1005, 1
        %v1051 = vunpack.c.l.b16 %v972
        %v1052 = vunpack.c.h.b16 %v972
        %v1053 = vunpack.c.l.b16 %v973
        %v1054 = vunpack.c.h.b16 %v973
        %v1055 = vunpack.c.l.b16 %v974
        %v1056 = vunpack.c.h.b16 %v974
        %v1057 = vunpack.c.l.b16 %v975
        %v1058 = vunpack.c.h.b16 %v975
        %v1059 = vunpack.c.l.b16 %v976
        %v1060 = vunpack.c.h.b16 %v976
        %v1061 = vunpack.c.l.b16 %v977
        %v1062 = vunpack.c.h.b16 %v977
        %v1063 = vunpack.c.l.b16 %v978
        %v1064 = vunpack.c.h.b16 %v978
        %v1065 = vunpack.c.l.b16 %v979
        %v1066 = vunpack.c.h.b16 %v979
        %v1067 = vunpack.c.l.b16 %v980
        %v1068 = vunpack.c.h.b16 %v980
        %v1069 = vunpack.c.l.b16 %v981
        %v1070 = vunpack.c.h.b16 %v981
        %v1071 = vunpack.c.l.b16 %v982
        %v1072 = vunpack.c.h.b16 %v982
        %v1073 = vunpack.c.l.b16 %v983
        %v1074 = vunpack.c.h.b16 %v983
        %v1075 = vunpack.c.l.b16 %v984
        %v1076 = vunpack.c.h.b16 %v984
        %v1077 = vunpack.c.l.b16 %v985
        %v1078 = vunpack.c.h.b16 %v985
        %v1079 = vunpack.c.l.b16 %v986
        %v1080 = vunpack.c.h.b16 %v986
        %v1081 = vunpack.c.l.b16 %v987
        %v1082 = vunpack.c.h.b16 %v987
        %v1083 = vunpack.c.l.b16 %v988
        %v1084 = vunpack.c.h.b16 %v988
        %v1085 = vunpack.c.l.b16 %v989
        %v1086 = vunpack.c.h.b16 %v989
        %v1087 = vunpack.c.l.b16 %v990
        %v1088 = vunpack.c.h.b16 %v990
        %v1089 = vunpack.c.l.b16 %v991
        %v1090 = vunpack.c.h.b16 %v991
        %v1091 = vunpack.c.l.b16 %v992
        %v1092 = vunpack.c.h.b16 %v992
        %v1093 = vunpack.c.l.b16 %v993
        %v1094 = vunpack.c.h.b16 %v993
        %v1095 = vunpack.c.l.b16 %v994
        %v1096 = vunpack.c.h.b16 %v994
        %v1097 = vunpack.c.l.b16 %v995
        %v1098 = vunpack.c.h.b16 %v995
        %v1099 = vunpack.c.l.b16 %v996
        %v1100 = vunpack.c.h.b16 %v996
        %v1101 = vunpack.c.l.b16 %v997
        %v1102 = vunpack.c.h.b16 %v997
        %v1103 = vunpack.c.l.b16 %v998
        %v1104 = vunpack.c.h.b16 %v998
        %v1105 = vunpack.c.l.b16 %v999
        %v1106 = vunpack.c.h.b16 %v999
        %v1107 = vunpack.c.l.b16 %v1000
        %v1108 = vunpack.c.h.b16 %v1000
        %v1109 = vunpack.c.l.b16 %v1001
        %v1110 = vunpack.c.h.b16 %v1001
        %v1111 = vunpack.c.l.b16 %v1002
        %v1112 = vunpack.c.h.b16 %v1002
        %v1113 = vunpack.c.l.b16 %v1003
        %v1114 = vunpack.c.h.b16 %v1003
        %v1115 = vpack.c.b16 %v1053, %v1051
        %v1116 = vpack.c.b16 %v1054, %v1052
        %v1117 = vpack.c.b16 %v1057, %v1055
        %v1118 = vpack.c.b16 %v1058, %v1056
        %v1119 = vpack.c.b16 %v1061, %v1059
        %v1120 = vpack.c.b16 %v1062, %v1060
        %v1121 = vpack.c.b16 %v1065, %v1063
        %v1122 = vpack.c.b16 %v1066, %v1064
        %v1123 = vpack.c.b16 %v1069, %v1067
        %v1124 = vpack.c.b16 %v1070, %v1068
        %v1125 = vpack.c.b16 %v1073, %v1071
        %v1126 = vpack.c.b16 %v1074, %v1072
        %v1127 = vpack.c.b16 %v1077, %v1075
        %v1128 = vpack.c.b16 %v1078, %v1076
        %v1129 = vpack.c.b16 %v1081, %v1079
        %v1130 = vpack.c.b16 %v1082, %v1080
        %v1131 = vpack.c.b16 %v1085, %v1083
        %v1132 = vpack.c.b16 %v1086, %v1084
        %v1133 = vpack.c.b16 %v1089, %v1087
        %v1134 = vpack.c.b16 %v1090, %v1088
        %v1135 = vpack.c.b16 %v1093, %v1091
        %v1136 = vpack.c.b16 %v1094, %v1092
        %v1137 = vpack.c.b16 %v1097, %v1095
        %v1138 = vpack.c.b16 %v1098, %v1096
        %v1139 = vpack.c.b16 %v1101, %v1099
        %v1140 = vpack.c.b16 %v1102, %v1100
        %v1141 = vpack.c.b16 %v1105, %v1103
        %v1142 = vpack.c.b16 %v1106, %v1104
        %v1143 = vpack.c.b16 %v1109, %v1107
        %v1144 = vpack.c.b16 %v1110, %v1108
        %v1145 = vpack.c.b16 %v1113, %v1111
        %v1146 = vpack.c.b16 %v1114, %v1112
        %1179 = vmatpush.bf16.msra.mxu0 %v1129
        %1180 = vmatpush.bf16.msra.mxu0 %v1127
        %1181 = vmatpush.bf16.msra.mxu0 %v1125
        %1182 = vmatpush.bf16.msra.mxu0 %v1123
        %1183 = vmatpush.bf16.msra.mxu0 %v1121
        %1184 = vmatpush.bf16.msra.mxu0 %v1119
        %1185 = vmatpush.bf16.msra.mxu0 %v1117
        %1186 = vmatpush.bf16.msra.mxu0 %v1115
        %1187 = vmatmul.bf16.gmra.mxu0 %v1006
        %v1188 = vpop.f32.mrf.mxu0
        %v1189 = vadd.f32 %v1015, %v1188
        %v1190 = vpop.f32.mrf.mxu0
        %v1191 = vadd.f32 %v1015, %v1190
        %1192 = vmatmul.bf16.gmra.mxu0 %v1008
        %v1193 = vpop.f32.mrf.mxu0
        %v1194 = vadd.f32 %v1015, %v1193
        %v1195 = vpop.f32.mrf.mxu0
        %v1196 = vadd.f32 %v1015, %v1195
        %1197 = vmatmul.bf16.gmra.mxu0 %v1010
        %v1198 = vpop.f32.mrf.mxu0
        %v1199 = vadd.f32 %v1015, %v1198
        %v1200 = vpop.f32.mrf.mxu0
        %v1201 = vadd.f32 %v1015, %v1200
        %1202 = vmatmul.bf16.gmra.mxu0 %v1012
        %v1203 = vpop.f32.mrf.mxu0
        %v1204 = vadd.f32 %v1015, %v1203
        %v1205 = vpop.f32.mrf.mxu0
        %v1206 = vadd.f32 %v1015, %v1205
        %1207 = vdwg.mxu0
        %1208 = vmatpush.bf16.msra.mxu0 %v1145
        %1209 = vmatpush.bf16.msra.mxu0 %v1143
        %1210 = vmatpush.bf16.msra.mxu0 %v1141
        %1211 = vmatpush.bf16.msra.mxu0 %v1139
        %1212 = vmatpush.bf16.msra.mxu0 %v1137
        %1213 = vmatpush.bf16.msra.mxu0 %v1135
        %1214 = vmatpush.bf16.msra.mxu0 %v1133
        %1215 = vmatpush.bf16.msra.mxu0 %v1131
        %1216 = vmatmul.bf16.gmra.mxu0 %v1007
        %v1217 = vpop.f32.mrf.mxu0
        %v1218 = vadd.f32 %v1189, %v1217
        %v1219 = vpop.f32.mrf.mxu0
        %v1220 = vadd.f32 %v1191, %v1219
        %1221 = vmatmul.bf16.gmra.mxu0 %v1009
        %v1222 = vpop.f32.mrf.mxu0
        %v1223 = vadd.f32 %v1194, %v1222
        %v1224 = vpop.f32.mrf.mxu0
        %v1225 = vadd.f32 %v1196, %v1224
        %1226 = vmatmul.bf16.gmra.mxu0 %v1011
        %v1227 = vpop.f32.mrf.mxu0
        %v1228 = vadd.f32 %v1199, %v1227
        %v1229 = vpop.f32.mrf.mxu0
        %v1230 = vadd.f32 %v1201, %v1229
        %1231 = vmatmul.bf16.gmra.mxu0 %v1013
        %v1232 = vpop.f32.mrf.mxu0
        %v1233 = vadd.f32 %v1204, %v1232
        %v1234 = vpop.f32.mrf.mxu0
        %v1235 = vadd.f32 %v1206, %v1234
        %1236 = vdwg.mxu0
        %1237 = vmatpush.bf16.msra.mxu0 %v1130
        %1238 = vmatpush.bf16.msra.mxu0 %v1128
        %1239 = vmatpush.bf16.msra.mxu0 %v1126
        %1240 = vmatpush.bf16.msra.mxu0 %v1124
        %1241 = vmatpush.bf16.msra.mxu0 %v1122
        %1242 = vmatpush.bf16.msra.mxu0 %v1120
        %1243 = vmatpush.bf16.msra.mxu0 %v1118
        %1244 = vmatpush.bf16.msra.mxu0 %v1116
        %1245 = vmatmul.bf16.gmra.mxu0 %v1006
        %v1246 = vpop.f32.mrf.mxu0
        %v1247 = vadd.f32 %v1016, %v1246
        %v1248 = vpop.f32.mrf.mxu0
        %v1249 = vadd.f32 %v1016, %v1248
        %1250 = vmatmul.bf16.gmra.mxu0 %v1008
        %v1251 = vpop.f32.mrf.mxu0
        %v1252 = vadd.f32 %v1016, %v1251
        %v1253 = vpop.f32.mrf.mxu0
        %v1254 = vadd.f32 %v1016, %v1253
        %1255 = vmatmul.bf16.gmra.mxu0 %v1010
        %v1256 = vpop.f32.mrf.mxu0
        %v1257 = vadd.f32 %v1016, %v1256
        %v1258 = vpop.f32.mrf.mxu0
        %v1259 = vadd.f32 %v1016, %v1258
        %1260 = vmatmul.bf16.gmra.mxu0 %v1012
        %v1261 = vpop.f32.mrf.mxu0
        %v1262 = vadd.f32 %v1016, %v1261
        %v1263 = vpop.f32.mrf.mxu0
        %v1264 = vadd.f32 %v1016, %v1263
        %1265 = vdwg.mxu0
        %1266 = vmatpush.bf16.msra.mxu0 %v1146
        %1267 = vmatpush.bf16.msra.mxu0 %v1144
        %1268 = vmatpush.bf16.msra.mxu0 %v1142
        %1269 = vmatpush.bf16.msra.mxu0 %v1140
        %1270 = vmatpush.bf16.msra.mxu0 %v1138
        %1271 = vmatpush.bf16.msra.mxu0 %v1136
        %1272 = vmatpush.bf16.msra.mxu0 %v1134
        %1273 = vmatpush.bf16.msra.mxu0 %v1132
        %1274 = vmatmul.bf16.gmra.mxu0 %v1007
        %v1275 = vpop.f32.mrf.mxu0
        %v1276 = vadd.f32 %v1247, %v1275
        %v1277 = vpop.f32.mrf.mxu0
        %v1278 = vadd.f32 %v1249, %v1277
        %1279 = vmatmul.bf16.gmra.mxu0 %v1009
        %v1280 = vpop.f32.mrf.mxu0
        %v1281 = vadd.f32 %v1252, %v1280
        %v1282 = vpop.f32.mrf.mxu0
        %v1283 = vadd.f32 %v1254, %v1282
        %1284 = vmatmul.bf16.gmra.mxu0 %v1011
        %v1285 = vpop.f32.mrf.mxu0
        %v1286 = vadd.f32 %v1257, %v1285
        %v1287 = vpop.f32.mrf.mxu0
        %v1288 = vadd.f32 %v1259, %v1287
        %1289 = vmatmul.bf16.gmra.mxu0 %v1013
        %v1290 = vpop.f32.mrf.mxu0
        %v1291 = vadd.f32 %v1262, %v1290
        %v1292 = vpop.f32.mrf.mxu0
        %v1293 = vadd.f32 %v1264, %v1292
        %1294 = vdwg.mxu0
        %vm1295 = vcmp.ge.f32.partialorder %v1218, 0.0
        %vm1296 = vcmp.ge.f32.partialorder %v1276, 0.0
        %vm1297 = vcmp.ge.f32.partialorder %v1220, 0.0
        %vm1298 = vcmp.ge.f32.partialorder %v1278, 0.0
        %vm1299 = vcmp.ge.f32.partialorder %v1223, 0.0
        %vm1300 = vcmp.ge.f32.partialorder %v1281, 0.0
        %vm1301 = vcmp.ge.f32.partialorder %v1225, 0.0
        %vm1302 = vcmp.ge.f32.partialorder %v1283, 0.0
        %vm1303 = vcmp.ge.f32.partialorder %v1228, 0.0
        %vm1304 = vcmp.ge.f32.partialorder %v1286, 0.0
        %vm1305 = vcmp.ge.f32.partialorder %v1230, 0.0
        %vm1306 = vcmp.ge.f32.partialorder %v1288, 0.0
        %vm1307 = vcmp.ge.f32.partialorder %v1233, 0.0
        %vm1308 = vcmp.ge.f32.partialorder %v1291, 0.0
        %vm1309 = vcmp.ge.f32.partialorder %v1235, 0.0
        %vm1310 = vcmp.ge.f32.partialorder %v1293, 0.0
        %v1311 = vmul.f32 %v1218, 0.01
        %v1312 = vmul.f32 %v1276, 0.01
        %v1313 = vmul.f32 %v1220, 0.01
        %v1314 = vmul.f32 %v1278, 0.01
        %v1315 = vmul.f32 %v1223, 0.01
        %v1316 = vmul.f32 %v1281, 0.01
        %v1317 = vmul.f32 %v1225, 0.01
        %v1318 = vmul.f32 %v1283, 0.01
        %v1319 = vmul.f32 %v1228, 0.01
        %v1320 = vmul.f32 %v1286, 0.01
        %v1321 = vmul.f32 %v1230, 0.01
        %v1322 = vmul.f32 %v1288, 0.01
        %v1323 = vmul.f32 %v1233, 0.01
        %v1324 = vmul.f32 %v1291, 0.01
        %v1325 = vmul.f32 %v1235, 0.01
        %v1326 = vmul.f32 %v1293, 0.01
        %v1327 = vsel %vm1295, %v1218, %v1311
        %v1328 = vsel %vm1296, %v1276, %v1312
        %v1329 = vsel %vm1297, %v1220, %v1313
        %v1330 = vsel %vm1298, %v1278, %v1314
        %v1331 = vsel %vm1299, %v1223, %v1315
        %v1332 = vsel %vm1300, %v1281, %v1316
        %v1333 = vsel %vm1301, %v1225, %v1317
        %v1334 = vsel %vm1302, %v1283, %v1318
        %v1335 = vsel %vm1303, %v1228, %v1319
        %v1336 = vsel %vm1304, %v1286, %v1320
        %v1337 = vsel %vm1305, %v1230, %v1321
        %v1338 = vsel %vm1306, %v1288, %v1322
        %v1339 = vsel %vm1307, %v1233, %v1323
        %v1340 = vsel %vm1308, %v1291, %v1324
        %v1341 = vsel %vm1309, %v1235, %v1325
        %v1342 = vsel %vm1310, %v1293, %v1326
        %s1343 = scalar_lea.vmem [#allocation2], 768
        %v1344 = vld [vmem:[%s1343] sm:$0xff]
        %v1345 = vld [vmem:[%s1343 + $0x8] sm:$0xff]
        %v1346 = vld [vmem:[%s1343 + $0x10] sm:$0xff]
        %v1347 = vld [vmem:[%s1343 + $0x18] sm:$0xff]
        %v1348 = vld [vmem:[%s1343 + $0x20] sm:$0xff]
        %v1349 = vld [vmem:[%s1343 + $0x28] sm:$0xff]
        %v1350 = vld [vmem:[%s1343 + $0x30] sm:$0xff]
        %v1351 = vld [vmem:[%s1343 + $0x38] sm:$0xff]
        %v1352 = vld [vmem:[%s1343 + $0x40] sm:$0xff]
        %v1353 = vld [vmem:[%s1343 + $0x48] sm:$0xff]
        %v1354 = vld [vmem:[%s1343 + $0x50] sm:$0xff]
        %v1355 = vld [vmem:[%s1343 + $0x58] sm:$0xff]
        %v1356 = vld [vmem:[%s1343 + $0x60] sm:$0xff]
        %v1357 = vld [vmem:[%s1343 + $0x68] sm:$0xff]
        %v1358 = vld [vmem:[%s1343 + $0x70] sm:$0xff]
        %v1359 = vld [vmem:[%s1343 + $0x78] sm:$0xff]
        %v1360 = vld [vmem:[%s1343 + $0x80] sm:$0xff]
        %v1361 = vld [vmem:[%s1343 + $0x88] sm:$0xff]
        %v1362 = vld [vmem:[%s1343 + $0x90] sm:$0xff]
        %v1363 = vld [vmem:[%s1343 + $0x98] sm:$0xff]
        %v1364 = vld [vmem:[%s1343 + $0xa0] sm:$0xff]
        %v1365 = vld [vmem:[%s1343 + $0xa8] sm:$0xff]
        %v1366 = vld [vmem:[%s1343 + $0xb0] sm:$0xff]
        %v1367 = vld [vmem:[%s1343 + $0xb8] sm:$0xff]
        %v1368 = vld [vmem:[%s1343 + $0xc0] sm:$0xff]
        %v1369 = vld [vmem:[%s1343 + $0xc8] sm:$0xff]
        %v1370 = vld [vmem:[%s1343 + $0xd0] sm:$0xff]
        %v1371 = vld [vmem:[%s1343 + $0xd8] sm:$0xff]
        %v1372 = vld [vmem:[%s1343 + $0xe0] sm:$0xff]
        %v1373 = vld [vmem:[%s1343 + $0xe8] sm:$0xff]
        %v1374 = vld [vmem:[%s1343 + $0xf0] sm:$0xff]
        %v1375 = vld [vmem:[%s1343 + $0xf8] sm:$0xff]
        %s1376 = scalar_lea.vmem [#allocation4], 3
        %v1377 = vld [vmem:[%s1376] ss:$8 sm:$0x3]
        %v1378 = vpack.c.bf16 %v1329, %v1327
        %v1379 = vpack.c.bf16 %v1330, %v1328
        %v1380 = vpack.c.bf16 %v1333, %v1331
        %v1381 = vpack.c.bf16 %v1334, %v1332
        %v1382 = vpack.c.bf16 %v1337, %v1335
        %v1383 = vpack.c.bf16 %v1338, %v1336
        %v1384 = vpack.c.bf16 %v1341, %v1339
        %v1385 = vpack.c.bf16 %v1342, %v1340
        %v1387 = vperm.slane %v1377, 0
        %v1388 = vperm.slane %v1377, 1
        %v1423 = vunpack.c.l.b16 %v1344
        %v1424 = vunpack.c.h.b16 %v1344
        %v1425 = vunpack.c.l.b16 %v1345
        %v1426 = vunpack.c.h.b16 %v1345
        %v1427 = vunpack.c.l.b16 %v1346
        %v1428 = vunpack.c.h.b16 %v1346
        %v1429 = vunpack.c.l.b16 %v1347
        %v1430 = vunpack.c.h.b16 %v1347
        %v1431 = vunpack.c.l.b16 %v1348
        %v1432 = vunpack.c.h.b16 %v1348
        %v1433 = vunpack.c.l.b16 %v1349
        %v1434 = vunpack.c.h.b16 %v1349
        %v1435 = vunpack.c.l.b16 %v1350
        %v1436 = vunpack.c.h.b16 %v1350
        %v1437 = vunpack.c.l.b16 %v1351
        %v1438 = vunpack.c.h.b16 %v1351
        %v1439 = vunpack.c.l.b16 %v1352
        %v1440 = vunpack.c.h.b16 %v1352
        %v1441 = vunpack.c.l.b16 %v1353
        %v1442 = vunpack.c.h.b16 %v1353
        %v1443 = vunpack.c.l.b16 %v1354
        %v1444 = vunpack.c.h.b16 %v1354
        %v1445 = vunpack.c.l.b16 %v1355
        %v1446 = vunpack.c.h.b16 %v1355
        %v1447 = vunpack.c.l.b16 %v1356
        %v1448 = vunpack.c.h.b16 %v1356
        %v1449 = vunpack.c.l.b16 %v1357
        %v1450 = vunpack.c.h.b16 %v1357
        %v1451 = vunpack.c.l.b16 %v1358
        %v1452 = vunpack.c.h.b16 %v1358
        %v1453 = vunpack.c.l.b16 %v1359
        %v1454 = vunpack.c.h.b16 %v1359
        %v1455 = vunpack.c.l.b16 %v1360
        %v1456 = vunpack.c.h.b16 %v1360
        %v1457 = vunpack.c.l.b16 %v1361
        %v1458 = vunpack.c.h.b16 %v1361
        %v1459 = vunpack.c.l.b16 %v1362
        %v1460 = vunpack.c.h.b16 %v1362
        %v1461 = vunpack.c.l.b16 %v1363
        %v1462 = vunpack.c.h.b16 %v1363
        %v1463 = vunpack.c.l.b16 %v1364
        %v1464 = vunpack.c.h.b16 %v1364
        %v1465 = vunpack.c.l.b16 %v1365
        %v1466 = vunpack.c.h.b16 %v1365
        %v1467 = vunpack.c.l.b16 %v1366
        %v1468 = vunpack.c.h.b16 %v1366
        %v1469 = vunpack.c.l.b16 %v1367
        %v1470 = vunpack.c.h.b16 %v1367
        %v1471 = vunpack.c.l.b16 %v1368
        %v1472 = vunpack.c.h.b16 %v1368
        %v1473 = vunpack.c.l.b16 %v1369
        %v1474 = vunpack.c.h.b16 %v1369
        %v1475 = vunpack.c.l.b16 %v1370
        %v1476 = vunpack.c.h.b16 %v1370
        %v1477 = vunpack.c.l.b16 %v1371
        %v1478 = vunpack.c.h.b16 %v1371
        %v1479 = vunpack.c.l.b16 %v1372
        %v1480 = vunpack.c.h.b16 %v1372
        %v1481 = vunpack.c.l.b16 %v1373
        %v1482 = vunpack.c.h.b16 %v1373
        %v1483 = vunpack.c.l.b16 %v1374
        %v1484 = vunpack.c.h.b16 %v1374
        %v1485 = vunpack.c.l.b16 %v1375
        %v1486 = vunpack.c.h.b16 %v1375
        %v1487 = vpack.c.b16 %v1425, %v1423
        %v1488 = vpack.c.b16 %v1426, %v1424
        %v1489 = vpack.c.b16 %v1429, %v1427
        %v1490 = vpack.c.b16 %v1430, %v1428
        %v1491 = vpack.c.b16 %v1433, %v1431
        %v1492 = vpack.c.b16 %v1434, %v1432
        %v1493 = vpack.c.b16 %v1437, %v1435
        %v1494 = vpack.c.b16 %v1438, %v1436
        %v1495 = vpack.c.b16 %v1441, %v1439
        %v1496 = vpack.c.b16 %v1442, %v1440
        %v1497 = vpack.c.b16 %v1445, %v1443
        %v1498 = vpack.c.b16 %v1446, %v1444
        %v1499 = vpack.c.b16 %v1449, %v1447
        %v1500 = vpack.c.b16 %v1450, %v1448
        %v1501 = vpack.c.b16 %v1453, %v1451
        %v1502 = vpack.c.b16 %v1454, %v1452
        %v1503 = vpack.c.b16 %v1457, %v1455
        %v1504 = vpack.c.b16 %v1458, %v1456
        %v1505 = vpack.c.b16 %v1461, %v1459
        %v1506 = vpack.c.b16 %v1462, %v1460
        %v1507 = vpack.c.b16 %v1465, %v1463
        %v1508 = vpack.c.b16 %v1466, %v1464
        %v1509 = vpack.c.b16 %v1469, %v1467
        %v1510 = vpack.c.b16 %v1470, %v1468
        %v1511 = vpack.c.b16 %v1473, %v1471
        %v1512 = vpack.c.b16 %v1474, %v1472
        %v1513 = vpack.c.b16 %v1477, %v1475
        %v1514 = vpack.c.b16 %v1478, %v1476
        %v1515 = vpack.c.b16 %v1481, %v1479
        %v1516 = vpack.c.b16 %v1482, %v1480
        %v1517 = vpack.c.b16 %v1485, %v1483
        %v1518 = vpack.c.b16 %v1486, %v1484
        %1551 = vmatpush.bf16.msra.mxu0 %v1501
        %1552 = vmatpush.bf16.msra.mxu0 %v1499
        %1553 = vmatpush.bf16.msra.mxu0 %v1497
        %1554 = vmatpush.bf16.msra.mxu0 %v1495
        %1555 = vmatpush.bf16.msra.mxu0 %v1493
        %1556 = vmatpush.bf16.msra.mxu0 %v1491
        %1557 = vmatpush.bf16.msra.mxu0 %v1489
        %1558 = vmatpush.bf16.msra.mxu0 %v1487
        %1559 = vmatmul.bf16.gmra.mxu0 %v1378
        %v1560 = vpop.f32.mrf.mxu0
        %v1561 = vadd.f32 %v1387, %v1560
        %v1562 = vpop.f32.mrf.mxu0
        %v1563 = vadd.f32 %v1387, %v1562
        %1564 = vmatmul.bf16.gmra.mxu0 %v1380
        %v1565 = vpop.f32.mrf.mxu0
        %v1566 = vadd.f32 %v1387, %v1565
        %v1567 = vpop.f32.mrf.mxu0
        %v1568 = vadd.f32 %v1387, %v1567
        %1569 = vmatmul.bf16.gmra.mxu0 %v1382
        %v1570 = vpop.f32.mrf.mxu0
        %v1571 = vadd.f32 %v1387, %v1570
        %v1572 = vpop.f32.mrf.mxu0
        %v1573 = vadd.f32 %v1387, %v1572
        %1574 = vmatmul.bf16.gmra.mxu0 %v1384
        %v1575 = vpop.f32.mrf.mxu0
        %v1576 = vadd.f32 %v1387, %v1575
        %v1577 = vpop.f32.mrf.mxu0
        %v1578 = vadd.f32 %v1387, %v1577
        %1579 = vdwg.mxu0
        %1580 = vmatpush.bf16.msra.mxu0 %v1517
        %1581 = vmatpush.bf16.msra.mxu0 %v1515
        %1582 = vmatpush.bf16.msra.mxu0 %v1513
        %1583 = vmatpush.bf16.msra.mxu0 %v1511
        %1584 = vmatpush.bf16.msra.mxu0 %v1509
        %1585 = vmatpush.bf16.msra.mxu0 %v1507
        %1586 = vmatpush.bf16.msra.mxu0 %v1505
        %1587 = vmatpush.bf16.msra.mxu0 %v1503
        %1588 = vmatmul.bf16.gmra.mxu0 %v1379
        %v1589 = vpop.f32.mrf.mxu0
        %v1590 = vadd.f32 %v1561, %v1589
        %v1591 = vpop.f32.mrf.mxu0
        %v1592 = vadd.f32 %v1563, %v1591
        %1593 = vmatmul.bf16.gmra.mxu0 %v1381
        %v1594 = vpop.f32.mrf.mxu0
        %v1595 = vadd.f32 %v1566, %v1594
        %v1596 = vpop.f32.mrf.mxu0
        %v1597 = vadd.f32 %v1568, %v1596
        %1598 = vmatmul.bf16.gmra.mxu0 %v1383
        %v1599 = vpop.f32.mrf.mxu0
        %v1600 = vadd.f32 %v1571, %v1599
        %v1601 = vpop.f32.mrf.mxu0
        %v1602 = vadd.f32 %v1573, %v1601
        %1603 = vmatmul.bf16.gmra.mxu0 %v1385
        %v1604 = vpop.f32.mrf.mxu0
        %v1605 = vadd.f32 %v1576, %v1604
        %v1606 = vpop.f32.mrf.mxu0
        %v1607 = vadd.f32 %v1578, %v1606
        %1608 = vdwg.mxu0
        %1609 = vmatpush.bf16.msra.mxu0 %v1502
        %1610 = vmatpush.bf16.msra.mxu0 %v1500
        %1611 = vmatpush.bf16.msra.mxu0 %v1498
        %1612 = vmatpush.bf16.msra.mxu0 %v1496
        %1613 = vmatpush.bf16.msra.mxu0 %v1494
        %1614 = vmatpush.bf16.msra.mxu0 %v1492
        %1615 = vmatpush.bf16.msra.mxu0 %v1490
        %1616 = vmatpush.bf16.msra.mxu0 %v1488
        %1617 = vmatmul.bf16.gmra.mxu0 %v1378
        %v1618 = vpop.f32.mrf.mxu0
        %v1619 = vadd.f32 %v1388, %v1618
        %v1620 = vpop.f32.mrf.mxu0
        %v1621 = vadd.f32 %v1388, %v1620
        %1622 = vmatmul.bf16.gmra.mxu0 %v1380
        %v1623 = vpop.f32.mrf.mxu0
        %v1624 = vadd.f32 %v1388, %v1623
        %v1625 = vpop.f32.mrf.mxu0
        %v1626 = vadd.f32 %v1388, %v1625
        %1627 = vmatmul.bf16.gmra.mxu0 %v1382
        %v1628 = vpop.f32.mrf.mxu0
        %v1629 = vadd.f32 %v1388, %v1628
        %v1630 = vpop.f32.mrf.mxu0
        %v1631 = vadd.f32 %v1388, %v1630
        %1632 = vmatmul.bf16.gmra.mxu0 %v1384
        %v1633 = vpop.f32.mrf.mxu0
        %v1634 = vadd.f32 %v1388, %v1633
        %v1635 = vpop.f32.mrf.mxu0
        %v1636 = vadd.f32 %v1388, %v1635
        %1637 = vdwg.mxu0
        %1638 = vmatpush.bf16.msra.mxu0 %v1518
        %1639 = vmatpush.bf16.msra.mxu0 %v1516
        %1640 = vmatpush.bf16.msra.mxu0 %v1514
        %1641 = vmatpush.bf16.msra.mxu0 %v1512
        %1642 = vmatpush.bf16.msra.mxu0 %v1510
        %1643 = vmatpush.bf16.msra.mxu0 %v1508
        %1644 = vmatpush.bf16.msra.mxu0 %v1506
        %1645 = vmatpush.bf16.msra.mxu0 %v1504
        %1646 = vmatmul.bf16.gmra.mxu0 %v1379
        %v1647 = vpop.f32.mrf.mxu0
        %v1648 = vadd.f32 %v1619, %v1647
        %v1649 = vpop.f32.mrf.mxu0
        %v1650 = vadd.f32 %v1621, %v1649
        %1651 = vmatmul.bf16.gmra.mxu0 %v1381
        %v1652 = vpop.f32.mrf.mxu0
        %v1653 = vadd.f32 %v1624, %v1652
        %v1654 = vpop.f32.mrf.mxu0
        %v1655 = vadd.f32 %v1626, %v1654
        %1656 = vmatmul.bf16.gmra.mxu0 %v1383
        %v1657 = vpop.f32.mrf.mxu0
        %v1658 = vadd.f32 %v1629, %v1657
        %v1659 = vpop.f32.mrf.mxu0
        %v1660 = vadd.f32 %v1631, %v1659
        %1661 = vmatmul.bf16.gmra.mxu0 %v1385
        %v1662 = vpop.f32.mrf.mxu0
        %v1663 = vadd.f32 %v1634, %v1662
        %v1664 = vpop.f32.mrf.mxu0
        %v1665 = vadd.f32 %v1636, %v1664
        %1666 = vdwg.mxu0
        %vm1667 = vcmp.ge.f32.partialorder %v1590, 0.0
        %vm1668 = vcmp.ge.f32.partialorder %v1648, 0.0
        %vm1669 = vcmp.ge.f32.partialorder %v1592, 0.0
        %vm1670 = vcmp.ge.f32.partialorder %v1650, 0.0
        %vm1671 = vcmp.ge.f32.partialorder %v1595, 0.0
        %vm1672 = vcmp.ge.f32.partialorder %v1653, 0.0
        %vm1673 = vcmp.ge.f32.partialorder %v1597, 0.0
        %vm1674 = vcmp.ge.f32.partialorder %v1655, 0.0
        %vm1675 = vcmp.ge.f32.partialorder %v1600, 0.0
        %vm1676 = vcmp.ge.f32.partialorder %v1658, 0.0
        %vm1677 = vcmp.ge.f32.partialorder %v1602, 0.0
        %vm1678 = vcmp.ge.f32.partialorder %v1660, 0.0
        %vm1679 = vcmp.ge.f32.partialorder %v1605, 0.0
        %vm1680 = vcmp.ge.f32.partialorder %v1663, 0.0
        %vm1681 = vcmp.ge.f32.partialorder %v1607, 0.0
        %vm1682 = vcmp.ge.f32.partialorder %v1665, 0.0
        %v1683 = vmul.f32 %v1590, 0.01
        %v1684 = vmul.f32 %v1648, 0.01
        %v1685 = vmul.f32 %v1592, 0.01
        %v1686 = vmul.f32 %v1650, 0.01
        %v1687 = vmul.f32 %v1595, 0.01
        %v1688 = vmul.f32 %v1653, 0.01
        %v1689 = vmul.f32 %v1597, 0.01
        %v1690 = vmul.f32 %v1655, 0.01
        %v1691 = vmul.f32 %v1600, 0.01
        %v1692 = vmul.f32 %v1658, 0.01
        %v1693 = vmul.f32 %v1602, 0.01
        %v1694 = vmul.f32 %v1660, 0.01
        %v1695 = vmul.f32 %v1605, 0.01
        %v1696 = vmul.f32 %v1663, 0.01
        %v1697 = vmul.f32 %v1607, 0.01
        %v1698 = vmul.f32 %v1665, 0.01
        %v1699 = vsel %vm1667, %v1590, %v1683
        %v1700 = vsel %vm1668, %v1648, %v1684
        %v1701 = vsel %vm1669, %v1592, %v1685
        %v1702 = vsel %vm1670, %v1650, %v1686
        %v1703 = vsel %vm1671, %v1595, %v1687
        %v1704 = vsel %vm1672, %v1653, %v1688
        %v1705 = vsel %vm1673, %v1597, %v1689
        %v1706 = vsel %vm1674, %v1655, %v1690
        %v1707 = vsel %vm1675, %v1600, %v1691
        %v1708 = vsel %vm1676, %v1658, %v1692
        %v1709 = vsel %vm1677, %v1602, %v1693
        %v1710 = vsel %vm1678, %v1660, %v1694
        %v1711 = vsel %vm1679, %v1605, %v1695
        %v1712 = vsel %vm1680, %v1663, %v1696
        %v1713 = vsel %vm1681, %v1607, %v1697
        %v1714 = vsel %vm1682, %v1665, %v1698
        %s1715 = scalar_lea.vmem [#allocation2], 1024
        %v1716 = vld [vmem:[%s1715] sm:$0xff]
        %v1717 = vld [vmem:[%s1715 + $0x8] sm:$0xff]
        %v1718 = vld [vmem:[%s1715 + $0x10] sm:$0xff]
        %v1719 = vld [vmem:[%s1715 + $0x18] sm:$0xff]
        %v1720 = vld [vmem:[%s1715 + $0x20] sm:$0xff]
        %v1721 = vld [vmem:[%s1715 + $0x28] sm:$0xff]
        %v1722 = vld [vmem:[%s1715 + $0x30] sm:$0xff]
        %v1723 = vld [vmem:[%s1715 + $0x38] sm:$0xff]
        %v1724 = vld [vmem:[%s1715 + $0x40] sm:$0xff]
        %v1725 = vld [vmem:[%s1715 + $0x48] sm:$0xff]
        %v1726 = vld [vmem:[%s1715 + $0x50] sm:$0xff]
        %v1727 = vld [vmem:[%s1715 + $0x58] sm:$0xff]
        %v1728 = vld [vmem:[%s1715 + $0x60] sm:$0xff]
        %v1729 = vld [vmem:[%s1715 + $0x68] sm:$0xff]
        %v1730 = vld [vmem:[%s1715 + $0x70] sm:$0xff]
        %v1731 = vld [vmem:[%s1715 + $0x78] sm:$0xff]
        %v1732 = vld [vmem:[%s1715 + $0x80] sm:$0xff]
        %v1733 = vld [vmem:[%s1715 + $0x88] sm:$0xff]
        %v1734 = vld [vmem:[%s1715 + $0x90] sm:$0xff]
        %v1735 = vld [vmem:[%s1715 + $0x98] sm:$0xff]
        %v1736 = vld [vmem:[%s1715 + $0xa0] sm:$0xff]
        %v1737 = vld [vmem:[%s1715 + $0xa8] sm:$0xff]
        %v1738 = vld [vmem:[%s1715 + $0xb0] sm:$0xff]
        %v1739 = vld [vmem:[%s1715 + $0xb8] sm:$0xff]
        %v1740 = vld [vmem:[%s1715 + $0xc0] sm:$0xff]
        %v1741 = vld [vmem:[%s1715 + $0xc8] sm:$0xff]
        %v1742 = vld [vmem:[%s1715 + $0xd0] sm:$0xff]
        %v1743 = vld [vmem:[%s1715 + $0xd8] sm:$0xff]
        %v1744 = vld [vmem:[%s1715 + $0xe0] sm:$0xff]
        %v1745 = vld [vmem:[%s1715 + $0xe8] sm:$0xff]
        %v1746 = vld [vmem:[%s1715 + $0xf0] sm:$0xff]
        %v1747 = vld [vmem:[%s1715 + $0xf8] sm:$0xff]
        %s1748 = scalar_lea.vmem [#allocation4], 4
        %v1749 = vld [vmem:[%s1748] ss:$8 sm:$0x3]
        %v1750 = vpack.c.bf16 %v1701, %v1699
        %v1751 = vpack.c.bf16 %v1702, %v1700
        %v1752 = vpack.c.bf16 %v1705, %v1703
        %v1753 = vpack.c.bf16 %v1706, %v1704
        %v1754 = vpack.c.bf16 %v1709, %v1707
        %v1755 = vpack.c.bf16 %v1710, %v1708
        %v1756 = vpack.c.bf16 %v1713, %v1711
        %v1757 = vpack.c.bf16 %v1714, %v1712
        %v1759 = vperm.slane %v1749, 0
        %v1760 = vperm.slane %v1749, 1
        %v1795 = vunpack.c.l.b16 %v1716
        %v1796 = vunpack.c.h.b16 %v1716
        %v1797 = vunpack.c.l.b16 %v1717
        %v1798 = vunpack.c.h.b16 %v1717
        %v1799 = vunpack.c.l.b16 %v1718
        %v1800 = vunpack.c.h.b16 %v1718
        %v1801 = vunpack.c.l.b16 %v1719
        %v1802 = vunpack.c.h.b16 %v1719
        %v1803 = vunpack.c.l.b16 %v1720
        %v1804 = vunpack.c.h.b16 %v1720
        %v1805 = vunpack.c.l.b16 %v1721
        %v1806 = vunpack.c.h.b16 %v1721
        %v1807 = vunpack.c.l.b16 %v1722
        %v1808 = vunpack.c.h.b16 %v1722
        %v1809 = vunpack.c.l.b16 %v1723
        %v1810 = vunpack.c.h.b16 %v1723
        %v1811 = vunpack.c.l.b16 %v1724
        %v1812 = vunpack.c.h.b16 %v1724
        %v1813 = vunpack.c.l.b16 %v1725
        %v1814 = vunpack.c.h.b16 %v1725
        %v1815 = vunpack.c.l.b16 %v1726
        %v1816 = vunpack.c.h.b16 %v1726
        %v1817 = vunpack.c.l.b16 %v1727
        %v1818 = vunpack.c.h.b16 %v1727
        %v1819 = vunpack.c.l.b16 %v1728
        %v1820 = vunpack.c.h.b16 %v1728
        %v1821 = vunpack.c.l.b16 %v1729
        %v1822 = vunpack.c.h.b16 %v1729
        %v1823 = vunpack.c.l.b16 %v1730
        %v1824 = vunpack.c.h.b16 %v1730
        %v1825 = vunpack.c.l.b16 %v1731
        %v1826 = vunpack.c.h.b16 %v1731
        %v1827 = vunpack.c.l.b16 %v1732
        %v1828 = vunpack.c.h.b16 %v1732
        %v1829 = vunpack.c.l.b16 %v1733
        %v1830 = vunpack.c.h.b16 %v1733
        %v1831 = vunpack.c.l.b16 %v1734
        %v1832 = vunpack.c.h.b16 %v1734
        %v1833 = vunpack.c.l.b16 %v1735
        %v1834 = vunpack.c.h.b16 %v1735
        %v1835 = vunpack.c.l.b16 %v1736
        %v1836 = vunpack.c.h.b16 %v1736
        %v1837 = vunpack.c.l.b16 %v1737
        %v1838 = vunpack.c.h.b16 %v1737
        %v1839 = vunpack.c.l.b16 %v1738
        %v1840 = vunpack.c.h.b16 %v1738
        %v1841 = vunpack.c.l.b16 %v1739
        %v1842 = vunpack.c.h.b16 %v1739
        %v1843 = vunpack.c.l.b16 %v1740
        %v1844 = vunpack.c.h.b16 %v1740
        %v1845 = vunpack.c.l.b16 %v1741
        %v1846 = vunpack.c.h.b16 %v1741
        %v1847 = vunpack.c.l.b16 %v1742
        %v1848 = vunpack.c.h.b16 %v1742
        %v1849 = vunpack.c.l.b16 %v1743
        %v1850 = vunpack.c.h.b16 %v1743
        %v1851 = vunpack.c.l.b16 %v1744
        %v1852 = vunpack.c.h.b16 %v1744
        %v1853 = vunpack.c.l.b16 %v1745
        %v1854 = vunpack.c.h.b16 %v1745
        %v1855 = vunpack.c.l.b16 %v1746
        %v1856 = vunpack.c.h.b16 %v1746
        %v1857 = vunpack.c.l.b16 %v1747
        %v1858 = vunpack.c.h.b16 %v1747
        %v1859 = vpack.c.b16 %v1797, %v1795
        %v1860 = vpack.c.b16 %v1798, %v1796
        %v1861 = vpack.c.b16 %v1801, %v1799
        %v1862 = vpack.c.b16 %v1802, %v1800
        %v1863 = vpack.c.b16 %v1805, %v1803
        %v1864 = vpack.c.b16 %v1806, %v1804
        %v1865 = vpack.c.b16 %v1809, %v1807
        %v1866 = vpack.c.b16 %v1810, %v1808
        %v1867 = vpack.c.b16 %v1813, %v1811
        %v1868 = vpack.c.b16 %v1814, %v1812
        %v1869 = vpack.c.b16 %v1817, %v1815
        %v1870 = vpack.c.b16 %v1818, %v1816
        %v1871 = vpack.c.b16 %v1821, %v1819
        %v1872 = vpack.c.b16 %v1822, %v1820
        %v1873 = vpack.c.b16 %v1825, %v1823
        %v1874 = vpack.c.b16 %v1826, %v1824
        %v1875 = vpack.c.b16 %v1829, %v1827
        %v1876 = vpack.c.b16 %v1830, %v1828
        %v1877 = vpack.c.b16 %v1833, %v1831
        %v1878 = vpack.c.b16 %v1834, %v1832
        %v1879 = vpack.c.b16 %v1837, %v1835
        %v1880 = vpack.c.b16 %v1838, %v1836
        %v1881 = vpack.c.b16 %v1841, %v1839
        %v1882 = vpack.c.b16 %v1842, %v1840
        %v1883 = vpack.c.b16 %v1845, %v1843
        %v1884 = vpack.c.b16 %v1846, %v1844
        %v1885 = vpack.c.b16 %v1849, %v1847
        %v1886 = vpack.c.b16 %v1850, %v1848
        %v1887 = vpack.c.b16 %v1853, %v1851
        %v1888 = vpack.c.b16 %v1854, %v1852
        %v1889 = vpack.c.b16 %v1857, %v1855
        %v1890 = vpack.c.b16 %v1858, %v1856
        %1923 = vmatpush.bf16.msra.mxu0 %v1873
        %1924 = vmatpush.bf16.msra.mxu0 %v1871
        %1925 = vmatpush.bf16.msra.mxu0 %v1869
        %1926 = vmatpush.bf16.msra.mxu0 %v1867
        %1927 = vmatpush.bf16.msra.mxu0 %v1865
        %1928 = vmatpush.bf16.msra.mxu0 %v1863
        %1929 = vmatpush.bf16.msra.mxu0 %v1861
        %1930 = vmatpush.bf16.msra.mxu0 %v1859
        %1931 = vmatmul.bf16.gmra.mxu0 %v1750
        %v1932 = vpop.f32.mrf.mxu0
        %v1933 = vadd.f32 %v1759, %v1932
        %v1934 = vpop.f32.mrf.mxu0
        %v1935 = vadd.f32 %v1759, %v1934
        %1936 = vmatmul.bf16.gmra.mxu0 %v1752
        %v1937 = vpop.f32.mrf.mxu0
        %v1938 = vadd.f32 %v1759, %v1937
        %v1939 = vpop.f32.mrf.mxu0
        %v1940 = vadd.f32 %v1759, %v1939
        %1941 = vmatmul.bf16.gmra.mxu0 %v1754
        %v1942 = vpop.f32.mrf.mxu0
        %v1943 = vadd.f32 %v1759, %v1942
        %v1944 = vpop.f32.mrf.mxu0
        %v1945 = vadd.f32 %v1759, %v1944
        %1946 = vmatmul.bf16.gmra.mxu0 %v1756
        %v1947 = vpop.f32.mrf.mxu0
        %v1948 = vadd.f32 %v1759, %v1947
        %v1949 = vpop.f32.mrf.mxu0
        %v1950 = vadd.f32 %v1759, %v1949
        %1951 = vdwg.mxu0
        %1952 = vmatpush.bf16.msra.mxu0 %v1889
        %1953 = vmatpush.bf16.msra.mxu0 %v1887
        %1954 = vmatpush.bf16.msra.mxu0 %v1885
        %1955 = vmatpush.bf16.msra.mxu0 %v1883
        %1956 = vmatpush.bf16.msra.mxu0 %v1881
        %1957 = vmatpush.bf16.msra.mxu0 %v1879
        %1958 = vmatpush.bf16.msra.mxu0 %v1877
        %1959 = vmatpush.bf16.msra.mxu0 %v1875
        %1960 = vmatmul.bf16.gmra.mxu0 %v1751
        %v1961 = vpop.f32.mrf.mxu0
        %v1962 = vadd.f32 %v1933, %v1961
        %v1963 = vpop.f32.mrf.mxu0
        %v1964 = vadd.f32 %v1935, %v1963
        %1965 = vmatmul.bf16.gmra.mxu0 %v1753
        %v1966 = vpop.f32.mrf.mxu0
        %v1967 = vadd.f32 %v1938, %v1966
        %v1968 = vpop.f32.mrf.mxu0
        %v1969 = vadd.f32 %v1940, %v1968
        %1970 = vmatmul.bf16.gmra.mxu0 %v1755
        %v1971 = vpop.f32.mrf.mxu0
        %v1972 = vadd.f32 %v1943, %v1971
        %v1973 = vpop.f32.mrf.mxu0
        %v1974 = vadd.f32 %v1945, %v1973
        %1975 = vmatmul.bf16.gmra.mxu0 %v1757
        %v1976 = vpop.f32.mrf.mxu0
        %v1977 = vadd.f32 %v1948, %v1976
        %v1978 = vpop.f32.mrf.mxu0
        %v1979 = vadd.f32 %v1950, %v1978
        %1980 = vdwg.mxu0
        %1981 = vmatpush.bf16.msra.mxu0 %v1874
        %1982 = vmatpush.bf16.msra.mxu0 %v1872
        %1983 = vmatpush.bf16.msra.mxu0 %v1870
        %1984 = vmatpush.bf16.msra.mxu0 %v1868
        %1985 = vmatpush.bf16.msra.mxu0 %v1866
        %1986 = vmatpush.bf16.msra.mxu0 %v1864
        %1987 = vmatpush.bf16.msra.mxu0 %v1862
        %1988 = vmatpush.bf16.msra.mxu0 %v1860
        %1989 = vmatmul.bf16.gmra.mxu0 %v1750
        %v1990 = vpop.f32.mrf.mxu0
        %v1991 = vadd.f32 %v1760, %v1990
        %v1992 = vpop.f32.mrf.mxu0
        %v1993 = vadd.f32 %v1760, %v1992
        %1994 = vmatmul.bf16.gmra.mxu0 %v1752
        %v1995 = vpop.f32.mrf.mxu0
        %v1996 = vadd.f32 %v1760, %v1995
        %v1997 = vpop.f32.mrf.mxu0
        %v1998 = vadd.f32 %v1760, %v1997
        %1999 = vmatmul.bf16.gmra.mxu0 %v1754
        %v2000 = vpop.f32.mrf.mxu0
        %v2001 = vadd.f32 %v1760, %v2000
        %v2002 = vpop.f32.mrf.mxu0
        %v2003 = vadd.f32 %v1760, %v2002
        %2004 = vmatmul.bf16.gmra.mxu0 %v1756
        %v2005 = vpop.f32.mrf.mxu0
        %v2006 = vadd.f32 %v1760, %v2005
        %v2007 = vpop.f32.mrf.mxu0
        %v2008 = vadd.f32 %v1760, %v2007
        %2009 = vdwg.mxu0
        %2010 = vmatpush.bf16.msra.mxu0 %v1890
        %2011 = vmatpush.bf16.msra.mxu0 %v1888
        %2012 = vmatpush.bf16.msra.mxu0 %v1886
        %2013 = vmatpush.bf16.msra.mxu0 %v1884
        %2014 = vmatpush.bf16.msra.mxu0 %v1882
        %2015 = vmatpush.bf16.msra.mxu0 %v1880
        %2016 = vmatpush.bf16.msra.mxu0 %v1878
        %2017 = vmatpush.bf16.msra.mxu0 %v1876
        %2018 = vmatmul.bf16.gmra.mxu0 %v1751
        %v2019 = vpop.f32.mrf.mxu0
        %v2020 = vadd.f32 %v1991, %v2019
        %v2021 = vpop.f32.mrf.mxu0
        %v2022 = vadd.f32 %v1993, %v2021
        %2023 = vmatmul.bf16.gmra.mxu0 %v1753
        %v2024 = vpop.f32.mrf.mxu0
        %v2025 = vadd.f32 %v1996, %v2024
        %v2026 = vpop.f32.mrf.mxu0
        %v2027 = vadd.f32 %v1998, %v2026
        %2028 = vmatmul.bf16.gmra.mxu0 %v1755
        %v2029 = vpop.f32.mrf.mxu0
        %v2030 = vadd.f32 %v2001, %v2029
        %v2031 = vpop.f32.mrf.mxu0
        %v2032 = vadd.f32 %v2003, %v2031
        %2033 = vmatmul.bf16.gmra.mxu0 %v1757
        %v2034 = vpop.f32.mrf.mxu0
        %v2035 = vadd.f32 %v2006, %v2034
        %v2036 = vpop.f32.mrf.mxu0
        %v2037 = vadd.f32 %v2008, %v2036
        %2038 = vdwg.mxu0
        %s2039 = scalar_lea.vmem [#allocation2], 1280
        %v2040 = vld [vmem:[%s2039] sm:$0xff]
        %v2041 = vld [vmem:[%s2039 + $0x8] sm:$0xff]
        %v2042 = vld [vmem:[%s2039 + $0x10] sm:$0xff]
        %v2043 = vld [vmem:[%s2039 + $0x18] sm:$0xff]
        %v2044 = vld [vmem:[%s2039 + $0x20] sm:$0xff]
        %v2045 = vld [vmem:[%s2039 + $0x28] sm:$0xff]
        %v2046 = vld [vmem:[%s2039 + $0x30] sm:$0xff]
        %v2047 = vld [vmem:[%s2039 + $0x38] sm:$0xff]
        %v2048 = vld [vmem:[%s2039 + $0x40] sm:$0xff]
        %v2049 = vld [vmem:[%s2039 + $0x48] sm:$0xff]
        %v2050 = vld [vmem:[%s2039 + $0x50] sm:$0xff]
        %v2051 = vld [vmem:[%s2039 + $0x58] sm:$0xff]
        %v2052 = vld [vmem:[%s2039 + $0x60] sm:$0xff]
        %v2053 = vld [vmem:[%s2039 + $0x68] sm:$0xff]
        %v2054 = vld [vmem:[%s2039 + $0x70] sm:$0xff]
        %v2055 = vld [vmem:[%s2039 + $0x78] sm:$0xff]
        %v2056 = vld [vmem:[%s2039 + $0x80] sm:$0xff]
        %v2057 = vld [vmem:[%s2039 + $0x88] sm:$0xff]
        %v2058 = vld [vmem:[%s2039 + $0x90] sm:$0xff]
        %v2059 = vld [vmem:[%s2039 + $0x98] sm:$0xff]
        %v2060 = vld [vmem:[%s2039 + $0xa0] sm:$0xff]
        %v2061 = vld [vmem:[%s2039 + $0xa8] sm:$0xff]
        %v2062 = vld [vmem:[%s2039 + $0xb0] sm:$0xff]
        %v2063 = vld [vmem:[%s2039 + $0xb8] sm:$0xff]
        %v2064 = vld [vmem:[%s2039 + $0xc0] sm:$0xff]
        %v2065 = vld [vmem:[%s2039 + $0xc8] sm:$0xff]
        %v2066 = vld [vmem:[%s2039 + $0xd0] sm:$0xff]
        %v2067 = vld [vmem:[%s2039 + $0xd8] sm:$0xff]
        %v2068 = vld [vmem:[%s2039 + $0xe0] sm:$0xff]
        %v2069 = vld [vmem:[%s2039 + $0xe8] sm:$0xff]
        %v2070 = vld [vmem:[%s2039 + $0xf0] sm:$0xff]
        %v2071 = vld [vmem:[%s2039 + $0xf8] sm:$0xff]
        %s2072 = scalar_lea.vmem [#allocation4], 5
        %v2073 = vld [vmem:[%s2072] ss:$8 sm:$0x3]
        %v2074 = vpack.c.bf16 %v1964, %v1962
        %v2075 = vpack.c.bf16 %v2022, %v2020
        %v2076 = vpack.c.bf16 %v1969, %v1967
        %v2077 = vpack.c.bf16 %v2027, %v2025
        %v2078 = vpack.c.bf16 %v1974, %v1972
        %v2079 = vpack.c.bf16 %v2032, %v2030
        %v2080 = vpack.c.bf16 %v1979, %v1977
        %v2081 = vpack.c.bf16 %v2037, %v2035
        %v2083 = vperm.slane %v2073, 0
        %v2084 = vperm.slane %v2073, 1
        %v2119 = vunpack.c.l.b16 %v2040
        %v2120 = vunpack.c.h.b16 %v2040
        %v2121 = vunpack.c.l.b16 %v2041
        %v2122 = vunpack.c.h.b16 %v2041
        %v2123 = vunpack.c.l.b16 %v2042
        %v2124 = vunpack.c.h.b16 %v2042
        %v2125 = vunpack.c.l.b16 %v2043
        %v2126 = vunpack.c.h.b16 %v2043
        %v2127 = vunpack.c.l.b16 %v2044
        %v2128 = vunpack.c.h.b16 %v2044
        %v2129 = vunpack.c.l.b16 %v2045
        %v2130 = vunpack.c.h.b16 %v2045
        %v2131 = vunpack.c.l.b16 %v2046
        %v2132 = vunpack.c.h.b16 %v2046
        %v2133 = vunpack.c.l.b16 %v2047
        %v2134 = vunpack.c.h.b16 %v2047
        %v2135 = vunpack.c.l.b16 %v2048
        %v2136 = vunpack.c.h.b16 %v2048
        %v2137 = vunpack.c.l.b16 %v2049
        %v2138 = vunpack.c.h.b16 %v2049
        %v2139 = vunpack.c.l.b16 %v2050
        %v2140 = vunpack.c.h.b16 %v2050
        %v2141 = vunpack.c.l.b16 %v2051
        %v2142 = vunpack.c.h.b16 %v2051
        %v2143 = vunpack.c.l.b16 %v2052
        %v2144 = vunpack.c.h.b16 %v2052
        %v2145 = vunpack.c.l.b16 %v2053
        %v2146 = vunpack.c.h.b16 %v2053
        %v2147 = vunpack.c.l.b16 %v2054
        %v2148 = vunpack.c.h.b16 %v2054
        %v2149 = vunpack.c.l.b16 %v2055
        %v2150 = vunpack.c.h.b16 %v2055
        %v2151 = vunpack.c.l.b16 %v2056
        %v2152 = vunpack.c.h.b16 %v2056
        %v2153 = vunpack.c.l.b16 %v2057
        %v2154 = vunpack.c.h.b16 %v2057
        %v2155 = vunpack.c.l.b16 %v2058
        %v2156 = vunpack.c.h.b16 %v2058
        %v2157 = vunpack.c.l.b16 %v2059
        %v2158 = vunpack.c.h.b16 %v2059
        %v2159 = vunpack.c.l.b16 %v2060
        %v2160 = vunpack.c.h.b16 %v2060
        %v2161 = vunpack.c.l.b16 %v2061
        %v2162 = vunpack.c.h.b16 %v2061
        %v2163 = vunpack.c.l.b16 %v2062
        %v2164 = vunpack.c.h.b16 %v2062
        %v2165 = vunpack.c.l.b16 %v2063
        %v2166 = vunpack.c.h.b16 %v2063
        %v2167 = vunpack.c.l.b16 %v2064
        %v2168 = vunpack.c.h.b16 %v2064
        %v2169 = vunpack.c.l.b16 %v2065
        %v2170 = vunpack.c.h.b16 %v2065
        %v2171 = vunpack.c.l.b16 %v2066
        %v2172 = vunpack.c.h.b16 %v2066
        %v2173 = vunpack.c.l.b16 %v2067
        %v2174 = vunpack.c.h.b16 %v2067
        %v2175 = vunpack.c.l.b16 %v2068
        %v2176 = vunpack.c.h.b16 %v2068
        %v2177 = vunpack.c.l.b16 %v2069
        %v2178 = vunpack.c.h.b16 %v2069
        %v2179 = vunpack.c.l.b16 %v2070
        %v2180 = vunpack.c.h.b16 %v2070
        %v2181 = vunpack.c.l.b16 %v2071
        %v2182 = vunpack.c.h.b16 %v2071
        %v2183 = vpack.c.b16 %v2121, %v2119
        %v2184 = vpack.c.b16 %v2122, %v2120
        %v2185 = vpack.c.b16 %v2125, %v2123
        %v2186 = vpack.c.b16 %v2126, %v2124
        %v2187 = vpack.c.b16 %v2129, %v2127
        %v2188 = vpack.c.b16 %v2130, %v2128
        %v2189 = vpack.c.b16 %v2133, %v2131
        %v2190 = vpack.c.b16 %v2134, %v2132
        %v2191 = vpack.c.b16 %v2137, %v2135
        %v2192 = vpack.c.b16 %v2138, %v2136
        %v2193 = vpack.c.b16 %v2141, %v2139
        %v2194 = vpack.c.b16 %v2142, %v2140
        %v2195 = vpack.c.b16 %v2145, %v2143
        %v2196 = vpack.c.b16 %v2146, %v2144
        %v2197 = vpack.c.b16 %v2149, %v2147
        %v2198 = vpack.c.b16 %v2150, %v2148
        %v2199 = vpack.c.b16 %v2153, %v2151
        %v2200 = vpack.c.b16 %v2154, %v2152
        %v2201 = vpack.c.b16 %v2157, %v2155
        %v2202 = vpack.c.b16 %v2158, %v2156
        %v2203 = vpack.c.b16 %v2161, %v2159
        %v2204 = vpack.c.b16 %v2162, %v2160
        %v2205 = vpack.c.b16 %v2165, %v2163
        %v2206 = vpack.c.b16 %v2166, %v2164
        %v2207 = vpack.c.b16 %v2169, %v2167
        %v2208 = vpack.c.b16 %v2170, %v2168
        %v2209 = vpack.c.b16 %v2173, %v2171
        %v2210 = vpack.c.b16 %v2174, %v2172
        %v2211 = vpack.c.b16 %v2177, %v2175
        %v2212 = vpack.c.b16 %v2178, %v2176
        %v2213 = vpack.c.b16 %v2181, %v2179
        %v2214 = vpack.c.b16 %v2182, %v2180
        %2247 = vmatpush.bf16.msra.mxu0 %v2197
        %2248 = vmatpush.bf16.msra.mxu0 %v2195
        %2249 = vmatpush.bf16.msra.mxu0 %v2193
        %2250 = vmatpush.bf16.msra.mxu0 %v2191
        %2251 = vmatpush.bf16.msra.mxu0 %v2189
        %2252 = vmatpush.bf16.msra.mxu0 %v2187
        %2253 = vmatpush.bf16.msra.mxu0 %v2185
        %2254 = vmatpush.bf16.msra.mxu0 %v2183
        %2255 = vmatmul.bf16.gmra.mxu0 %v2074
        %v2256 = vpop.f32.mrf.mxu0
        %v2257 = vadd.f32 %v2083, %v2256
        %v2258 = vpop.f32.mrf.mxu0
        %v2259 = vadd.f32 %v2083, %v2258
        %2260 = vmatmul.bf16.gmra.mxu0 %v2076
        %v2261 = vpop.f32.mrf.mxu0
        %v2262 = vadd.f32 %v2083, %v2261
        %v2263 = vpop.f32.mrf.mxu0
        %v2264 = vadd.f32 %v2083, %v2263
        %2265 = vmatmul.bf16.gmra.mxu0 %v2078
        %v2266 = vpop.f32.mrf.mxu0
        %v2267 = vadd.f32 %v2083, %v2266
        %v2268 = vpop.f32.mrf.mxu0
        %v2269 = vadd.f32 %v2083, %v2268
        %2270 = vmatmul.bf16.gmra.mxu0 %v2080
        %v2271 = vpop.f32.mrf.mxu0
        %v2272 = vadd.f32 %v2083, %v2271
        %v2273 = vpop.f32.mrf.mxu0
        %v2274 = vadd.f32 %v2083, %v2273
        %2275 = vdwg.mxu0
        %2276 = vmatpush.bf16.msra.mxu0 %v2213
        %2277 = vmatpush.bf16.msra.mxu0 %v2211
        %2278 = vmatpush.bf16.msra.mxu0 %v2209
        %2279 = vmatpush.bf16.msra.mxu0 %v2207
        %2280 = vmatpush.bf16.msra.mxu0 %v2205
        %2281 = vmatpush.bf16.msra.mxu0 %v2203
        %2282 = vmatpush.bf16.msra.mxu0 %v2201
        %2283 = vmatpush.bf16.msra.mxu0 %v2199
        %2284 = vmatmul.bf16.gmra.mxu0 %v2075
        %v2285 = vpop.f32.mrf.mxu0
        %v2286 = vadd.f32 %v2257, %v2285
        %v2287 = vpop.f32.mrf.mxu0
        %v2288 = vadd.f32 %v2259, %v2287
        %2289 = vmatmul.bf16.gmra.mxu0 %v2077
        %v2290 = vpop.f32.mrf.mxu0
        %v2291 = vadd.f32 %v2262, %v2290
        %v2292 = vpop.f32.mrf.mxu0
        %v2293 = vadd.f32 %v2264, %v2292
        %2294 = vmatmul.bf16.gmra.mxu0 %v2079
        %v2295 = vpop.f32.mrf.mxu0
        %v2296 = vadd.f32 %v2267, %v2295
        %v2297 = vpop.f32.mrf.mxu0
        %v2298 = vadd.f32 %v2269, %v2297
        %2299 = vmatmul.bf16.gmra.mxu0 %v2081
        %v2300 = vpop.f32.mrf.mxu0
        %v2301 = vadd.f32 %v2272, %v2300
        %v2302 = vpop.f32.mrf.mxu0
        %v2303 = vadd.f32 %v2274, %v2302
        %2304 = vdwg.mxu0
        %2305 = vmatpush.bf16.msra.mxu0 %v2198
        %2306 = vmatpush.bf16.msra.mxu0 %v2196
        %2307 = vmatpush.bf16.msra.mxu0 %v2194
        %2308 = vmatpush.bf16.msra.mxu0 %v2192
        %2309 = vmatpush.bf16.msra.mxu0 %v2190
        %2310 = vmatpush.bf16.msra.mxu0 %v2188
        %2311 = vmatpush.bf16.msra.mxu0 %v2186
        %2312 = vmatpush.bf16.msra.mxu0 %v2184
        %2313 = vmatmul.bf16.gmra.mxu0 %v2074
        %v2314 = vpop.f32.mrf.mxu0
        %v2315 = vadd.f32 %v2084, %v2314
        %v2316 = vpop.f32.mrf.mxu0
        %v2317 = vadd.f32 %v2084, %v2316
        %2318 = vmatmul.bf16.gmra.mxu0 %v2076
        %v2319 = vpop.f32.mrf.mxu0
        %v2320 = vadd.f32 %v2084, %v2319
        %v2321 = vpop.f32.mrf.mxu0
        %v2322 = vadd.f32 %v2084, %v2321
        %2323 = vmatmul.bf16.gmra.mxu0 %v2078
        %v2324 = vpop.f32.mrf.mxu0
        %v2325 = vadd.f32 %v2084, %v2324
        %v2326 = vpop.f32.mrf.mxu0
        %v2327 = vadd.f32 %v2084, %v2326
        %2328 = vmatmul.bf16.gmra.mxu0 %v2080
        %v2329 = vpop.f32.mrf.mxu0
        %v2330 = vadd.f32 %v2084, %v2329
        %v2331 = vpop.f32.mrf.mxu0
        %v2332 = vadd.f32 %v2084, %v2331
        %2333 = vdwg.mxu0
        %2334 = vmatpush.bf16.msra.mxu0 %v2214
        %2335 = vmatpush.bf16.msra.mxu0 %v2212
        %2336 = vmatpush.bf16.msra.mxu0 %v2210
        %2337 = vmatpush.bf16.msra.mxu0 %v2208
        %2338 = vmatpush.bf16.msra.mxu0 %v2206
        %2339 = vmatpush.bf16.msra.mxu0 %v2204
        %2340 = vmatpush.bf16.msra.mxu0 %v2202
        %2341 = vmatpush.bf16.msra.mxu0 %v2200
        %2342 = vmatmul.bf16.gmra.mxu0 %v2075
        %v2343 = vpop.f32.mrf.mxu0
        %v2344 = vadd.f32 %v2315, %v2343
        %v2345 = vpop.f32.mrf.mxu0
        %v2346 = vadd.f32 %v2317, %v2345
        %2347 = vmatmul.bf16.gmra.mxu0 %v2077
        %v2348 = vpop.f32.mrf.mxu0
        %v2349 = vadd.f32 %v2320, %v2348
        %v2350 = vpop.f32.mrf.mxu0
        %v2351 = vadd.f32 %v2322, %v2350
        %2352 = vmatmul.bf16.gmra.mxu0 %v2079
        %v2353 = vpop.f32.mrf.mxu0
        %v2354 = vadd.f32 %v2325, %v2353
        %v2355 = vpop.f32.mrf.mxu0
        %v2356 = vadd.f32 %v2327, %v2355
        %2357 = vmatmul.bf16.gmra.mxu0 %v2081
        %v2358 = vpop.f32.mrf.mxu0
        %v2359 = vadd.f32 %v2330, %v2358
        %v2360 = vpop.f32.mrf.mxu0
        %v2361 = vadd.f32 %v2332, %v2360
        %2362 = vdwg.mxu0
        %vm2363 = vcmp.ge.f32.partialorder %v2286, 0.0
        %vm2364 = vcmp.ge.f32.partialorder %v2344, 0.0
        %vm2365 = vcmp.ge.f32.partialorder %v2288, 0.0
        %vm2366 = vcmp.ge.f32.partialorder %v2346, 0.0
        %vm2367 = vcmp.ge.f32.partialorder %v2291, 0.0
        %vm2368 = vcmp.ge.f32.partialorder %v2349, 0.0
        %vm2369 = vcmp.ge.f32.partialorder %v2293, 0.0
        %vm2370 = vcmp.ge.f32.partialorder %v2351, 0.0
        %vm2371 = vcmp.ge.f32.partialorder %v2296, 0.0
        %vm2372 = vcmp.ge.f32.partialorder %v2354, 0.0
        %vm2373 = vcmp.ge.f32.partialorder %v2298, 0.0
        %vm2374 = vcmp.ge.f32.partialorder %v2356, 0.0
        %vm2375 = vcmp.ge.f32.partialorder %v2301, 0.0
        %vm2376 = vcmp.ge.f32.partialorder %v2359, 0.0
        %vm2377 = vcmp.ge.f32.partialorder %v2303, 0.0
        %vm2378 = vcmp.ge.f32.partialorder %v2361, 0.0
        %v2379 = vmul.f32 %v2286, 0.01
        %v2380 = vmul.f32 %v2344, 0.01
        %v2381 = vmul.f32 %v2288, 0.01
        %v2382 = vmul.f32 %v2346, 0.01
        %v2383 = vmul.f32 %v2291, 0.01
        %v2384 = vmul.f32 %v2349, 0.01
        %v2385 = vmul.f32 %v2293, 0.01
        %v2386 = vmul.f32 %v2351, 0.01
        %v2387 = vmul.f32 %v2296, 0.01
        %v2388 = vmul.f32 %v2354, 0.01
        %v2389 = vmul.f32 %v2298, 0.01
        %v2390 = vmul.f32 %v2356, 0.01
        %v2391 = vmul.f32 %v2301, 0.01
        %v2392 = vmul.f32 %v2359, 0.01
        %v2393 = vmul.f32 %v2303, 0.01
        %v2394 = vmul.f32 %v2361, 0.01
        %v2395 = vsel %vm2363, %v2286, %v2379
        %v2396 = vsel %vm2364, %v2344, %v2380
        %v2397 = vsel %vm2365, %v2288, %v2381
        %v2398 = vsel %vm2366, %v2346, %v2382
        %v2399 = vsel %vm2367, %v2291, %v2383
        %v2400 = vsel %vm2368, %v2349, %v2384
        %v2401 = vsel %vm2369, %v2293, %v2385
        %v2402 = vsel %vm2370, %v2351, %v2386
        %v2403 = vsel %vm2371, %v2296, %v2387
        %v2404 = vsel %vm2372, %v2354, %v2388
        %v2405 = vsel %vm2373, %v2298, %v2389
        %v2406 = vsel %vm2374, %v2356, %v2390
        %v2407 = vsel %vm2375, %v2301, %v2391
        %v2408 = vsel %vm2376, %v2359, %v2392
        %v2409 = vsel %vm2377, %v2303, %v2393
        %v2410 = vsel %vm2378, %v2361, %v2394
        %s2411 = scalar_lea.vmem [#allocation2], 1536
        %v2412 = vld [vmem:[%s2411] sm:$0xff]
        %v2413 = vld [vmem:[%s2411 + $0x8] sm:$0xff]
        %v2414 = vld [vmem:[%s2411 + $0x10] sm:$0xff]
        %v2415 = vld [vmem:[%s2411 + $0x18] sm:$0xff]
        %v2416 = vld [vmem:[%s2411 + $0x20] sm:$0xff]
        %v2417 = vld [vmem:[%s2411 + $0x28] sm:$0xff]
        %v2418 = vld [vmem:[%s2411 + $0x30] sm:$0xff]
        %v2419 = vld [vmem:[%s2411 + $0x38] sm:$0xff]
        %v2420 = vld [vmem:[%s2411 + $0x40] sm:$0xff]
        %v2421 = vld [vmem:[%s2411 + $0x48] sm:$0xff]
        %v2422 = vld [vmem:[%s2411 + $0x50] sm:$0xff]
        %v2423 = vld [vmem:[%s2411 + $0x58] sm:$0xff]
        %v2424 = vld [vmem:[%s2411 + $0x60] sm:$0xff]
        %v2425 = vld [vmem:[%s2411 + $0x68] sm:$0xff]
        %v2426 = vld [vmem:[%s2411 + $0x70] sm:$0xff]
        %v2427 = vld [vmem:[%s2411 + $0x78] sm:$0xff]
        %v2428 = vld [vmem:[%s2411 + $0x80] sm:$0xff]
        %v2429 = vld [vmem:[%s2411 + $0x88] sm:$0xff]
        %v2430 = vld [vmem:[%s2411 + $0x90] sm:$0xff]
        %v2431 = vld [vmem:[%s2411 + $0x98] sm:$0xff]
        %v2432 = vld [vmem:[%s2411 + $0xa0] sm:$0xff]
        %v2433 = vld [vmem:[%s2411 + $0xa8] sm:$0xff]
        %v2434 = vld [vmem:[%s2411 + $0xb0] sm:$0xff]
        %v2435 = vld [vmem:[%s2411 + $0xb8] sm:$0xff]
        %v2436 = vld [vmem:[%s2411 + $0xc0] sm:$0xff]
        %v2437 = vld [vmem:[%s2411 + $0xc8] sm:$0xff]
        %v2438 = vld [vmem:[%s2411 + $0xd0] sm:$0xff]
        %v2439 = vld [vmem:[%s2411 + $0xd8] sm:$0xff]
        %v2440 = vld [vmem:[%s2411 + $0xe0] sm:$0xff]
        %v2441 = vld [vmem:[%s2411 + $0xe8] sm:$0xff]
        %v2442 = vld [vmem:[%s2411 + $0xf0] sm:$0xff]
        %v2443 = vld [vmem:[%s2411 + $0xf8] sm:$0xff]
        %s2444 = scalar_lea.vmem [#allocation4], 6
        %v2445 = vld [vmem:[%s2444] ss:$8 sm:$0x3]
        %v2446 = vpack.c.bf16 %v2397, %v2395
        %v2447 = vpack.c.bf16 %v2398, %v2396
        %v2448 = vpack.c.bf16 %v2401, %v2399
        %v2449 = vpack.c.bf16 %v2402, %v2400
        %v2450 = vpack.c.bf16 %v2405, %v2403
        %v2451 = vpack.c.bf16 %v2406, %v2404
        %v2452 = vpack.c.bf16 %v2409, %v2407
        %v2453 = vpack.c.bf16 %v2410, %v2408
        %v2455 = vperm.slane %v2445, 0
        %v2456 = vperm.slane %v2445, 1
        %v2491 = vunpack.c.l.b16 %v2412
        %v2492 = vunpack.c.h.b16 %v2412
        %v2493 = vunpack.c.l.b16 %v2413
        %v2494 = vunpack.c.h.b16 %v2413
        %v2495 = vunpack.c.l.b16 %v2414
        %v2496 = vunpack.c.h.b16 %v2414
        %v2497 = vunpack.c.l.b16 %v2415
        %v2498 = vunpack.c.h.b16 %v2415
        %v2499 = vunpack.c.l.b16 %v2416
        %v2500 = vunpack.c.h.b16 %v2416
        %v2501 = vunpack.c.l.b16 %v2417
        %v2502 = vunpack.c.h.b16 %v2417
        %v2503 = vunpack.c.l.b16 %v2418
        %v2504 = vunpack.c.h.b16 %v2418
        %v2505 = vunpack.c.l.b16 %v2419
        %v2506 = vunpack.c.h.b16 %v2419
        %v2507 = vunpack.c.l.b16 %v2420
        %v2508 = vunpack.c.h.b16 %v2420
        %v2509 = vunpack.c.l.b16 %v2421
        %v2510 = vunpack.c.h.b16 %v2421
        %v2511 = vunpack.c.l.b16 %v2422
        %v2512 = vunpack.c.h.b16 %v2422
        %v2513 = vunpack.c.l.b16 %v2423
        %v2514 = vunpack.c.h.b16 %v2423
        %v2515 = vunpack.c.l.b16 %v2424
        %v2516 = vunpack.c.h.b16 %v2424
        %v2517 = vunpack.c.l.b16 %v2425
        %v2518 = vunpack.c.h.b16 %v2425
        %v2519 = vunpack.c.l.b16 %v2426
        %v2520 = vunpack.c.h.b16 %v2426
        %v2521 = vunpack.c.l.b16 %v2427
        %v2522 = vunpack.c.h.b16 %v2427
        %v2523 = vunpack.c.l.b16 %v2428
        %v2524 = vunpack.c.h.b16 %v2428
        %v2525 = vunpack.c.l.b16 %v2429
        %v2526 = vunpack.c.h.b16 %v2429
        %v2527 = vunpack.c.l.b16 %v2430
        %v2528 = vunpack.c.h.b16 %v2430
        %v2529 = vunpack.c.l.b16 %v2431
        %v2530 = vunpack.c.h.b16 %v2431
        %v2531 = vunpack.c.l.b16 %v2432
        %v2532 = vunpack.c.h.b16 %v2432
        %v2533 = vunpack.c.l.b16 %v2433
        %v2534 = vunpack.c.h.b16 %v2433
        %v2535 = vunpack.c.l.b16 %v2434
        %v2536 = vunpack.c.h.b16 %v2434
        %v2537 = vunpack.c.l.b16 %v2435
        %v2538 = vunpack.c.h.b16 %v2435
        %v2539 = vunpack.c.l.b16 %v2436
        %v2540 = vunpack.c.h.b16 %v2436
        %v2541 = vunpack.c.l.b16 %v2437
        %v2542 = vunpack.c.h.b16 %v2437
        %v2543 = vunpack.c.l.b16 %v2438
        %v2544 = vunpack.c.h.b16 %v2438
        %v2545 = vunpack.c.l.b16 %v2439
        %v2546 = vunpack.c.h.b16 %v2439
        %v2547 = vunpack.c.l.b16 %v2440
        %v2548 = vunpack.c.h.b16 %v2440
        %v2549 = vunpack.c.l.b16 %v2441
        %v2550 = vunpack.c.h.b16 %v2441
        %v2551 = vunpack.c.l.b16 %v2442
        %v2552 = vunpack.c.h.b16 %v2442
        %v2553 = vunpack.c.l.b16 %v2443
        %v2554 = vunpack.c.h.b16 %v2443
        %v2555 = vpack.c.b16 %v2493, %v2491
        %v2556 = vpack.c.b16 %v2494, %v2492
        %v2557 = vpack.c.b16 %v2497, %v2495
        %v2558 = vpack.c.b16 %v2498, %v2496
        %v2559 = vpack.c.b16 %v2501, %v2499
        %v2560 = vpack.c.b16 %v2502, %v2500
        %v2561 = vpack.c.b16 %v2505, %v2503
        %v2562 = vpack.c.b16 %v2506, %v2504
        %v2563 = vpack.c.b16 %v2509, %v2507
        %v2564 = vpack.c.b16 %v2510, %v2508
        %v2565 = vpack.c.b16 %v2513, %v2511
        %v2566 = vpack.c.b16 %v2514, %v2512
        %v2567 = vpack.c.b16 %v2517, %v2515
        %v2568 = vpack.c.b16 %v2518, %v2516
        %v2569 = vpack.c.b16 %v2521, %v2519
        %v2570 = vpack.c.b16 %v2522, %v2520
        %v2571 = vpack.c.b16 %v2525, %v2523
        %v2572 = vpack.c.b16 %v2526, %v2524
        %v2573 = vpack.c.b16 %v2529, %v2527
        %v2574 = vpack.c.b16 %v2530, %v2528
        %v2575 = vpack.c.b16 %v2533, %v2531
        %v2576 = vpack.c.b16 %v2534, %v2532
        %v2577 = vpack.c.b16 %v2537, %v2535
        %v2578 = vpack.c.b16 %v2538, %v2536
        %v2579 = vpack.c.b16 %v2541, %v2539
        %v2580 = vpack.c.b16 %v2542, %v2540
        %v2581 = vpack.c.b16 %v2545, %v2543
        %v2582 = vpack.c.b16 %v2546, %v2544
        %v2583 = vpack.c.b16 %v2549, %v2547
        %v2584 = vpack.c.b16 %v2550, %v2548
        %v2585 = vpack.c.b16 %v2553, %v2551
        %v2586 = vpack.c.b16 %v2554, %v2552
        %2619 = vmatpush.bf16.msra.mxu0 %v2569
        %2620 = vmatpush.bf16.msra.mxu0 %v2567
        %2621 = vmatpush.bf16.msra.mxu0 %v2565
        %2622 = vmatpush.bf16.msra.mxu0 %v2563
        %2623 = vmatpush.bf16.msra.mxu0 %v2561
        %2624 = vmatpush.bf16.msra.mxu0 %v2559
        %2625 = vmatpush.bf16.msra.mxu0 %v2557
        %2626 = vmatpush.bf16.msra.mxu0 %v2555
        %2627 = vmatmul.bf16.gmra.mxu0 %v2446
        %v2628 = vpop.f32.mrf.mxu0
        %v2629 = vadd.f32 %v2455, %v2628
        %v2630 = vpop.f32.mrf.mxu0
        %v2631 = vadd.f32 %v2455, %v2630
        %2632 = vmatmul.bf16.gmra.mxu0 %v2448
        %v2633 = vpop.f32.mrf.mxu0
        %v2634 = vadd.f32 %v2455, %v2633
        %v2635 = vpop.f32.mrf.mxu0
        %v2636 = vadd.f32 %v2455, %v2635
        %2637 = vmatmul.bf16.gmra.mxu0 %v2450
        %v2638 = vpop.f32.mrf.mxu0
        %v2639 = vadd.f32 %v2455, %v2638
        %v2640 = vpop.f32.mrf.mxu0
        %v2641 = vadd.f32 %v2455, %v2640
        %2642 = vmatmul.bf16.gmra.mxu0 %v2452
        %v2643 = vpop.f32.mrf.mxu0
        %v2644 = vadd.f32 %v2455, %v2643
        %v2645 = vpop.f32.mrf.mxu0
        %v2646 = vadd.f32 %v2455, %v2645
        %2647 = vdwg.mxu0
        %2648 = vmatpush.bf16.msra.mxu0 %v2585
        %2649 = vmatpush.bf16.msra.mxu0 %v2583
        %2650 = vmatpush.bf16.msra.mxu0 %v2581
        %2651 = vmatpush.bf16.msra.mxu0 %v2579
        %2652 = vmatpush.bf16.msra.mxu0 %v2577
        %2653 = vmatpush.bf16.msra.mxu0 %v2575
        %2654 = vmatpush.bf16.msra.mxu0 %v2573
        %2655 = vmatpush.bf16.msra.mxu0 %v2571
        %2656 = vmatmul.bf16.gmra.mxu0 %v2447
        %v2657 = vpop.f32.mrf.mxu0
        %v2658 = vadd.f32 %v2629, %v2657
        %v2659 = vpop.f32.mrf.mxu0
        %v2660 = vadd.f32 %v2631, %v2659
        %2661 = vmatmul.bf16.gmra.mxu0 %v2449
        %v2662 = vpop.f32.mrf.mxu0
        %v2663 = vadd.f32 %v2634, %v2662
        %v2664 = vpop.f32.mrf.mxu0
        %v2665 = vadd.f32 %v2636, %v2664
        %2666 = vmatmul.bf16.gmra.mxu0 %v2451
        %v2667 = vpop.f32.mrf.mxu0
        %v2668 = vadd.f32 %v2639, %v2667
        %v2669 = vpop.f32.mrf.mxu0
        %v2670 = vadd.f32 %v2641, %v2669
        %2671 = vmatmul.bf16.gmra.mxu0 %v2453
        %v2672 = vpop.f32.mrf.mxu0
        %v2673 = vadd.f32 %v2644, %v2672
        %v2674 = vpop.f32.mrf.mxu0
        %v2675 = vadd.f32 %v2646, %v2674
        %2676 = vdwg.mxu0
        %2677 = vmatpush.bf16.msra.mxu0 %v2570
        %2678 = vmatpush.bf16.msra.mxu0 %v2568
        %2679 = vmatpush.bf16.msra.mxu0 %v2566
        %2680 = vmatpush.bf16.msra.mxu0 %v2564
        %2681 = vmatpush.bf16.msra.mxu0 %v2562
        %2682 = vmatpush.bf16.msra.mxu0 %v2560
        %2683 = vmatpush.bf16.msra.mxu0 %v2558
        %2684 = vmatpush.bf16.msra.mxu0 %v2556
        %2685 = vmatmul.bf16.gmra.mxu0 %v2446
        %v2686 = vpop.f32.mrf.mxu0
        %v2687 = vadd.f32 %v2456, %v2686
        %v2688 = vpop.f32.mrf.mxu0
        %v2689 = vadd.f32 %v2456, %v2688
        %2690 = vmatmul.bf16.gmra.mxu0 %v2448
        %v2691 = vpop.f32.mrf.mxu0
        %v2692 = vadd.f32 %v2456, %v2691
        %v2693 = vpop.f32.mrf.mxu0
        %v2694 = vadd.f32 %v2456, %v2693
        %2695 = vmatmul.bf16.gmra.mxu0 %v2450
        %v2696 = vpop.f32.mrf.mxu0
        %v2697 = vadd.f32 %v2456, %v2696
        %v2698 = vpop.f32.mrf.mxu0
        %v2699 = vadd.f32 %v2456, %v2698
        %2700 = vmatmul.bf16.gmra.mxu0 %v2452
        %v2701 = vpop.f32.mrf.mxu0
        %v2702 = vadd.f32 %v2456, %v2701
        %v2703 = vpop.f32.mrf.mxu0
        %v2704 = vadd.f32 %v2456, %v2703
        %2705 = vdwg.mxu0
        %2706 = vmatpush.bf16.msra.mxu0 %v2586
        %2707 = vmatpush.bf16.msra.mxu0 %v2584
        %2708 = vmatpush.bf16.msra.mxu0 %v2582
        %2709 = vmatpush.bf16.msra.mxu0 %v2580
        %2710 = vmatpush.bf16.msra.mxu0 %v2578
        %2711 = vmatpush.bf16.msra.mxu0 %v2576
        %2712 = vmatpush.bf16.msra.mxu0 %v2574
        %2713 = vmatpush.bf16.msra.mxu0 %v2572
        %2714 = vmatmul.bf16.gmra.mxu0 %v2447
        %v2715 = vpop.f32.mrf.mxu0
        %v2716 = vadd.f32 %v2687, %v2715
        %v2717 = vpop.f32.mrf.mxu0
        %v2718 = vadd.f32 %v2689, %v2717
        %2719 = vmatmul.bf16.gmra.mxu0 %v2449
        %v2720 = vpop.f32.mrf.mxu0
        %v2721 = vadd.f32 %v2692, %v2720
        %v2722 = vpop.f32.mrf.mxu0
        %v2723 = vadd.f32 %v2694, %v2722
        %2724 = vmatmul.bf16.gmra.mxu0 %v2451
        %v2725 = vpop.f32.mrf.mxu0
        %v2726 = vadd.f32 %v2697, %v2725
        %v2727 = vpop.f32.mrf.mxu0
        %v2728 = vadd.f32 %v2699, %v2727
        %2729 = vmatmul.bf16.gmra.mxu0 %v2453
        %v2730 = vpop.f32.mrf.mxu0
        %v2731 = vadd.f32 %v2702, %v2730
        %v2732 = vpop.f32.mrf.mxu0
        %v2733 = vadd.f32 %v2704, %v2732
        %2734 = vdwg.mxu0
        %vm2735 = vcmp.ge.f32.partialorder %v2658, 0.0
        %vm2736 = vcmp.ge.f32.partialorder %v2716, 0.0
        %vm2737 = vcmp.ge.f32.partialorder %v2660, 0.0
        %vm2738 = vcmp.ge.f32.partialorder %v2718, 0.0
        %vm2739 = vcmp.ge.f32.partialorder %v2663, 0.0
        %vm2740 = vcmp.ge.f32.partialorder %v2721, 0.0
        %vm2741 = vcmp.ge.f32.partialorder %v2665, 0.0
        %vm2742 = vcmp.ge.f32.partialorder %v2723, 0.0
        %vm2743 = vcmp.ge.f32.partialorder %v2668, 0.0
        %vm2744 = vcmp.ge.f32.partialorder %v2726, 0.0
        %vm2745 = vcmp.ge.f32.partialorder %v2670, 0.0
        %vm2746 = vcmp.ge.f32.partialorder %v2728, 0.0
        %vm2747 = vcmp.ge.f32.partialorder %v2673, 0.0
        %vm2748 = vcmp.ge.f32.partialorder %v2731, 0.0
        %vm2749 = vcmp.ge.f32.partialorder %v2675, 0.0
        %vm2750 = vcmp.ge.f32.partialorder %v2733, 0.0
        %v2751 = vmul.f32 %v2658, 0.01
        %v2752 = vmul.f32 %v2716, 0.01
        %v2753 = vmul.f32 %v2660, 0.01
        %v2754 = vmul.f32 %v2718, 0.01
        %v2755 = vmul.f32 %v2663, 0.01
        %v2756 = vmul.f32 %v2721, 0.01
        %v2757 = vmul.f32 %v2665, 0.01
        %v2758 = vmul.f32 %v2723, 0.01
        %v2759 = vmul.f32 %v2668, 0.01
        %v2760 = vmul.f32 %v2726, 0.01
        %v2761 = vmul.f32 %v2670, 0.01
        %v2762 = vmul.f32 %v2728, 0.01
        %v2763 = vmul.f32 %v2673, 0.01
        %v2764 = vmul.f32 %v2731, 0.01
        %v2765 = vmul.f32 %v2675, 0.01
        %v2766 = vmul.f32 %v2733, 0.01
        %v2767 = vsel %vm2735, %v2658, %v2751
        %v2768 = vsel %vm2736, %v2716, %v2752
        %v2769 = vsel %vm2737, %v2660, %v2753
        %v2770 = vsel %vm2738, %v2718, %v2754
        %v2771 = vsel %vm2739, %v2663, %v2755
        %v2772 = vsel %vm2740, %v2721, %v2756
        %v2773 = vsel %vm2741, %v2665, %v2757
        %v2774 = vsel %vm2742, %v2723, %v2758
        %v2775 = vsel %vm2743, %v2668, %v2759
        %v2776 = vsel %vm2744, %v2726, %v2760
        %v2777 = vsel %vm2745, %v2670, %v2761
        %v2778 = vsel %vm2746, %v2728, %v2762
        %v2779 = vsel %vm2747, %v2673, %v2763
        %v2780 = vsel %vm2748, %v2731, %v2764
        %v2781 = vsel %vm2749, %v2675, %v2765
        %v2782 = vsel %vm2750, %v2733, %v2766
        %s2783 = scalar_lea.vmem [#allocation2], 1792
        %v2784 = vld [vmem:[%s2783] sm:$0xff]
        %v2785 = vld [vmem:[%s2783 + $0x8] sm:$0xff]
        %v2786 = vld [vmem:[%s2783 + $0x10] sm:$0xff]
        %v2787 = vld [vmem:[%s2783 + $0x18] sm:$0xff]
        %v2788 = vld [vmem:[%s2783 + $0x20] sm:$0xff]
        %v2789 = vld [vmem:[%s2783 + $0x28] sm:$0xff]
        %v2790 = vld [vmem:[%s2783 + $0x30] sm:$0xff]
        %v2791 = vld [vmem:[%s2783 + $0x38] sm:$0xff]
        %v2792 = vld [vmem:[%s2783 + $0x40] sm:$0xff]
        %v2793 = vld [vmem:[%s2783 + $0x48] sm:$0xff]
        %v2794 = vld [vmem:[%s2783 + $0x50] sm:$0xff]
        %v2795 = vld [vmem:[%s2783 + $0x58] sm:$0xff]
        %v2796 = vld [vmem:[%s2783 + $0x60] sm:$0xff]
        %v2797 = vld [vmem:[%s2783 + $0x68] sm:$0xff]
        %v2798 = vld [vmem:[%s2783 + $0x70] sm:$0xff]
        %v2799 = vld [vmem:[%s2783 + $0x78] sm:$0xff]
        %v2800 = vld [vmem:[%s2783 + $0x80] sm:$0xff]
        %v2801 = vld [vmem:[%s2783 + $0x88] sm:$0xff]
        %v2802 = vld [vmem:[%s2783 + $0x90] sm:$0xff]
        %v2803 = vld [vmem:[%s2783 + $0x98] sm:$0xff]
        %v2804 = vld [vmem:[%s2783 + $0xa0] sm:$0xff]
        %v2805 = vld [vmem:[%s2783 + $0xa8] sm:$0xff]
        %v2806 = vld [vmem:[%s2783 + $0xb0] sm:$0xff]
        %v2807 = vld [vmem:[%s2783 + $0xb8] sm:$0xff]
        %v2808 = vld [vmem:[%s2783 + $0xc0] sm:$0xff]
        %v2809 = vld [vmem:[%s2783 + $0xc8] sm:$0xff]
        %v2810 = vld [vmem:[%s2783 + $0xd0] sm:$0xff]
        %v2811 = vld [vmem:[%s2783 + $0xd8] sm:$0xff]
        %v2812 = vld [vmem:[%s2783 + $0xe0] sm:$0xff]
        %v2813 = vld [vmem:[%s2783 + $0xe8] sm:$0xff]
        %v2814 = vld [vmem:[%s2783 + $0xf0] sm:$0xff]
        %v2815 = vld [vmem:[%s2783 + $0xf8] sm:$0xff]
        %s2816 = scalar_lea.vmem [#allocation4], 7
        %v2817 = vld [vmem:[%s2816] ss:$8 sm:$0x3]
        %v2818 = vpack.c.bf16 %v2769, %v2767
        %v2819 = vpack.c.bf16 %v2770, %v2768
        %v2820 = vpack.c.bf16 %v2773, %v2771
        %v2821 = vpack.c.bf16 %v2774, %v2772
        %v2822 = vpack.c.bf16 %v2777, %v2775
        %v2823 = vpack.c.bf16 %v2778, %v2776
        %v2824 = vpack.c.bf16 %v2781, %v2779
        %v2825 = vpack.c.bf16 %v2782, %v2780
        %v2827 = vperm.slane %v2817, 0
        %v2828 = vperm.slane %v2817, 1
        %v2863 = vunpack.c.l.b16 %v2784
        %v2864 = vunpack.c.h.b16 %v2784
        %v2865 = vunpack.c.l.b16 %v2785
        %v2866 = vunpack.c.h.b16 %v2785
        %v2867 = vunpack.c.l.b16 %v2786
        %v2868 = vunpack.c.h.b16 %v2786
        %v2869 = vunpack.c.l.b16 %v2787
        %v2870 = vunpack.c.h.b16 %v2787
        %v2871 = vunpack.c.l.b16 %v2788
        %v2872 = vunpack.c.h.b16 %v2788
        %v2873 = vunpack.c.l.b16 %v2789
        %v2874 = vunpack.c.h.b16 %v2789
        %v2875 = vunpack.c.l.b16 %v2790
        %v2876 = vunpack.c.h.b16 %v2790
        %v2877 = vunpack.c.l.b16 %v2791
        %v2878 = vunpack.c.h.b16 %v2791
        %v2879 = vunpack.c.l.b16 %v2792
        %v2880 = vunpack.c.h.b16 %v2792
        %v2881 = vunpack.c.l.b16 %v2793
        %v2882 = vunpack.c.h.b16 %v2793
        %v2883 = vunpack.c.l.b16 %v2794
        %v2884 = vunpack.c.h.b16 %v2794
        %v2885 = vunpack.c.l.b16 %v2795
        %v2886 = vunpack.c.h.b16 %v2795
        %v2887 = vunpack.c.l.b16 %v2796
        %v2888 = vunpack.c.h.b16 %v2796
        %v2889 = vunpack.c.l.b16 %v2797
        %v2890 = vunpack.c.h.b16 %v2797
        %v2891 = vunpack.c.l.b16 %v2798
        %v2892 = vunpack.c.h.b16 %v2798
        %v2893 = vunpack.c.l.b16 %v2799
        %v2894 = vunpack.c.h.b16 %v2799
        %v2895 = vunpack.c.l.b16 %v2800
        %v2896 = vunpack.c.h.b16 %v2800
        %v2897 = vunpack.c.l.b16 %v2801
        %v2898 = vunpack.c.h.b16 %v2801
        %v2899 = vunpack.c.l.b16 %v2802
        %v2900 = vunpack.c.h.b16 %v2802
        %v2901 = vunpack.c.l.b16 %v2803
        %v2902 = vunpack.c.h.b16 %v2803
        %v2903 = vunpack.c.l.b16 %v2804
        %v2904 = vunpack.c.h.b16 %v2804
        %v2905 = vunpack.c.l.b16 %v2805
        %v2906 = vunpack.c.h.b16 %v2805
        %v2907 = vunpack.c.l.b16 %v2806
        %v2908 = vunpack.c.h.b16 %v2806
        %v2909 = vunpack.c.l.b16 %v2807
        %v2910 = vunpack.c.h.b16 %v2807
        %v2911 = vunpack.c.l.b16 %v2808
        %v2912 = vunpack.c.h.b16 %v2808
        %v2913 = vunpack.c.l.b16 %v2809
        %v2914 = vunpack.c.h.b16 %v2809
        %v2915 = vunpack.c.l.b16 %v2810
        %v2916 = vunpack.c.h.b16 %v2810
        %v2917 = vunpack.c.l.b16 %v2811
        %v2918 = vunpack.c.h.b16 %v2811
        %v2919 = vunpack.c.l.b16 %v2812
        %v2920 = vunpack.c.h.b16 %v2812
        %v2921 = vunpack.c.l.b16 %v2813
        %v2922 = vunpack.c.h.b16 %v2813
        %v2923 = vunpack.c.l.b16 %v2814
        %v2924 = vunpack.c.h.b16 %v2814
        %v2925 = vunpack.c.l.b16 %v2815
        %v2926 = vunpack.c.h.b16 %v2815
        %v2927 = vpack.c.b16 %v2865, %v2863
        %v2928 = vpack.c.b16 %v2866, %v2864
        %v2929 = vpack.c.b16 %v2869, %v2867
        %v2930 = vpack.c.b16 %v2870, %v2868
        %v2931 = vpack.c.b16 %v2873, %v2871
        %v2932 = vpack.c.b16 %v2874, %v2872
        %v2933 = vpack.c.b16 %v2877, %v2875
        %v2934 = vpack.c.b16 %v2878, %v2876
        %v2935 = vpack.c.b16 %v2881, %v2879
        %v2936 = vpack.c.b16 %v2882, %v2880
        %v2937 = vpack.c.b16 %v2885, %v2883
        %v2938 = vpack.c.b16 %v2886, %v2884
        %v2939 = vpack.c.b16 %v2889, %v2887
        %v2940 = vpack.c.b16 %v2890, %v2888
        %v2941 = vpack.c.b16 %v2893, %v2891
        %v2942 = vpack.c.b16 %v2894, %v2892
        %v2943 = vpack.c.b16 %v2897, %v2895
        %v2944 = vpack.c.b16 %v2898, %v2896
        %v2945 = vpack.c.b16 %v2901, %v2899
        %v2946 = vpack.c.b16 %v2902, %v2900
        %v2947 = vpack.c.b16 %v2905, %v2903
        %v2948 = vpack.c.b16 %v2906, %v2904
        %v2949 = vpack.c.b16 %v2909, %v2907
        %v2950 = vpack.c.b16 %v2910, %v2908
        %v2951 = vpack.c.b16 %v2913, %v2911
        %v2952 = vpack.c.b16 %v2914, %v2912
        %v2953 = vpack.c.b16 %v2917, %v2915
        %v2954 = vpack.c.b16 %v2918, %v2916
        %v2955 = vpack.c.b16 %v2921, %v2919
        %v2956 = vpack.c.b16 %v2922, %v2920
        %v2957 = vpack.c.b16 %v2925, %v2923
        %v2958 = vpack.c.b16 %v2926, %v2924
        %2991 = vmatpush.bf16.msra.mxu0 %v2941
        %2992 = vmatpush.bf16.msra.mxu0 %v2939
        %2993 = vmatpush.bf16.msra.mxu0 %v2937
        %2994 = vmatpush.bf16.msra.mxu0 %v2935
        %2995 = vmatpush.bf16.msra.mxu0 %v2933
        %2996 = vmatpush.bf16.msra.mxu0 %v2931
        %2997 = vmatpush.bf16.msra.mxu0 %v2929
        %2998 = vmatpush.bf16.msra.mxu0 %v2927
        %2999 = vmatmul.bf16.gmra.mxu0 %v2818
        %v3000 = vpop.f32.mrf.mxu0
        %v3001 = vadd.f32 %v2827, %v3000
        %v3002 = vpop.f32.mrf.mxu0
        %v3003 = vadd.f32 %v2827, %v3002
        %3004 = vmatmul.bf16.gmra.mxu0 %v2820
        %v3005 = vpop.f32.mrf.mxu0
        %v3006 = vadd.f32 %v2827, %v3005
        %v3007 = vpop.f32.mrf.mxu0
        %v3008 = vadd.f32 %v2827, %v3007
        %3009 = vmatmul.bf16.gmra.mxu0 %v2822
        %v3010 = vpop.f32.mrf.mxu0
        %v3011 = vadd.f32 %v2827, %v3010
        %v3012 = vpop.f32.mrf.mxu0
        %v3013 = vadd.f32 %v2827, %v3012
        %3014 = vmatmul.bf16.gmra.mxu0 %v2824
        %v3015 = vpop.f32.mrf.mxu0
        %v3016 = vadd.f32 %v2827, %v3015
        %v3017 = vpop.f32.mrf.mxu0
        %v3018 = vadd.f32 %v2827, %v3017
        %3019 = vdwg.mxu0
        %3020 = vmatpush.bf16.msra.mxu0 %v2957
        %3021 = vmatpush.bf16.msra.mxu0 %v2955
        %3022 = vmatpush.bf16.msra.mxu0 %v2953
        %3023 = vmatpush.bf16.msra.mxu0 %v2951
        %3024 = vmatpush.bf16.msra.mxu0 %v2949
        %3025 = vmatpush.bf16.msra.mxu0 %v2947
        %3026 = vmatpush.bf16.msra.mxu0 %v2945
        %3027 = vmatpush.bf16.msra.mxu0 %v2943
        %3028 = vmatmul.bf16.gmra.mxu0 %v2819
        %v3029 = vpop.f32.mrf.mxu0
        %v3030 = vadd.f32 %v3001, %v3029
        %v3031 = vpop.f32.mrf.mxu0
        %v3032 = vadd.f32 %v3003, %v3031
        %3033 = vmatmul.bf16.gmra.mxu0 %v2821
        %v3034 = vpop.f32.mrf.mxu0
        %v3035 = vadd.f32 %v3006, %v3034
        %v3036 = vpop.f32.mrf.mxu0
        %v3037 = vadd.f32 %v3008, %v3036
        %3038 = vmatmul.bf16.gmra.mxu0 %v2823
        %v3039 = vpop.f32.mrf.mxu0
        %v3040 = vadd.f32 %v3011, %v3039
        %v3041 = vpop.f32.mrf.mxu0
        %v3042 = vadd.f32 %v3013, %v3041
        %3043 = vmatmul.bf16.gmra.mxu0 %v2825
        %v3044 = vpop.f32.mrf.mxu0
        %v3045 = vadd.f32 %v3016, %v3044
        %v3046 = vpop.f32.mrf.mxu0
        %v3047 = vadd.f32 %v3018, %v3046
        %3048 = vdwg.mxu0
        %3049 = vmatpush.bf16.msra.mxu0 %v2942
        %3050 = vmatpush.bf16.msra.mxu0 %v2940
        %3051 = vmatpush.bf16.msra.mxu0 %v2938
        %3052 = vmatpush.bf16.msra.mxu0 %v2936
        %3053 = vmatpush.bf16.msra.mxu0 %v2934
        %3054 = vmatpush.bf16.msra.mxu0 %v2932
        %3055 = vmatpush.bf16.msra.mxu0 %v2930
        %3056 = vmatpush.bf16.msra.mxu0 %v2928
        %3057 = vmatmul.bf16.gmra.mxu0 %v2818
        %v3058 = vpop.f32.mrf.mxu0
        %v3059 = vadd.f32 %v2828, %v3058
        %v3060 = vpop.f32.mrf.mxu0
        %v3061 = vadd.f32 %v2828, %v3060
        %3062 = vmatmul.bf16.gmra.mxu0 %v2820
        %v3063 = vpop.f32.mrf.mxu0
        %v3064 = vadd.f32 %v2828, %v3063
        %v3065 = vpop.f32.mrf.mxu0
        %v3066 = vadd.f32 %v2828, %v3065
        %3067 = vmatmul.bf16.gmra.mxu0 %v2822
        %v3068 = vpop.f32.mrf.mxu0
        %v3069 = vadd.f32 %v2828, %v3068
        %v3070 = vpop.f32.mrf.mxu0
        %v3071 = vadd.f32 %v2828, %v3070
        %3072 = vmatmul.bf16.gmra.mxu0 %v2824
        %v3073 = vpop.f32.mrf.mxu0
        %v3074 = vadd.f32 %v2828, %v3073
        %v3075 = vpop.f32.mrf.mxu0
        %v3076 = vadd.f32 %v2828, %v3075
        %3077 = vdwg.mxu0
        %3078 = vmatpush.bf16.msra.mxu0 %v2958
        %3079 = vmatpush.bf16.msra.mxu0 %v2956
        %3080 = vmatpush.bf16.msra.mxu0 %v2954
        %3081 = vmatpush.bf16.msra.mxu0 %v2952
        %3082 = vmatpush.bf16.msra.mxu0 %v2950
        %3083 = vmatpush.bf16.msra.mxu0 %v2948
        %3084 = vmatpush.bf16.msra.mxu0 %v2946
        %3085 = vmatpush.bf16.msra.mxu0 %v2944
        %3086 = vmatmul.bf16.gmra.mxu0 %v2819
        %v3087 = vpop.f32.mrf.mxu0
        %v3088 = vadd.f32 %v3059, %v3087
        %v3089 = vpop.f32.mrf.mxu0
        %v3090 = vadd.f32 %v3061, %v3089
        %3091 = vmatmul.bf16.gmra.mxu0 %v2821
        %v3092 = vpop.f32.mrf.mxu0
        %v3093 = vadd.f32 %v3064, %v3092
        %v3094 = vpop.f32.mrf.mxu0
        %v3095 = vadd.f32 %v3066, %v3094
        %3096 = vmatmul.bf16.gmra.mxu0 %v2823
        %v3097 = vpop.f32.mrf.mxu0
        %v3098 = vadd.f32 %v3069, %v3097
        %v3099 = vpop.f32.mrf.mxu0
        %v3100 = vadd.f32 %v3071, %v3099
        %3101 = vmatmul.bf16.gmra.mxu0 %v2825
        %v3102 = vpop.f32.mrf.mxu0
        %v3103 = vadd.f32 %v3074, %v3102
        %v3104 = vpop.f32.mrf.mxu0
        %v3105 = vadd.f32 %v3076, %v3104
        %3106 = vdwg.mxu0
        %vm3107 = vcmp.ge.f32.partialorder %v3030, 0.0
        %vm3108 = vcmp.ge.f32.partialorder %v3088, 0.0
        %vm3109 = vcmp.ge.f32.partialorder %v3032, 0.0
        %vm3110 = vcmp.ge.f32.partialorder %v3090, 0.0
        %vm3111 = vcmp.ge.f32.partialorder %v3035, 0.0
        %vm3112 = vcmp.ge.f32.partialorder %v3093, 0.0
        %vm3113 = vcmp.ge.f32.partialorder %v3037, 0.0
        %vm3114 = vcmp.ge.f32.partialorder %v3095, 0.0
        %vm3115 = vcmp.ge.f32.partialorder %v3040, 0.0
        %vm3116 = vcmp.ge.f32.partialorder %v3098, 0.0
        %vm3117 = vcmp.ge.f32.partialorder %v3042, 0.0
        %vm3118 = vcmp.ge.f32.partialorder %v3100, 0.0
        %vm3119 = vcmp.ge.f32.partialorder %v3045, 0.0
        %vm3120 = vcmp.ge.f32.partialorder %v3103, 0.0
        %vm3121 = vcmp.ge.f32.partialorder %v3047, 0.0
        %vm3122 = vcmp.ge.f32.partialorder %v3105, 0.0
        %v3123 = vmul.f32 %v3030, 0.01
        %v3124 = vmul.f32 %v3088, 0.01
        %v3125 = vmul.f32 %v3032, 0.01
        %v3126 = vmul.f32 %v3090, 0.01
        %v3127 = vmul.f32 %v3035, 0.01
        %v3128 = vmul.f32 %v3093, 0.01
        %v3129 = vmul.f32 %v3037, 0.01
        %v3130 = vmul.f32 %v3095, 0.01
        %v3131 = vmul.f32 %v3040, 0.01
        %v3132 = vmul.f32 %v3098, 0.01
        %v3133 = vmul.f32 %v3042, 0.01
        %v3134 = vmul.f32 %v3100, 0.01
        %v3135 = vmul.f32 %v3045, 0.01
        %v3136 = vmul.f32 %v3103, 0.01
        %v3137 = vmul.f32 %v3047, 0.01
        %v3138 = vmul.f32 %v3105, 0.01
        %v3139 = vsel %vm3107, %v3030, %v3123
        %v3140 = vsel %vm3108, %v3088, %v3124
        %v3141 = vsel %vm3109, %v3032, %v3125
        %v3142 = vsel %vm3110, %v3090, %v3126
        %v3143 = vsel %vm3111, %v3035, %v3127
        %v3144 = vsel %vm3112, %v3093, %v3128
        %v3145 = vsel %vm3113, %v3037, %v3129
        %v3146 = vsel %vm3114, %v3095, %v3130
        %v3147 = vsel %vm3115, %v3040, %v3131
        %v3148 = vsel %vm3116, %v3098, %v3132
        %v3149 = vsel %vm3117, %v3042, %v3133
        %v3150 = vsel %vm3118, %v3100, %v3134
        %v3151 = vsel %vm3119, %v3045, %v3135
        %v3152 = vsel %vm3120, %v3103, %v3136
        %v3153 = vsel %vm3121, %v3047, %v3137
        %v3154 = vsel %vm3122, %v3105, %v3138
        %s3155 = scalar_lea.vmem [#allocation2], 2048
        %v3156 = vld [vmem:[%s3155] sm:$0xff]
        %v3157 = vld [vmem:[%s3155 + $0x8] sm:$0xff]
        %v3158 = vld [vmem:[%s3155 + $0x10] sm:$0xff]
        %v3159 = vld [vmem:[%s3155 + $0x18] sm:$0xff]
        %v3160 = vld [vmem:[%s3155 + $0x20] sm:$0xff]
        %v3161 = vld [vmem:[%s3155 + $0x28] sm:$0xff]
        %v3162 = vld [vmem:[%s3155 + $0x30] sm:$0xff]
        %v3163 = vld [vmem:[%s3155 + $0x38] sm:$0xff]
        %v3164 = vld [vmem:[%s3155 + $0x40] sm:$0xff]
        %v3165 = vld [vmem:[%s3155 + $0x48] sm:$0xff]
        %v3166 = vld [vmem:[%s3155 + $0x50] sm:$0xff]
        %v3167 = vld [vmem:[%s3155 + $0x58] sm:$0xff]
        %v3168 = vld [vmem:[%s3155 + $0x60] sm:$0xff]
        %v3169 = vld [vmem:[%s3155 + $0x68] sm:$0xff]
        %v3170 = vld [vmem:[%s3155 + $0x70] sm:$0xff]
        %v3171 = vld [vmem:[%s3155 + $0x78] sm:$0xff]
        %v3172 = vld [vmem:[%s3155 + $0x80] sm:$0xff]
        %v3173 = vld [vmem:[%s3155 + $0x88] sm:$0xff]
        %v3174 = vld [vmem:[%s3155 + $0x90] sm:$0xff]
        %v3175 = vld [vmem:[%s3155 + $0x98] sm:$0xff]
        %v3176 = vld [vmem:[%s3155 + $0xa0] sm:$0xff]
        %v3177 = vld [vmem:[%s3155 + $0xa8] sm:$0xff]
        %v3178 = vld [vmem:[%s3155 + $0xb0] sm:$0xff]
        %v3179 = vld [vmem:[%s3155 + $0xb8] sm:$0xff]
        %v3180 = vld [vmem:[%s3155 + $0xc0] sm:$0xff]
        %v3181 = vld [vmem:[%s3155 + $0xc8] sm:$0xff]
        %v3182 = vld [vmem:[%s3155 + $0xd0] sm:$0xff]
        %v3183 = vld [vmem:[%s3155 + $0xd8] sm:$0xff]
        %v3184 = vld [vmem:[%s3155 + $0xe0] sm:$0xff]
        %v3185 = vld [vmem:[%s3155 + $0xe8] sm:$0xff]
        %v3186 = vld [vmem:[%s3155 + $0xf0] sm:$0xff]
        %v3187 = vld [vmem:[%s3155 + $0xf8] sm:$0xff]
        %s3188 = scalar_lea.vmem [#allocation4], 16
        %v3189 = vld [vmem:[%s3188] ss:$8 sm:$0x3]
        %v3190 = vpack.c.bf16 %v3141, %v3139
        %v3191 = vpack.c.bf16 %v3142, %v3140
        %v3192 = vpack.c.bf16 %v3145, %v3143
        %v3193 = vpack.c.bf16 %v3146, %v3144
        %v3194 = vpack.c.bf16 %v3149, %v3147
        %v3195 = vpack.c.bf16 %v3150, %v3148
        %v3196 = vpack.c.bf16 %v3153, %v3151
        %v3197 = vpack.c.bf16 %v3154, %v3152
        %v3199 = vperm.slane %v3189, 0
        %v3200 = vperm.slane %v3189, 1
        %v3235 = vunpack.c.l.b16 %v3156
        %v3236 = vunpack.c.h.b16 %v3156
        %v3237 = vunpack.c.l.b16 %v3157
        %v3238 = vunpack.c.h.b16 %v3157
        %v3239 = vunpack.c.l.b16 %v3158
        %v3240 = vunpack.c.h.b16 %v3158
        %v3241 = vunpack.c.l.b16 %v3159
        %v3242 = vunpack.c.h.b16 %v3159
        %v3243 = vunpack.c.l.b16 %v3160
        %v3244 = vunpack.c.h.b16 %v3160
        %v3245 = vunpack.c.l.b16 %v3161
        %v3246 = vunpack.c.h.b16 %v3161
        %v3247 = vunpack.c.l.b16 %v3162
        %v3248 = vunpack.c.h.b16 %v3162
        %v3249 = vunpack.c.l.b16 %v3163
        %v3250 = vunpack.c.h.b16 %v3163
        %v3251 = vunpack.c.l.b16 %v3164
        %v3252 = vunpack.c.h.b16 %v3164
        %v3253 = vunpack.c.l.b16 %v3165
        %v3254 = vunpack.c.h.b16 %v3165
        %v3255 = vunpack.c.l.b16 %v3166
        %v3256 = vunpack.c.h.b16 %v3166
        %v3257 = vunpack.c.l.b16 %v3167
        %v3258 = vunpack.c.h.b16 %v3167
        %v3259 = vunpack.c.l.b16 %v3168
        %v3260 = vunpack.c.h.b16 %v3168
        %v3261 = vunpack.c.l.b16 %v3169
        %v3262 = vunpack.c.h.b16 %v3169
        %v3263 = vunpack.c.l.b16 %v3170
        %v3264 = vunpack.c.h.b16 %v3170
        %v3265 = vunpack.c.l.b16 %v3171
        %v3266 = vunpack.c.h.b16 %v3171
        %v3267 = vunpack.c.l.b16 %v3172
        %v3268 = vunpack.c.h.b16 %v3172
        %v3269 = vunpack.c.l.b16 %v3173
        %v3270 = vunpack.c.h.b16 %v3173
        %v3271 = vunpack.c.l.b16 %v3174
        %v3272 = vunpack.c.h.b16 %v3174
        %v3273 = vunpack.c.l.b16 %v3175
        %v3274 = vunpack.c.h.b16 %v3175
        %v3275 = vunpack.c.l.b16 %v3176
        %v3276 = vunpack.c.h.b16 %v3176
        %v3277 = vunpack.c.l.b16 %v3177
        %v3278 = vunpack.c.h.b16 %v3177
        %v3279 = vunpack.c.l.b16 %v3178
        %v3280 = vunpack.c.h.b16 %v3178
        %v3281 = vunpack.c.l.b16 %v3179
        %v3282 = vunpack.c.h.b16 %v3179
        %v3283 = vunpack.c.l.b16 %v3180
        %v3284 = vunpack.c.h.b16 %v3180
        %v3285 = vunpack.c.l.b16 %v3181
        %v3286 = vunpack.c.h.b16 %v3181
        %v3287 = vunpack.c.l.b16 %v3182
        %v3288 = vunpack.c.h.b16 %v3182
        %v3289 = vunpack.c.l.b16 %v3183
        %v3290 = vunpack.c.h.b16 %v3183
        %v3291 = vunpack.c.l.b16 %v3184
        %v3292 = vunpack.c.h.b16 %v3184
        %v3293 = vunpack.c.l.b16 %v3185
        %v3294 = vunpack.c.h.b16 %v3185
        %v3295 = vunpack.c.l.b16 %v3186
        %v3296 = vunpack.c.h.b16 %v3186
        %v3297 = vunpack.c.l.b16 %v3187
        %v3298 = vunpack.c.h.b16 %v3187
        %v3299 = vpack.c.b16 %v3237, %v3235
        %v3300 = vpack.c.b16 %v3238, %v3236
        %v3301 = vpack.c.b16 %v3241, %v3239
        %v3302 = vpack.c.b16 %v3242, %v3240
        %v3303 = vpack.c.b16 %v3245, %v3243
        %v3304 = vpack.c.b16 %v3246, %v3244
        %v3305 = vpack.c.b16 %v3249, %v3247
        %v3306 = vpack.c.b16 %v3250, %v3248
        %v3307 = vpack.c.b16 %v3253, %v3251
        %v3308 = vpack.c.b16 %v3254, %v3252
        %v3309 = vpack.c.b16 %v3257, %v3255
        %v3310 = vpack.c.b16 %v3258, %v3256
        %v3311 = vpack.c.b16 %v3261, %v3259
        %v3312 = vpack.c.b16 %v3262, %v3260
        %v3313 = vpack.c.b16 %v3265, %v3263
        %v3314 = vpack.c.b16 %v3266, %v3264
        %v3315 = vpack.c.b16 %v3269, %v3267
        %v3316 = vpack.c.b16 %v3270, %v3268
        %v3317 = vpack.c.b16 %v3273, %v3271
        %v3318 = vpack.c.b16 %v3274, %v3272
        %v3319 = vpack.c.b16 %v3277, %v3275
        %v3320 = vpack.c.b16 %v3278, %v3276
        %v3321 = vpack.c.b16 %v3281, %v3279
        %v3322 = vpack.c.b16 %v3282, %v3280
        %v3323 = vpack.c.b16 %v3285, %v3283
        %v3324 = vpack.c.b16 %v3286, %v3284
        %v3325 = vpack.c.b16 %v3289, %v3287
        %v3326 = vpack.c.b16 %v3290, %v3288
        %v3327 = vpack.c.b16 %v3293, %v3291
        %v3328 = vpack.c.b16 %v3294, %v3292
        %v3329 = vpack.c.b16 %v3297, %v3295
        %v3330 = vpack.c.b16 %v3298, %v3296
        %3363 = vmatpush.bf16.msra.mxu0 %v3313
        %3364 = vmatpush.bf16.msra.mxu0 %v3311
        %3365 = vmatpush.bf16.msra.mxu0 %v3309
        %3366 = vmatpush.bf16.msra.mxu0 %v3307
        %3367 = vmatpush.bf16.msra.mxu0 %v3305
        %3368 = vmatpush.bf16.msra.mxu0 %v3303
        %3369 = vmatpush.bf16.msra.mxu0 %v3301
        %3370 = vmatpush.bf16.msra.mxu0 %v3299
        %3371 = vmatmul.bf16.gmra.mxu0 %v3190
        %v3372 = vpop.f32.mrf.mxu0
        %v3373 = vadd.f32 %v3199, %v3372
        %v3374 = vpop.f32.mrf.mxu0
        %v3375 = vadd.f32 %v3199, %v3374
        %3376 = vmatmul.bf16.gmra.mxu0 %v3192
        %v3377 = vpop.f32.mrf.mxu0
        %v3378 = vadd.f32 %v3199, %v3377
        %v3379 = vpop.f32.mrf.mxu0
        %v3380 = vadd.f32 %v3199, %v3379
        %3381 = vmatmul.bf16.gmra.mxu0 %v3194
        %v3382 = vpop.f32.mrf.mxu0
        %v3383 = vadd.f32 %v3199, %v3382
        %v3384 = vpop.f32.mrf.mxu0
        %v3385 = vadd.f32 %v3199, %v3384
        %3386 = vmatmul.bf16.gmra.mxu0 %v3196
        %v3387 = vpop.f32.mrf.mxu0
        %v3388 = vadd.f32 %v3199, %v3387
        %v3389 = vpop.f32.mrf.mxu0
        %v3390 = vadd.f32 %v3199, %v3389
        %3391 = vdwg.mxu0
        %3392 = vmatpush.bf16.msra.mxu0 %v3329
        %3393 = vmatpush.bf16.msra.mxu0 %v3327
        %3394 = vmatpush.bf16.msra.mxu0 %v3325
        %3395 = vmatpush.bf16.msra.mxu0 %v3323
        %3396 = vmatpush.bf16.msra.mxu0 %v3321
        %3397 = vmatpush.bf16.msra.mxu0 %v3319
        %3398 = vmatpush.bf16.msra.mxu0 %v3317
        %3399 = vmatpush.bf16.msra.mxu0 %v3315
        %3400 = vmatmul.bf16.gmra.mxu0 %v3191
        %v3401 = vpop.f32.mrf.mxu0
        %v3402 = vadd.f32 %v3373, %v3401
        %v3403 = vpop.f32.mrf.mxu0
        %v3404 = vadd.f32 %v3375, %v3403
        %3405 = vmatmul.bf16.gmra.mxu0 %v3193
        %v3406 = vpop.f32.mrf.mxu0
        %v3407 = vadd.f32 %v3378, %v3406
        %v3408 = vpop.f32.mrf.mxu0
        %v3409 = vadd.f32 %v3380, %v3408
        %3410 = vmatmul.bf16.gmra.mxu0 %v3195
        %v3411 = vpop.f32.mrf.mxu0
        %v3412 = vadd.f32 %v3383, %v3411
        %v3413 = vpop.f32.mrf.mxu0
        %v3414 = vadd.f32 %v3385, %v3413
        %3415 = vmatmul.bf16.gmra.mxu0 %v3197
        %v3416 = vpop.f32.mrf.mxu0
        %v3417 = vadd.f32 %v3388, %v3416
        %v3418 = vpop.f32.mrf.mxu0
        %v3419 = vadd.f32 %v3390, %v3418
        %3420 = vdwg.mxu0
        %3421 = vmatpush.bf16.msra.mxu0 %v3314
        %3422 = vmatpush.bf16.msra.mxu0 %v3312
        %3423 = vmatpush.bf16.msra.mxu0 %v3310
        %3424 = vmatpush.bf16.msra.mxu0 %v3308
        %3425 = vmatpush.bf16.msra.mxu0 %v3306
        %3426 = vmatpush.bf16.msra.mxu0 %v3304
        %3427 = vmatpush.bf16.msra.mxu0 %v3302
        %3428 = vmatpush.bf16.msra.mxu0 %v3300
        %3429 = vmatmul.bf16.gmra.mxu0 %v3190
        %v3430 = vpop.f32.mrf.mxu0
        %v3431 = vadd.f32 %v3200, %v3430
        %v3432 = vpop.f32.mrf.mxu0
        %v3433 = vadd.f32 %v3200, %v3432
        %3434 = vmatmul.bf16.gmra.mxu0 %v3192
        %v3435 = vpop.f32.mrf.mxu0
        %v3436 = vadd.f32 %v3200, %v3435
        %v3437 = vpop.f32.mrf.mxu0
        %v3438 = vadd.f32 %v3200, %v3437
        %3439 = vmatmul.bf16.gmra.mxu0 %v3194
        %v3440 = vpop.f32.mrf.mxu0
        %v3441 = vadd.f32 %v3200, %v3440
        %v3442 = vpop.f32.mrf.mxu0
        %v3443 = vadd.f32 %v3200, %v3442
        %3444 = vmatmul.bf16.gmra.mxu0 %v3196
        %v3445 = vpop.f32.mrf.mxu0
        %v3446 = vadd.f32 %v3200, %v3445
        %v3447 = vpop.f32.mrf.mxu0
        %v3448 = vadd.f32 %v3200, %v3447
        %3449 = vdwg.mxu0
        %3450 = vmatpush.bf16.msra.mxu0 %v3330
        %3451 = vmatpush.bf16.msra.mxu0 %v3328
        %3452 = vmatpush.bf16.msra.mxu0 %v3326
        %3453 = vmatpush.bf16.msra.mxu0 %v3324
        %3454 = vmatpush.bf16.msra.mxu0 %v3322
        %3455 = vmatpush.bf16.msra.mxu0 %v3320
        %3456 = vmatpush.bf16.msra.mxu0 %v3318
        %3457 = vmatpush.bf16.msra.mxu0 %v3316
        %3458 = vmatmul.bf16.gmra.mxu0 %v3191
        %v3459 = vpop.f32.mrf.mxu0
        %v3460 = vadd.f32 %v3431, %v3459
        %v3461 = vpop.f32.mrf.mxu0
        %v3462 = vadd.f32 %v3433, %v3461
        %3463 = vmatmul.bf16.gmra.mxu0 %v3193
        %v3464 = vpop.f32.mrf.mxu0
        %v3465 = vadd.f32 %v3436, %v3464
        %v3466 = vpop.f32.mrf.mxu0
        %v3467 = vadd.f32 %v3438, %v3466
        %3468 = vmatmul.bf16.gmra.mxu0 %v3195
        %v3469 = vpop.f32.mrf.mxu0
        %v3470 = vadd.f32 %v3441, %v3469
        %v3471 = vpop.f32.mrf.mxu0
        %v3472 = vadd.f32 %v3443, %v3471
        %3473 = vmatmul.bf16.gmra.mxu0 %v3197
        %v3474 = vpop.f32.mrf.mxu0
        %v3475 = vadd.f32 %v3446, %v3474
        %v3476 = vpop.f32.mrf.mxu0
        %v3477 = vadd.f32 %v3448, %v3476
        %3478 = vdwg.mxu0
        %vm3479 = vcmp.ge.f32.partialorder %v3402, 0.0
        %vm3480 = vcmp.ge.f32.partialorder %v3460, 0.0
        %vm3481 = vcmp.ge.f32.partialorder %v3404, 0.0
        %vm3482 = vcmp.ge.f32.partialorder %v3462, 0.0
        %vm3483 = vcmp.ge.f32.partialorder %v3407, 0.0
        %vm3484 = vcmp.ge.f32.partialorder %v3465, 0.0
        %vm3485 = vcmp.ge.f32.partialorder %v3409, 0.0
        %vm3486 = vcmp.ge.f32.partialorder %v3467, 0.0
        %vm3487 = vcmp.ge.f32.partialorder %v3412, 0.0
        %vm3488 = vcmp.ge.f32.partialorder %v3470, 0.0
        %vm3489 = vcmp.ge.f32.partialorder %v3414, 0.0
        %vm3490 = vcmp.ge.f32.partialorder %v3472, 0.0
        %vm3491 = vcmp.ge.f32.partialorder %v3417, 0.0
        %vm3492 = vcmp.ge.f32.partialorder %v3475, 0.0
        %vm3493 = vcmp.ge.f32.partialorder %v3419, 0.0
        %vm3494 = vcmp.ge.f32.partialorder %v3477, 0.0
        %v3495 = vmul.f32 %v3402, 0.01
        %v3496 = vmul.f32 %v3460, 0.01
        %v3497 = vmul.f32 %v3404, 0.01
        %v3498 = vmul.f32 %v3462, 0.01
        %v3499 = vmul.f32 %v3407, 0.01
        %v3500 = vmul.f32 %v3465, 0.01
        %v3501 = vmul.f32 %v3409, 0.01
        %v3502 = vmul.f32 %v3467, 0.01
        %v3503 = vmul.f32 %v3412, 0.01
        %v3504 = vmul.f32 %v3470, 0.01
        %v3505 = vmul.f32 %v3414, 0.01
        %v3506 = vmul.f32 %v3472, 0.01
        %v3507 = vmul.f32 %v3417, 0.01
        %v3508 = vmul.f32 %v3475, 0.01
        %v3509 = vmul.f32 %v3419, 0.01
        %v3510 = vmul.f32 %v3477, 0.01
        %v3511 = vsel %vm3479, %v3402, %v3495
        %v3512 = vsel %vm3480, %v3460, %v3496
        %v3513 = vsel %vm3481, %v3404, %v3497
        %v3514 = vsel %vm3482, %v3462, %v3498
        %v3515 = vsel %vm3483, %v3407, %v3499
        %v3516 = vsel %vm3484, %v3465, %v3500
        %v3517 = vsel %vm3485, %v3409, %v3501
        %v3518 = vsel %vm3486, %v3467, %v3502
        %v3519 = vsel %vm3487, %v3412, %v3503
        %v3520 = vsel %vm3488, %v3470, %v3504
        %v3521 = vsel %vm3489, %v3414, %v3505
        %v3522 = vsel %vm3490, %v3472, %v3506
        %v3523 = vsel %vm3491, %v3417, %v3507
        %v3524 = vsel %vm3492, %v3475, %v3508
        %v3525 = vsel %vm3493, %v3419, %v3509
        %v3526 = vsel %vm3494, %v3477, %v3510
        %s3527 = scalar_lea.vmem [#allocation2], 2304
        %v3528 = vld [vmem:[%s3527] sm:$0xff]
        %v3529 = vld [vmem:[%s3527 + $0x8] sm:$0xff]
        %v3530 = vld [vmem:[%s3527 + $0x10] sm:$0xff]
        %v3531 = vld [vmem:[%s3527 + $0x18] sm:$0xff]
        %v3532 = vld [vmem:[%s3527 + $0x20] sm:$0xff]
        %v3533 = vld [vmem:[%s3527 + $0x28] sm:$0xff]
        %v3534 = vld [vmem:[%s3527 + $0x30] sm:$0xff]
        %v3535 = vld [vmem:[%s3527 + $0x38] sm:$0xff]
        %v3536 = vld [vmem:[%s3527 + $0x40] sm:$0xff]
        %v3537 = vld [vmem:[%s3527 + $0x48] sm:$0xff]
        %v3538 = vld [vmem:[%s3527 + $0x50] sm:$0xff]
        %v3539 = vld [vmem:[%s3527 + $0x58] sm:$0xff]
        %v3540 = vld [vmem:[%s3527 + $0x60] sm:$0xff]
        %v3541 = vld [vmem:[%s3527 + $0x68] sm:$0xff]
        %v3542 = vld [vmem:[%s3527 + $0x70] sm:$0xff]
        %v3543 = vld [vmem:[%s3527 + $0x78] sm:$0xff]
        %v3544 = vld [vmem:[%s3527 + $0x80] sm:$0xff]
        %v3545 = vld [vmem:[%s3527 + $0x88] sm:$0xff]
        %v3546 = vld [vmem:[%s3527 + $0x90] sm:$0xff]
        %v3547 = vld [vmem:[%s3527 + $0x98] sm:$0xff]
        %v3548 = vld [vmem:[%s3527 + $0xa0] sm:$0xff]
        %v3549 = vld [vmem:[%s3527 + $0xa8] sm:$0xff]
        %v3550 = vld [vmem:[%s3527 + $0xb0] sm:$0xff]
        %v3551 = vld [vmem:[%s3527 + $0xb8] sm:$0xff]
        %v3552 = vld [vmem:[%s3527 + $0xc0] sm:$0xff]
        %v3553 = vld [vmem:[%s3527 + $0xc8] sm:$0xff]
        %v3554 = vld [vmem:[%s3527 + $0xd0] sm:$0xff]
        %v3555 = vld [vmem:[%s3527 + $0xd8] sm:$0xff]
        %v3556 = vld [vmem:[%s3527 + $0xe0] sm:$0xff]
        %v3557 = vld [vmem:[%s3527 + $0xe8] sm:$0xff]
        %v3558 = vld [vmem:[%s3527 + $0xf0] sm:$0xff]
        %v3559 = vld [vmem:[%s3527 + $0xf8] sm:$0xff]
        %s3560 = scalar_lea.vmem [#allocation4], 17
        %v3561 = vld [vmem:[%s3560] ss:$8 sm:$0x3]
        %v3562 = vpack.c.bf16 %v3513, %v3511
        %v3563 = vpack.c.bf16 %v3514, %v3512
        %v3564 = vpack.c.bf16 %v3517, %v3515
        %v3565 = vpack.c.bf16 %v3518, %v3516
        %v3566 = vpack.c.bf16 %v3521, %v3519
        %v3567 = vpack.c.bf16 %v3522, %v3520
        %v3568 = vpack.c.bf16 %v3525, %v3523
        %v3569 = vpack.c.bf16 %v3526, %v3524
        %v3571 = vperm.slane %v3561, 0
        %v3572 = vperm.slane %v3561, 1
        %v3607 = vunpack.c.l.b16 %v3528
        %v3608 = vunpack.c.h.b16 %v3528
        %v3609 = vunpack.c.l.b16 %v3529
        %v3610 = vunpack.c.h.b16 %v3529
        %v3611 = vunpack.c.l.b16 %v3530
        %v3612 = vunpack.c.h.b16 %v3530
        %v3613 = vunpack.c.l.b16 %v3531
        %v3614 = vunpack.c.h.b16 %v3531
        %v3615 = vunpack.c.l.b16 %v3532
        %v3616 = vunpack.c.h.b16 %v3532
        %v3617 = vunpack.c.l.b16 %v3533
        %v3618 = vunpack.c.h.b16 %v3533
        %v3619 = vunpack.c.l.b16 %v3534
        %v3620 = vunpack.c.h.b16 %v3534
        %v3621 = vunpack.c.l.b16 %v3535
        %v3622 = vunpack.c.h.b16 %v3535
        %v3623 = vunpack.c.l.b16 %v3536
        %v3624 = vunpack.c.h.b16 %v3536
        %v3625 = vunpack.c.l.b16 %v3537
        %v3626 = vunpack.c.h.b16 %v3537
        %v3627 = vunpack.c.l.b16 %v3538
        %v3628 = vunpack.c.h.b16 %v3538
        %v3629 = vunpack.c.l.b16 %v3539
        %v3630 = vunpack.c.h.b16 %v3539
        %v3631 = vunpack.c.l.b16 %v3540
        %v3632 = vunpack.c.h.b16 %v3540
        %v3633 = vunpack.c.l.b16 %v3541
        %v3634 = vunpack.c.h.b16 %v3541
        %v3635 = vunpack.c.l.b16 %v3542
        %v3636 = vunpack.c.h.b16 %v3542
        %v3637 = vunpack.c.l.b16 %v3543
        %v3638 = vunpack.c.h.b16 %v3543
        %v3639 = vunpack.c.l.b16 %v3544
        %v3640 = vunpack.c.h.b16 %v3544
        %v3641 = vunpack.c.l.b16 %v3545
        %v3642 = vunpack.c.h.b16 %v3545
        %v3643 = vunpack.c.l.b16 %v3546
        %v3644 = vunpack.c.h.b16 %v3546
        %v3645 = vunpack.c.l.b16 %v3547
        %v3646 = vunpack.c.h.b16 %v3547
        %v3647 = vunpack.c.l.b16 %v3548
        %v3648 = vunpack.c.h.b16 %v3548
        %v3649 = vunpack.c.l.b16 %v3549
        %v3650 = vunpack.c.h.b16 %v3549
        %v3651 = vunpack.c.l.b16 %v3550
        %v3652 = vunpack.c.h.b16 %v3550
        %v3653 = vunpack.c.l.b16 %v3551
        %v3654 = vunpack.c.h.b16 %v3551
        %v3655 = vunpack.c.l.b16 %v3552
        %v3656 = vunpack.c.h.b16 %v3552
        %v3657 = vunpack.c.l.b16 %v3553
        %v3658 = vunpack.c.h.b16 %v3553
        %v3659 = vunpack.c.l.b16 %v3554
        %v3660 = vunpack.c.h.b16 %v3554
        %v3661 = vunpack.c.l.b16 %v3555
        %v3662 = vunpack.c.h.b16 %v3555
        %v3663 = vunpack.c.l.b16 %v3556
        %v3664 = vunpack.c.h.b16 %v3556
        %v3665 = vunpack.c.l.b16 %v3557
        %v3666 = vunpack.c.h.b16 %v3557
        %v3667 = vunpack.c.l.b16 %v3558
        %v3668 = vunpack.c.h.b16 %v3558
        %v3669 = vunpack.c.l.b16 %v3559
        %v3670 = vunpack.c.h.b16 %v3559
        %v3671 = vpack.c.b16 %v3609, %v3607
        %v3672 = vpack.c.b16 %v3610, %v3608
        %v3673 = vpack.c.b16 %v3613, %v3611
        %v3674 = vpack.c.b16 %v3614, %v3612
        %v3675 = vpack.c.b16 %v3617, %v3615
        %v3676 = vpack.c.b16 %v3618, %v3616
        %v3677 = vpack.c.b16 %v3621, %v3619
        %v3678 = vpack.c.b16 %v3622, %v3620
        %v3679 = vpack.c.b16 %v3625, %v3623
        %v3680 = vpack.c.b16 %v3626, %v3624
        %v3681 = vpack.c.b16 %v3629, %v3627
        %v3682 = vpack.c.b16 %v3630, %v3628
        %v3683 = vpack.c.b16 %v3633, %v3631
        %v3684 = vpack.c.b16 %v3634, %v3632
        %v3685 = vpack.c.b16 %v3637, %v3635
        %v3686 = vpack.c.b16 %v3638, %v3636
        %v3687 = vpack.c.b16 %v3641, %v3639
        %v3688 = vpack.c.b16 %v3642, %v3640
        %v3689 = vpack.c.b16 %v3645, %v3643
        %v3690 = vpack.c.b16 %v3646, %v3644
        %v3691 = vpack.c.b16 %v3649, %v3647
        %v3692 = vpack.c.b16 %v3650, %v3648
        %v3693 = vpack.c.b16 %v3653, %v3651
        %v3694 = vpack.c.b16 %v3654, %v3652
        %v3695 = vpack.c.b16 %v3657, %v3655
        %v3696 = vpack.c.b16 %v3658, %v3656
        %v3697 = vpack.c.b16 %v3661, %v3659
        %v3698 = vpack.c.b16 %v3662, %v3660
        %v3699 = vpack.c.b16 %v3665, %v3663
        %v3700 = vpack.c.b16 %v3666, %v3664
        %v3701 = vpack.c.b16 %v3669, %v3667
        %v3702 = vpack.c.b16 %v3670, %v3668
        %3735 = vmatpush.bf16.msra.mxu0 %v3685
        %3736 = vmatpush.bf16.msra.mxu0 %v3683
        %3737 = vmatpush.bf16.msra.mxu0 %v3681
        %3738 = vmatpush.bf16.msra.mxu0 %v3679
        %3739 = vmatpush.bf16.msra.mxu0 %v3677
        %3740 = vmatpush.bf16.msra.mxu0 %v3675
        %3741 = vmatpush.bf16.msra.mxu0 %v3673
        %3742 = vmatpush.bf16.msra.mxu0 %v3671
        %3743 = vmatmul.bf16.gmra.mxu0 %v3562
        %v3744 = vpop.f32.mrf.mxu0
        %v3745 = vadd.f32 %v3571, %v3744
        %v3746 = vpop.f32.mrf.mxu0
        %v3747 = vadd.f32 %v3571, %v3746
        %3748 = vmatmul.bf16.gmra.mxu0 %v3564
        %v3749 = vpop.f32.mrf.mxu0
        %v3750 = vadd.f32 %v3571, %v3749
        %v3751 = vpop.f32.mrf.mxu0
        %v3752 = vadd.f32 %v3571, %v3751
        %3753 = vmatmul.bf16.gmra.mxu0 %v3566
        %v3754 = vpop.f32.mrf.mxu0
        %v3755 = vadd.f32 %v3571, %v3754
        %v3756 = vpop.f32.mrf.mxu0
        %v3757 = vadd.f32 %v3571, %v3756
        %3758 = vmatmul.bf16.gmra.mxu0 %v3568
        %v3759 = vpop.f32.mrf.mxu0
        %v3760 = vadd.f32 %v3571, %v3759
        %v3761 = vpop.f32.mrf.mxu0
        %v3762 = vadd.f32 %v3571, %v3761
        %3763 = vdwg.mxu0
        %3764 = vmatpush.bf16.msra.mxu0 %v3701
        %3765 = vmatpush.bf16.msra.mxu0 %v3699
        %3766 = vmatpush.bf16.msra.mxu0 %v3697
        %3767 = vmatpush.bf16.msra.mxu0 %v3695
        %3768 = vmatpush.bf16.msra.mxu0 %v3693
        %3769 = vmatpush.bf16.msra.mxu0 %v3691
        %3770 = vmatpush.bf16.msra.mxu0 %v3689
        %3771 = vmatpush.bf16.msra.mxu0 %v3687
        %3772 = vmatmul.bf16.gmra.mxu0 %v3563
        %v3773 = vpop.f32.mrf.mxu0
        %v3774 = vadd.f32 %v3745, %v3773
        %v3775 = vpop.f32.mrf.mxu0
        %v3776 = vadd.f32 %v3747, %v3775
        %3777 = vmatmul.bf16.gmra.mxu0 %v3565
        %v3778 = vpop.f32.mrf.mxu0
        %v3779 = vadd.f32 %v3750, %v3778
        %v3780 = vpop.f32.mrf.mxu0
        %v3781 = vadd.f32 %v3752, %v3780
        %3782 = vmatmul.bf16.gmra.mxu0 %v3567
        %v3783 = vpop.f32.mrf.mxu0
        %v3784 = vadd.f32 %v3755, %v3783
        %v3785 = vpop.f32.mrf.mxu0
        %v3786 = vadd.f32 %v3757, %v3785
        %3787 = vmatmul.bf16.gmra.mxu0 %v3569
        %v3788 = vpop.f32.mrf.mxu0
        %v3789 = vadd.f32 %v3760, %v3788
        %v3790 = vpop.f32.mrf.mxu0
        %v3791 = vadd.f32 %v3762, %v3790
        %3792 = vdwg.mxu0
        %3793 = vmatpush.bf16.msra.mxu0 %v3686
        %3794 = vmatpush.bf16.msra.mxu0 %v3684
        %3795 = vmatpush.bf16.msra.mxu0 %v3682
        %3796 = vmatpush.bf16.msra.mxu0 %v3680
        %3797 = vmatpush.bf16.msra.mxu0 %v3678
        %3798 = vmatpush.bf16.msra.mxu0 %v3676
        %3799 = vmatpush.bf16.msra.mxu0 %v3674
        %3800 = vmatpush.bf16.msra.mxu0 %v3672
        %3801 = vmatmul.bf16.gmra.mxu0 %v3562
        %v3802 = vpop.f32.mrf.mxu0
        %v3803 = vadd.f32 %v3572, %v3802
        %v3804 = vpop.f32.mrf.mxu0
        %v3805 = vadd.f32 %v3572, %v3804
        %3806 = vmatmul.bf16.gmra.mxu0 %v3564
        %v3807 = vpop.f32.mrf.mxu0
        %v3808 = vadd.f32 %v3572, %v3807
        %v3809 = vpop.f32.mrf.mxu0
        %v3810 = vadd.f32 %v3572, %v3809
        %3811 = vmatmul.bf16.gmra.mxu0 %v3566
        %v3812 = vpop.f32.mrf.mxu0
        %v3813 = vadd.f32 %v3572, %v3812
        %v3814 = vpop.f32.mrf.mxu0
        %v3815 = vadd.f32 %v3572, %v3814
        %3816 = vmatmul.bf16.gmra.mxu0 %v3568
        %v3817 = vpop.f32.mrf.mxu0
        %v3818 = vadd.f32 %v3572, %v3817
        %v3819 = vpop.f32.mrf.mxu0
        %v3820 = vadd.f32 %v3572, %v3819
        %3821 = vdwg.mxu0
        %3822 = vmatpush.bf16.msra.mxu0 %v3702
        %3823 = vmatpush.bf16.msra.mxu0 %v3700
        %3824 = vmatpush.bf16.msra.mxu0 %v3698
        %3825 = vmatpush.bf16.msra.mxu0 %v3696
        %3826 = vmatpush.bf16.msra.mxu0 %v3694
        %3827 = vmatpush.bf16.msra.mxu0 %v3692
        %3828 = vmatpush.bf16.msra.mxu0 %v3690
        %3829 = vmatpush.bf16.msra.mxu0 %v3688
        %3830 = vmatmul.bf16.gmra.mxu0 %v3563
        %v3831 = vpop.f32.mrf.mxu0
        %v3832 = vadd.f32 %v3803, %v3831
        %v3833 = vpop.f32.mrf.mxu0
        %v3834 = vadd.f32 %v3805, %v3833
        %3835 = vmatmul.bf16.gmra.mxu0 %v3565
        %v3836 = vpop.f32.mrf.mxu0
        %v3837 = vadd.f32 %v3808, %v3836
        %v3838 = vpop.f32.mrf.mxu0
        %v3839 = vadd.f32 %v3810, %v3838
        %3840 = vmatmul.bf16.gmra.mxu0 %v3567
        %v3841 = vpop.f32.mrf.mxu0
        %v3842 = vadd.f32 %v3813, %v3841
        %v3843 = vpop.f32.mrf.mxu0
        %v3844 = vadd.f32 %v3815, %v3843
        %3845 = vmatmul.bf16.gmra.mxu0 %v3569
        %v3846 = vpop.f32.mrf.mxu0
        %v3847 = vadd.f32 %v3818, %v3846
        %v3848 = vpop.f32.mrf.mxu0
        %v3849 = vadd.f32 %v3820, %v3848
        %3850 = vdwg.mxu0
        %v3851 = vtanh.pop %v3774
        %v3852 = vtanh.pop %v3832
        %v3853 = vtanh.pop %v3776
        %v3854 = vtanh.pop %v3834
        %v3855 = vtanh.pop %v3779
        %v3856 = vtanh.pop %v3837
        %v3857 = vtanh.pop %v3781
        %v3858 = vtanh.pop %v3839
        %v3859 = vtanh.pop %v3784
        %v3860 = vtanh.pop %v3842
        %v3861 = vtanh.pop %v3786
        %v3862 = vtanh.pop %v3844
        %v3863 = vtanh.pop %v3789
        %v3864 = vtanh.pop %v3847
        %v3865 = vtanh.pop %v3791
        %v3866 = vtanh.pop %v3849
        %3867 = vst [vmem:[%s211] sm:$0xff] %v3851
        %3868 = vst [vmem:[%s211 + $0x8] sm:$0xff] %v3852
        %3869 = vst [vmem:[%s211 + $0x10] sm:$0xff] %v3853
        %3870 = vst [vmem:[%s211 + $0x18] sm:$0xff] %v3854
        %3871 = vst [vmem:[%s211 + $0x20] sm:$0xff] %v3855
        %3872 = vst [vmem:[%s211 + $0x28] sm:$0xff] %v3856
        %3873 = vst [vmem:[%s211 + $0x30] sm:$0xff] %v3857
        %3874 = vst [vmem:[%s211 + $0x38] sm:$0xff] %v3858
        %3875 = vst [vmem:[%s211 + $0x40] sm:$0xff] %v3859
        %3876 = vst [vmem:[%s211 + $0x48] sm:$0xff] %v3860
        %3877 = vst [vmem:[%s211 + $0x50] sm:$0xff] %v3861
        %3878 = vst [vmem:[%s211 + $0x58] sm:$0xff] %v3862
        %3879 = vst [vmem:[%s211 + $0x60] sm:$0xff] %v3863
        %3880 = vst [vmem:[%s211 + $0x68] sm:$0xff] %v3864
        %3881 = vst [vmem:[%s211 + $0x70] sm:$0xff] %v3865
        %3882 = vst [vmem:[%s211 + $0x78] sm:$0xff] %v3866
        %s3883 = smul.u32 8, %s16
        %p3884 = scmp.lt.s32.totalorder %s3883, 15
        %s3885 = scalar_select %p3884, %s3883, 15
        %s3886 = smul.addr %s3885, 2
        %s3887 = smul.addr %s3886, 8
        %s3888 = scalar_lea.vmem %s3, %s3887
        // Predicated region
        $region41: #{ae_forward.1} parent=31 // pred_check
          %p3889 = pneg %p102
        $region42: #{ae_forward.1} parent=31 // pred_check_branch
          %3891 = sbr.rel (%p3889) target = $region44
        $region43: #{ae_forward.1} parent=31 // pred_region
          %s3892 = smul.u32 8, %s16
        $region44: #{ae_forward.1} parent=31 // pred_fallthru
          _
      $region32: #{ae_forward.1} parent=5 // pred_fallthru
        _
      %p3893 = scmp.le.s32.totalorder 2, %s11
      // Predicated region
      $region45: #{ae_forward.1} parent=5 // pred_check
        %p3894 = pneg %p3893
      $region46: #{ae_forward.1} parent=5 // pred_check_branch
        %3896 = sbr.rel (%p3894) target = $region48
      $region47: #{ae_forward.1} parent=5 // pred_region
        %s3897 = ssub.s32 %s11, 2
        // Predicated region
        $region49: #{ae_forward.1} parent=47 // pred_check
          %p3898 = pneg %p108
        $region50: #{ae_forward.1} parent=47 // pred_check_branch
          %3900 = sbr.rel (%p3898) target = $region52
        $region51: #{ae_forward.1} parent=47 // pred_region
          %s3901 = smul.u32 8, %s17
          %p3902 = scmp.lt.s32.totalorder %s3901, 15
          %s3903 = scalar_select %p3902, %s3901, 15
          %s3904 = smul.addr %s3903, 2
          %s3905 = smul.addr %s3904, 8
          %s3906 = scalar_lea.vmem %s3, %s3905
        $region52: #{ae_forward.1} parent=47 // pred_fallthru
          _
      $region48: #{ae_forward.1} parent=5 // pred_fallthru
        _
    $region6: #{ae_forward.1} parent=1 // loop_footer
      %s15 = sadd.s32 1, %s11
    $region7: #{ae_forward.1} parent=1 // loop_footer_branch
      %10 = sbr.rel target = $region3
    $region8: #{ae_forward.1} parent=1 // loop_exit
      _
    %3907 = vsyncpa [#allocation3], 1
    %s3908 = scalar_lea.sflag [#allocation3], 1
    %3909 = vsyncpa %s3908, 1
    %3910 = vsyncpa [#allocation5], 1

</llo_original>
